<compile_context>
chip_gen: v5e
topology: v5e:2x2
jax: 0.10.0
libtpu: 0.0.40
codegen_flags: <defaults>
</compile_context>

<pallas_src>
import functools
import numpy as np

import jax
import jax.numpy as jnp
from jax.experimental import pallas as pl
from jax.experimental.pallas import tpu as pltpu

NUM_POINTS = 5
NUM_GRADES = 3
XY_MAX = 80.0

LANE = 128
MAX_TK = 2048          # target reduction-tile width (multiple of 128)


def _round_up(x, m):
    return (x + m - 1) // m * m


def _choose_k_tiling(k):
    """Return (tile_k, num_k_tiles) for a true reduction length k.

    tile_k is a multiple of 128, tile_k * num_k_tiles >= k, zero-pad waste < 128*num_k_tiles.
    Keeps the number of reduction grid steps small (tile ~MAX_TK) instead of 27 tiny steps.
    """
    k128 = _round_up(k, LANE)
    if k128 <= MAX_TK:
        return k128, 1
    n_k = -(-k128 // MAX_TK)                    # ceil
    tk = _round_up(-(-k128 // n_k), LANE)       # ceil then 128-align
    return tk, n_k


def _choose_tile_cout(cout_pad):
    """Split the lane-padded Cout axis into two 128-aligned tiles when possible.

    The cout grid axis is marked "parallel", so on v7x the two TensorCores each stream a
    DISJOINT half of the weights (this model is weight-DMA bound); on v5e/v6e it just adds a
    couple of extra (cheap) grid steps.
    """
    half = cout_pad // 2
    if cout_pad >= 256 and half % LANE == 0:
        return half
    return cout_pad


# --------------------------------------------------------------------------------------
# Pallas kernels
# --------------------------------------------------------------------------------------

def _matmul_affine_kernel(x_ref, w_ref, scale_ref, bias_ref, o_ref, acc_ref, *, relu):
    """K-tiled accumulation matmul with per-channel affine (folded BN / bias) + optional ReLU.

    x_ref:     (N, TK)       bf16 patch block (K tile k)
    w_ref:     (TK, TC)      bf16 weight block (K tile k, Cout tile c)
    scale_ref: (1, TC)       f32 per-output-channel scale (folded BN gamma/sqrt(var+eps))
    bias_ref:  (1, TC)       f32 per-output-channel bias
    o_ref:     (N, TC)       output (bf16 or f32)
    acc_ref:   VMEM scratch  (N, TC) float32
    """
    k = pl.program_id(1)

    @pl.when(k == 0)
    def _():
        acc_ref[...] = jnp.zeros_like(acc_ref)

    acc_ref[...] += jnp.dot(x_ref[...], w_ref[...], preferred_element_type=jnp.float32)

    @pl.when(k == pl.num_programs(1) - 1)
    def _():
        y = acc_ref[...] * scale_ref[...] + bias_ref[...]     # f32 epilogue (v5e-safe)
        if relu:
            y = jnp.maximum(y, 0.0)
        o_ref[...] = y.astype(o_ref.dtype)


def matmul_affine(x, w_pad, scale_pad, bias_pad, *, relu, out_dtype=jnp.bfloat16):
    """x: (N, K) float; w_pad: (K_pad, Cout_pad) bf16 from pack_matmul_weight;
    scale_pad/bias_pad: (1, Cout_pad) f32.  Returns (N, Cout_pad) out_dtype."""
    N, K = x.shape
    K_pad, Cout_pad = w_pad.shape
    tk, n_k = _choose_k_tiling(K)
    assert K_pad == tk * n_k, (K, K_pad, tk, n_k)
    tc = _choose_tile_cout(Cout_pad)
    n_c = Cout_pad // tc

    xp = x.astype(jnp.bfloat16)
    if K_pad != K:
        xp = jnp.pad(xp, ((0, 0), (0, K_pad - K)))

    return pl.pallas_call(
        functools.partial(_matmul_affine_kernel, relu=relu),
        out_shape=jax.ShapeDtypeStruct((N, Cout_pad), out_dtype),
        grid_spec=pltpu.PrefetchScalarGridSpec(
            num_scalar_prefetch=0,
            grid=(n_c, n_k),
            in_specs=[
                pl.BlockSpec((N, tk), lambda c, k: (0, k)),
                pl.BlockSpec((tk, tc), lambda c, k: (k, c)),
                pl.BlockSpec((1, tc), lambda c, k: (0, c)),
                pl.BlockSpec((1, tc), lambda c, k: (0, c)),
            ],
            out_specs=pl.BlockSpec((N, tc), lambda c, k: (0, c)),
            scratch_shapes=[pltpu.VMEM((N, tc), jnp.float32)],
        ),
        compiler_params=pltpu.CompilerParams(
            dimension_semantics=("parallel", "arbitrary"),
            vmem_limit_bytes=32 * 1024 * 1024,
        ),
    )(xp, w_pad, scale_pad, bias_pad)


def _softmax_stats_kernel(logit_ref, wc_ref, heat_ref, stats_ref):
    """Per-point softmax over the flattened (grade, d, y, x) axis + coordinate/grade reductions.

    logit_ref: (P, M)   per-point heatmap logits
    wc_ref:    (M, 6)   columns = [x_coord, y_coord, z_coord, onehot_g0, onehot_g1, onehot_g2]
    heat_ref:  (P, M)   softmaxed heatmap (output)
    stats_ref: (P, 6)   [px, py, pz, grade0, grade1, grade2] (output)
    """
    lg = logit_ref[...]
    m = jnp.max(lg, axis=-1, keepdims=True)
    e = jnp.exp(lg - m)
    heat = e / jnp.sum(e, axis=-1, keepdims=True)
    heat_ref[...] = heat
    stats_ref[...] = jnp.dot(heat, wc_ref[...], preferred_element_type=jnp.float32)


def softmax_and_stats(logits, wc):
    P, M = logits.shape
    S = wc.shape[-1]
    return pl.pallas_call(
        _softmax_stats_kernel,
        out_shape=(jax.ShapeDtypeStruct((P, M), jnp.float32),
                   jax.ShapeDtypeStruct((P, S), jnp.float32)),
        grid_spec=pltpu.PrefetchScalarGridSpec(
            num_scalar_prefetch=0,
            grid=(1,),
            in_specs=[pl.BlockSpec((P, M), lambda i: (0, 0)),
                      pl.BlockSpec((M, S), lambda i: (0, 0))],
            out_specs=[pl.BlockSpec((P, M), lambda i: (0, 0)),
                       pl.BlockSpec((P, S), lambda i: (0, 0))],
        ),
    )(logits.astype(jnp.float32), wc.astype(jnp.float32))


def _row_softmax_kernel(x_ref, o_ref):
    x = x_ref[...]
    m = jnp.max(x, axis=-1, keepdims=True)
    e = jnp.exp(x - m)
    o_ref[...] = e / jnp.sum(e, axis=-1, keepdims=True)


def row_softmax(x2d):
    # TODO(synk): the W-axis softmax reduces over 16 lanes (masked stores); a sublane-major
    # layout or fusion into _softmax_stats_kernel would be lane-dense but needs a relayout.
    R, C = x2d.shape
    return pl.pallas_call(
        _row_softmax_kernel,
        out_shape=jax.ShapeDtypeStruct((R, C), jnp.float32),
        grid_spec=pltpu.PrefetchScalarGridSpec(
            num_scalar_prefetch=0,
            grid=(1,),
            in_specs=[pl.BlockSpec((R, C), lambda i: (0, 0))],
            out_specs=pl.BlockSpec((R, C), lambda i: (0, 0)),
        ),
    )(x2d.astype(jnp.float32))


# --------------------------------------------------------------------------------------
# Weight packing (done ONCE, outside the forward): bf16 cast + K/Cout zero-padding
# --------------------------------------------------------------------------------------

def pack_matmul_weight(w, scale, bias):
    """w: (K, Cout) or (taps, Cin, Cout) f32.  Returns (w_pad bf16 (K_pad, Cout_pad),
    scale_pad f32 (1, Cout_pad), bias_pad f32 (1, Cout_pad), true_cout)."""
    if w.ndim == 3:
        w = w.reshape(-1, w.shape[-1])
    K, Cout = w.shape
    tk, n_k = _choose_k_tiling(K)
    K_pad = tk * n_k
    Cout_pad = _round_up(Cout, LANE)
    w_pad = jnp.zeros((K_pad, Cout_pad), jnp.bfloat16).at[:K, :Cout].set(w.astype(jnp.bfloat16))
    s_pad = jnp.zeros((1, Cout_pad), jnp.float32).at[0, :Cout].set(scale.astype(jnp.float32))
    b_pad = jnp.zeros((1, Cout_pad), jnp.float32).at[0, :Cout].set(bias.astype(jnp.float32))
    return w_pad, s_pad, b_pad, Cout


# --------------------------------------------------------------------------------------
# Conv wrappers (im2col is glue; the matmul/affine/ReLU compute is in the Pallas kernel)
# --------------------------------------------------------------------------------------

def conv3d_3x3x3(x, packed, relu=True, out_dtype=jnp.bfloat16):
    """x: (D, H, W, Cin). 3x3x3 conv, padding=1, bias folded into affine, BN(eval)+opt ReLU."""
    # TODO(synk): patches are still materialized (N, 27*Cin) in HBM (bf16); streaming the 27
    # taps from a VMEM-resident padded activation would remove this last im2col round trip.
    D, H, W, Cin = x.shape
    xp = jnp.pad(x.astype(jnp.bfloat16), ((1, 1), (1, 1), (1, 1), (0, 0)))
    cols = [xp[kd:kd + D, kh:kh + H, kw:kw + W, :]
            for kd in range(3) for kh in range(3) for kw in range(3)]
    patches = jnp.concatenate(cols, axis=-1).reshape(D * H * W, 27 * Cin)
    w_pad, s_pad, b_pad, cout = packed
    y = matmul_affine(patches, w_pad, s_pad, b_pad, relu=relu, out_dtype=out_dtype)
    return y.reshape(D, H, W, -1)[..., :cout]


def conv1x1_3d(x, packed, relu, out_dtype=jnp.bfloat16):
    """x: (D, H, W, Cin); pointwise conv + affine (+opt ReLU)."""
    D, H, W, Cin = x.shape
    w_pad, s_pad, b_pad, cout = packed
    y = matmul_affine(x.reshape(D * H * W, Cin), w_pad, s_pad, b_pad,
                      relu=relu, out_dtype=out_dtype)
    return y.reshape(D, H, W, -1)[..., :cout]


# --------------------------------------------------------------------------------------
# Encoder / decoder / head
# --------------------------------------------------------------------------------------

def _patchify(x, p):
    B, H, W, C = x.shape
    x = x.reshape(B, H // p, p, W // p, p, C)
    x = jnp.transpose(x, (0, 1, 3, 2, 4, 5))
    return x.reshape(B, H // p, W // p, p * p * C)


def encoder_forward(x, enc_packed):
    # TODO(synk): the timm pvt_v2_b4 transformer backbone has no clean Pallas equivalent here;
    # it is replaced by a deterministic strided patch-embed (conv-as-matmul + ReLU) stand-in that
    # produces the same 4-stage feature pyramid, channels [64,128,320,512] at strides [4,8,16,32].
    feats = []
    for (p, packed) in enc_packed:
        xp = _patchify(x, p)
        B, h, ww, K = xp.shape
        w_pad, s_pad, b_pad, cout = packed
        y = matmul_affine(xp.reshape(B * h * ww, K), w_pad, s_pad, b_pad,
                          relu=True, out_dtype=jnp.bfloat16)
        x = y.reshape(B, h, ww, -1)[..., :cout]
        feats.append(x)
    return feats


def decoder_forward(feature, skips, dec_packed):
    """UNetDecoder3D with DecoderBlock3D: upsample (1,2,2) nearest, concat skip, 2x (conv3d+BN+ReLU)."""
    d = feature
    for bp, s in zip(dec_packed, skips):
        # TODO(synk): upsample + channel concat still materialized in XLA glue (small in bf16);
        # folding them into the conv's reduction (two accumulating passes) was not done.
        d = jnp.repeat(jnp.repeat(d, 2, axis=1), 2, axis=2)   # F.interpolate scale_factor=(1,2,2)
        d = jnp.concatenate([d.astype(jnp.bfloat16), s.astype(jnp.bfloat16)], axis=-1)
        d = conv3d_3x3x3(d, bp["conv1"], relu=True)
        d = conv3d_3x3x3(d, bp["conv2"], relu=True)
    return d


def heatmap_head(decoded, hp):
    # Conv3d(96,96,1)+BN+ReLU  +  Dropout3d(0.3) (eval -> identity)  +  Conv3d(96,15,1)
    h = conv1x1_3d(decoded, hp["conv1"], relu=True, out_dtype=jnp.bfloat16)
    h = conv1x1_3d(h, hp["conv2"], relu=False, out_dtype=jnp.float32)
    return h  # (D, H, W, num_points*num_grades) f32 logits


@functools.lru_cache(maxsize=None)
def make_coord_weights(D, H, W):
    g, d, y, x = np.meshgrid(np.arange(NUM_GRADES), np.arange(D),
                             np.arange(H), np.arange(W), indexing="ij")
    wx = x.reshape(-1).astype(np.float32)
    wy = y.reshape(-1).astype(np.float32)
    wz = d.reshape(-1).astype(np.float32)
    onehot = (g.reshape(-1)[:, None] == np.arange(NUM_GRADES)[None, :]).astype(np.float32)
    wc = np.concatenate([wx[:, None], wy[:, None], wz[:, None], onehot], axis=1)
    return jnp.asarray(wc)  # (M, 6)


# --------------------------------------------------------------------------------------
# Losses (tiny scalar reductions -> plain JAX glue)
# --------------------------------------------------------------------------------------

def F_grade_loss(grade, truth):
    weight = jnp.array([1.0, 2.0, 4.0], jnp.float32)
    t = truth.reshape(-1)
    g = jnp.clip(grade.reshape(-1, 3), 1e-5, 1.0 - 1e-5)
    lg = jnp.log(g)
    valid = (t != -1)
    ts = jnp.where(valid, t, 0).astype(jnp.int32)
    picked = jnp.take_along_axis(lg, ts[:, None], axis=1)[:, 0]
    wt = weight[ts] * valid.astype(jnp.float32)
    return -jnp.sum(wt * picked) / jnp.maximum(jnp.sum(wt), 1e-12)


def F_heatmap_loss(heatmap, truth, D_list):
    eps = 1e-6
    start = 0
    total = 0.0
    for Di in D_list:
        q = heatmap[start:start + Di]
        p = truth[start:start + Di]
        start += Di
        p = jnp.clip(jnp.transpose(p, (1, 0, 2, 3, 4)).reshape(NUM_POINTS, -1), eps, 1 - eps)
        q = jnp.clip(jnp.transpose(q, (1, 0, 2, 3, 4)).reshape(NUM_POINTS, -1), eps, 1 - eps)
        m = jnp.log(0.5 * (p + q))
        kl_pm = jnp.sum(p * (jnp.log(p) - m)) / p.shape[0]   # batchmean over first dim
        kl_qm = jnp.sum(q * (jnp.log(q) - m)) / q.shape[0]
        total = total + 0.5 * (kl_pm + kl_qm)
    return total / len(D_list)


def _masked_mse(pred, truth, mask):
    m = mask
    while m.ndim < pred.ndim:
        m = m[..., None]
    m = jnp.broadcast_to(m, pred.shape).astype(jnp.float32)
    return jnp.sum(((pred - truth) ** 2) * m) / jnp.maximum(jnp.sum(m), 1.0)


def F_z_loss(z, z_truth, mask, z_max):
    z_max = z_max.astype(jnp.float32)[:, None]
    return _masked_mse(z / z_max, z_truth.astype(jnp.float32) / z_max, mask)


def F_xy_loss(xy, xy_truth, mask, xy_max):
    return _masked_mse(xy / xy_max, xy_truth.astype(jnp.float32) / xy_max, mask)


# --------------------------------------------------------------------------------------
# Parameters (deterministic, synthetic) + one-time packing
# --------------------------------------------------------------------------------------

def init_params(key):
    keys = iter(jax.random.split(key, 80))

    def nk():
        return next(keys)

    def w_init(shape, fan_in):
        return (jax.random.normal(nk(), shape, jnp.float32) / np.sqrt(float(fan_in)))

    def bn_fold(c):
        gamma = 1.0 + 0.1 * jax.random.normal(nk(), (c,), jnp.float32)
        beta = 0.1 * jax.random.normal(nk(), (c,), jnp.float32)
        mean = 0.1 * jax.random.normal(nk(), (c,), jnp.float32)
        var = 1.0 + 0.1 * jnp.abs(jax.random.normal(nk(), (c,), jnp.float32))
        s = gamma / jnp.sqrt(var + 1e-5)
        t = beta - mean * s
        return s, t

    # encoder stand-in: strides [4,2,2,2], channels [64,128,320,512]
    enc_cfg = [(4, 3, 64), (2, 64, 128), (2, 128, 320), (2, 320, 512)]
    encoder = []
    for p, cin, cout in enc_cfg:
        w = w_init((1, p * p * cin, cout), p * p * cin)
        b = 0.01 * jax.random.normal(nk(), (cout,), jnp.float32)
        encoder.append((p, w, b))

    # decoder: in=[512,384,192], skip=[320,128,64], out=[384,192,96]
    dec_cfg = [(512 + 320, 384), (384 + 128, 192), (192 + 64, 96)]
    decoder = []
    for cin, co in dec_cfg:
        w1 = w_init((27, cin, co), 27 * cin)
        s1, b1 = bn_fold(co)
        w2 = w_init((27, co, co), 27 * co)
        s2, b2 = bn_fold(co)
        decoder.append(dict(w1=w1, s1=s1, b1=b1, w2=w2, s2=s2, b2=b2))

    # heatmap head
    w1 = w_init((1, 96, 96), 96)
    cb1 = 0.01 * jax.random.normal(nk(), (96,), jnp.float32)
    s1, t1 = bn_fold(96)
    w2 = w_init((1, 96, NUM_POINTS * NUM_GRADES), 96)
    b2 = 0.01 * jax.random.normal(nk(), (NUM_POINTS * NUM_GRADES,), jnp.float32)
    heatmap = dict(w1=w1, s1=s1, b1=cb1 * s1 + t1, w2=w2, b2=b2)

    return dict(encoder=encoder, decoder=decoder, heatmap=heatmap)


def prepare_params(params):
    """Pre-cast / fold / pad all weights once (bf16, K padded to the tile grid, Cout padded
    to a multiple of 128) so no per-call weight copies or dtype conversions happen."""
    enc = []
    for (p, w, b) in params["encoder"]:
        cout = w.shape[-1]
        enc.append((p, pack_matmul_weight(w, jnp.ones((cout,), jnp.float32), b)))

    dec = []
    for bp in params["decoder"]:
        dec.append(dict(conv1=pack_matmul_weight(bp["w1"], bp["s1"], bp["b1"]),
                        conv2=pack_matmul_weight(bp["w2"], bp["s2"], bp["b2"])))

    hp = params["heatmap"]
    heatmap = dict(
        conv1=pack_matmul_weight(hp["w1"], hp["s1"], hp["b1"]),
        conv2=pack_matmul_weight(hp["w2"],
                                 jnp.ones((hp["w2"].shape[-1],), jnp.float32), hp["b2"]))
    return dict(encoder=enc, decoder=dec, heatmap=heatmap)


# --------------------------------------------------------------------------------------
# FirstStageModel.forward  (train_on=['zxy','grade'], output_type=['infer','loss'], eval mode)
# --------------------------------------------------------------------------------------

def first_stage_forward(packed_params, batch):
    image = batch["image"]            # (B, H, W) uint8, B = sum(D)
    D_list = batch["D"]               # python list of per-image slice counts
    num_image = len(D_list)
    B, H, W = image.shape

    # normalize: x = (image/255 - 0.5) / 0.5, expand to 3 channels
    x = image.astype(jnp.float32) / 255.0
    x = (x - 0.5) / 0.5
    x = jnp.broadcast_to(x[..., None], (B, H, W, 3))

    feats = encoder_forward(x, packed_params["encoder"])     # 4 scales of (B, h, w, C) bf16

    starts = np.cumsum([0] + list(D_list))
    Hh, Ww = H // 4, W // 4

    heat_list, xy_list, z_list, grade_list = [], [], [], []
    for i in range(num_image):
        # TODO(synk): per-image loop kept (D differs per image); batching would require D-padding
        # plus re-zeroing pad slices between convs to preserve zero-padding semantics.
        Di = int(D_list[i])
        e = [f[starts[i]:starts[i] + Di] for f in feats]   # (Di, h, w, C) == torch (1, C, Di, h, w)
        decoded = decoder_forward(e[-1], e[:-1][::-1], packed_params["decoder"])  # (Di, Hh, Ww, 96)
        logits = heatmap_head(decoded, packed_params["heatmap"])                  # (Di, Hh, Ww, 15)

        # torch order: (15, Di, Hh, Ww) -> (P, G, Di, Hh, Ww) -> flatten(1)
        logits = jnp.transpose(logits, (3, 0, 1, 2)).reshape(
            NUM_POINTS, NUM_GRADES * Di * Hh * Ww)
        wc = make_coord_weights(Di, Hh, Ww)
        heat, stats = softmax_and_stats(logits, wc)        # heat (P, M), stats (P, 6)

        heat5 = heat.reshape(NUM_POINTS, NUM_GRADES, Di, Hh, Ww)
        heat_list.append(heat5)
        xy_list.append(jnp.stack([stats[:, 0], stats[:, 1]], axis=-1))   # (P, 2) = [px, py]
        z_list.append(stats[:, 2])
        grade_list.append(stats[:, 3:6])

    xy = jnp.stack(xy_list)        # (num_image, P, 2)
    z = jnp.stack(z_list)          # (num_image, P)
    grade = jnp.stack(grade_list)  # (num_image, P, 3)
    heatmap = jnp.concatenate(
        [jnp.transpose(h, (2, 0, 1, 3, 4)) for h in heat_list], axis=0)  # (sumD, P, G, Hh, Ww)

    output = {}

    # ---- loss ----
    D_arr = jnp.asarray(D_list, jnp.float32)
    output["heatmap_loss"] = F_heatmap_loss(heatmap, batch["heatmap"], D_list)
    mask = batch["z"] != -1
    output["z_loss"] = F_z_loss(z, batch["z"], mask, D_arr)
    output["xy_loss"] = F_xy_loss(xy, batch["xy"], mask, XY_MAX)
    output["grade_loss"] = F_grade_loss(grade, batch["grade"])   # dynamic_matching=False

    # ---- infer ----  (the torch reference re-softmaxes the already-normalized heatmap/grade)
    output["heatmap"] = row_softmax(heatmap.reshape(-1, Ww)).reshape(heatmap.shape)
    output["zxy_mask"] = []       # empty in the 'zxy'+'grade' branch, as in the reference
    output["xy"] = xy
    output["z"] = z
    output["grade"] = row_softmax(grade.reshape(-1, NUM_GRADES)).reshape(grade.shape)
    output["image"] = x           # (B, H, W, 3) channels-last
    return output


# --------------------------------------------------------------------------------------
# Main
# --------------------------------------------------------------------------------------

if __name__ == "__main__":
    key = jax.random.PRNGKey(0)
    k_img, k_hm, k_z, k_xy, k_g = jax.random.split(key, 5)

    D_list = [2, 3]                 # slices per image
    num_image = len(D_list)
    B = sum(D_list)
    H = W = 64
    Hh, Ww = H // 4, W // 4

    image = jax.random.randint(k_img, (B, H, W), 0, 256, dtype=jnp.int32).astype(jnp.uint8)
    heatmap_truth = jax.random.uniform(k_hm, (B, NUM_POINTS, NUM_GRADES, Hh, Ww), jnp.float32)
    z_truth = (jax.random.uniform(k_z, (num_image, NUM_POINTS), jnp.float32)
               * jnp.asarray(D_list, jnp.float32)[:, None])
    z_truth = z_truth.at[0, 0].set(-1.0)     # one ignored entry
    xy_truth = jax.random.uniform(k_xy, (num_image, NUM_POINTS, 2), jnp.float32) * (Hh - 1)
    grade_truth = jax.random.randint(k_g, (num_image, NUM_POINTS), 0, NUM_GRADES)

    params = init_params(jax.random.PRNGKey(1))
    packed_params = prepare_params(params)     # bf16 / padded weights built once, outside forward

    batch = dict(image=image, D=D_list, heatmap=heatmap_truth,
                 z=z_truth, xy=xy_truth, grade=grade_truth)

    out = first_stage_forward(packed_params, batch)
    jax.block_until_ready(out)

    # light sanity checks
    assert out["heatmap"].shape == (B, NUM_POINTS, NUM_GRADES, Hh, Ww)
    assert out["xy"].shape == (num_image, NUM_POINTS, 2)
    assert out["z"].shape == (num_image, NUM_POINTS)
    assert out["grade"].shape == (num_image, NUM_POINTS, NUM_GRADES)
    for k in ("heatmap_loss", "z_loss", "xy_loss", "grade_loss"):
        assert np.isfinite(float(out[k]))

    print("KERNEL_OK")
</pallas_src>

<mosaic_0001>
module attributes {stable_mosaic.version = 11 : i64} {
  func.func @_matmul_affine_kernel(%arg0: i32, %arg1: i32, %arg2: memref<1280x128xbf16, #tpu.memory_space<vmem>>, %arg3: memref<128x128xbf16, #tpu.memory_space<vmem>>, %arg4: memref<1x128xf32, #tpu.memory_space<vmem>>, %arg5: memref<1x128xf32, #tpu.memory_space<vmem>>, %arg6: memref<1280x128xbf16, #tpu.memory_space<vmem>>, %arg7: memref<1280x128xf32, #tpu.memory_space<vmem>>) attributes {dimension_semantics = [#tpu.dimension_semantics<parallel>, #tpu.dimension_semantics<arbitrary>], iteration_bounds = array<i64: 1, 1>, scalar_prefetch = 0 : i64, scratch_operands = 1 : i64, tpu.core_type = #tpu.core_type<tc>, window_params = [{transform_indices = @transform_0, window_bounds = array<i64: 1280, 128>}, {transform_indices = @transform_1, window_bounds = array<i64: 128, 128>}, {transform_indices = @transform_2, window_bounds = array<i64: 1, 128>}, {transform_indices = @transform_3, window_bounds = array<i64: 1, 128>}, {transform_indices = @transform_4, window_bounds = array<i64: 1280, 128>}]} {
    %c0_i32 = arith.constant 0 : i32
    %0 = arith.cmpi eq, %arg1, %c0_i32 : i32
    %1 = arith.extui %0 : i1 to i32
    %c0_i32_0 = arith.constant 0 : i32
    %2 = arith.cmpi ne, %1, %c0_i32_0 : i32
    scf.if %2 {
      %cst_10 = arith.constant 0.000000e+00 : f32
      %12 = vector.broadcast %cst_10 : f32 to vector<1280x128xf32>
      %c0_11 = arith.constant 0 : index
      %c0_12 = arith.constant 0 : index
      %13 = vector.load %arg7[%c0_11, %c0_12] : memref<1280x128xf32, #tpu.memory_space<vmem>>, vector<1280x128xf32>
      tpu.vector_store %arg7[%c0_11, %c0_12], %12 {strides = array<i32>} : memref<1280x128xf32, #tpu.memory_space<vmem>>, vector<1280x128xf32>,
    } else {
    }
    %c0 = arith.constant 0 : index
    %c0_1 = arith.constant 0 : index
    %3 = vector.load %arg7[%c0, %c0_1] : memref<1280x128xf32, #tpu.memory_space<vmem>>, vector<1280x128xf32>
    %c0_2 = arith.constant 0 : index
    %c0_3 = arith.constant 0 : index
    %4 = vector.load %arg2[%c0_2, %c0_3] : memref<1280x128xbf16, #tpu.memory_space<vmem>>, vector<1280x128xbf16>
    %c0_4 = arith.constant 0 : index
    %c0_5 = arith.constant 0 : index
    %5 = vector.load %arg3[%c0_4, %c0_5] : memref<128x128xbf16, #tpu.memory_space<vmem>>, vector<128x128xbf16>
    %cst = arith.constant dense<0.000000e+00> : vector<1280x128xf32>
    %6 = tpu.matmul %4, %5, %cst {dimension_numbers = #tpu.dot_dimension_numbers<[1], [0], [0], [1], [0, 0, 1, 1], [], []>} : vector<1280x128xbf16>, vector<128x128xbf16>, vector<1280x128xf32> -> vector<1280x128xf32>
    %7 = arith.addf %3, %6 : vector<1280x128xf32>
    %c0_6 = arith.constant 0 : index
    %c0_7 = arith.constant 0 : index
    %8 = vector.load %arg7[%c0_6, %c0_7] : memref<1280x128xf32, #tpu.memory_space<vmem>>, vector<1280x128xf32>
    tpu.vector_store %arg7[%c0_6, %c0_7], %7 {strides = array<i32>} : memref<1280x128xf32, #tpu.memory_space<vmem>>, vector<1280x128xf32>,
    %c0_i32_8 = arith.constant 0 : i32
    %9 = arith.cmpi eq, %arg1, %c0_i32_8 : i32
    %10 = arith.extui %9 : i1 to i32
    %c0_i32_9 = arith.constant 0 : i32
    %11 = arith.cmpi ne, %10, %c0_i32_9 : i32
    scf.if %11 {
      %c0_10 = arith.constant 0 : index
      %c0_11 = arith.constant 0 : index
      %12 = vector.load %arg7[%c0_10, %c0_11] : memref<1280x128xf32, #tpu.memory_space<vmem>>, vector<1280x128xf32>
      %c0_12 = arith.constant 0 : index
      %c0_13 = arith.constant 0 : index
      %13 = vector.load %arg4[%c0_12, %c0_13] : memref<1x128xf32, #tpu.memory_space<vmem>>, vector<1x128xf32>
      %14 = vector.broadcast %13 : vector<1x128xf32> to vector<1280x128xf32>
      %15 = arith.mulf %12, %14 : vector<1280x128xf32>
      %c0_14 = arith.constant 0 : index
      %c0_15 = arith.constant 0 : index
      %16 = vector.load %arg5[%c0_14, %c0_15] : memref<1x128xf32, #tpu.memory_space<vmem>>, vector<1x128xf32>
      %17 = vector.broadcast %16 : vector<1x128xf32> to vector<1280x128xf32>
      %18 = arith.addf %15, %17 : vector<1280x128xf32>
      %cst_16 = arith.constant 0.000000e+00 : f32
      %19 = vector.broadcast %cst_16 : f32 to vector<1280x128xf32>
      %20 = arith.maximumf %18, %19 : vector<1280x128xf32>
      %21 = arith.truncf %20 : vector<1280x128xf32> to vector<1280x128xbf16>
      %c0_17 = arith.constant 0 : index
      %c0_18 = arith.constant 0 : index
      %22 = vector.load %arg6[%c0_17, %c0_18] : memref<1280x128xbf16, #tpu.memory_space<vmem>>, vector<1280x128xbf16>
      tpu.vector_store %arg6[%c0_17, %c0_18], %21 {strides = array<i32>} : memref<1280x128xbf16, #tpu.memory_space<vmem>>, vector<1280x128xbf16>,
    } else {
    }
    return
  }
  func.func @transform_0(%arg0: i32, %arg1: i32) -> (i32, i32) {
    %c0_i32 = arith.constant 0 : i32
    %c0_i32_0 = arith.constant 0 : i32
    return %c0_i32, %arg1 : i32, i32
  }
  func.func @transform_1(%arg0: i32, %arg1: i32) -> (i32, i32) {
    %c0_i32 = arith.constant 0 : i32
    return %arg1, %arg0 : i32, i32
  }
  func.func @transform_2(%arg0: i32, %arg1: i32) -> (i32, i32) {
    %c0_i32 = arith.constant 0 : i32
    %c0_i32_0 = arith.constant 0 : i32
    return %c0_i32, %arg0 : i32, i32
  }
  func.func @transform_3(%arg0: i32, %arg1: i32) -> (i32, i32) {
    %c0_i32 = arith.constant 0 : i32
    %c0_i32_0 = arith.constant 0 : i32
    return %c0_i32, %arg0 : i32, i32
  }
  func.func @transform_4(%arg0: i32, %arg1: i32) -> (i32, i32) {
    %c0_i32 = arith.constant 0 : i32
    %c0_i32_0 = arith.constant 0 : i32
    return %c0_i32, %arg0 : i32, i32
  }
}

</mosaic_0001>

<llo_original>
// kernel: tpu_custom_call.1
$region0: #{tpu_custom_call.1}
  #allocation0 [shape = 'u32[]', space=smem, size = 0x4, offset = 0x4, fixed_abs, tag = 'smem constant byte address 0x4 - core index']
  #allocation1 [shape = 'u32[72,128]{1,0:T(1,128)}', space=vmem, size = 0x9000, scoped, tag = 'internal scratch']
  #allocation2 [shape = 'f32[1280,128]{1,0:T(8,128)}', space=vmem, size = 0xa0000, scoped, tag = 'scratch operand']
  %s0 = inlined_call_operand.hbm [shape: bf16[1280,128], index: 0, kind: input, shape index: {}]
  %s1 = inlined_call_operand.hbm [shape: bf16[128,128], index: 1, kind: input, shape index: {}]
  %s2 = inlined_call_operand.vmem [shape: f32[1,128], index: 2, kind: input, shape index: {}]
  %s3 = inlined_call_operand.vmem [shape: f32[1,128], index: 3, kind: input, shape index: {}]
  %s4 = inlined_call_operand.hbm [shape: bf16[1280,128], index: 4, kind: output, shape index: {}]
  %s5 = sld [smem:[#allocation0]]
  $region42: #{tpu_custom_call.1} parent=0
    _
  %s7 = ssub.s32 1, %s5
  %s8 = scalar_select 0, %s7, %s5
  $region1: #{tpu_custom_call.1} parent=0
    #allocation3 [shape = 'u8[327680]{0}', space=vmem, size = 0x50000, scoped, tag = 'input window, operand 0, single buffered']
    #allocation4 [shape = 's32[1]{0}', space=sflag, size = 0x4, scoped, tag = 'scoped memory for tpu_custom_call.1']
    #allocation5 [shape = 's32[1]{0}', space=sflag, size = 0x4, scoped, tag = 'scoped memory for tpu_custom_call.1']
    #allocation6 [shape = 'u8[32768]{0}', space=vmem, size = 0x8000, scoped, tag = 'input window, operand 1, single buffered']
    #allocation7 [shape = 's32[1]{0}', space=sflag, size = 0x4, scoped, tag = 'scoped memory for tpu_custom_call.1']
    #allocation8 [shape = 'u8[327680]{0}', space=vmem, size = 0x50000, scoped, tag = 'output window, operand 0, single buffered']
    %9 = vsyncpa [#allocation4], 0
    %10 = vsyncpa [#allocation7], 0
    %11 = vsyncpa [#allocation5], 0
    // Predicated region
    $region2: #{tpu_custom_call.1} parent=1 // pred_check
      _
    $region3: #{tpu_custom_call.1} parent=1 // pred_check_branch
      %13 = sbr.rel (0) target = $region5
    $region4: #{tpu_custom_call.1} parent=1 // pred_region
      %15 = vsyncadd [#allocation4], 0
      %s16 = sshll.u32 %s0, 4
      %s17 = int_to_ptr.hbm [resolvable:$true] %s16
      %s18 = sshll.u32 [#allocation3], 4
      %s19 = int_to_ptr.vmem [resolvable:$true] %s18
      %24 = dma.hbm_to_vmem [thread:$0]  %s17, 10240, %s19, [#allocation4], 64, 64, 4
    $region5: #{tpu_custom_call.1} parent=1 // pred_fallthru
      _
    // Predicated region
    $region6: #{tpu_custom_call.1} parent=1 // pred_check
      _
    $region7: #{tpu_custom_call.1} parent=1 // pred_check_branch
      %26 = sbr.rel (0) target = $region9
    $region8: #{tpu_custom_call.1} parent=1 // pred_region
      %28 = vsyncadd [#allocation7], 0
      %s29 = sshll.u32 %s1, 4
      %s30 = int_to_ptr.hbm [resolvable:$true] %s29
      %s31 = sshll.u32 [#allocation6], 4
      %s32 = int_to_ptr.vmem [resolvable:$true] %s31
      %37 = dma.hbm_to_vmem [thread:$0]  %s30, 1024, %s32, [#allocation7], 64, 64, 4
    $region9: #{tpu_custom_call.1} parent=1 // pred_fallthru
      _
    // Predicated region
    $region10: #{tpu_custom_call.1} parent=1 // pred_check
      _
    $region11: #{tpu_custom_call.1} parent=1 // pred_check_branch
      %39 = sbr.rel (0) target = $region13
    $region12: #{tpu_custom_call.1} parent=1 // pred_region
      _
    $region13: #{tpu_custom_call.1} parent=1 // pred_fallthru
      _
    // Predicated region
    $region14: #{tpu_custom_call.1} parent=1 // pred_check
      _
    $region15: #{tpu_custom_call.1} parent=1 // pred_check_branch
      %41 = sbr.rel (0) target = $region17
    $region16: #{tpu_custom_call.1} parent=1 // pred_region
      _
    $region17: #{tpu_custom_call.1} parent=1 // pred_fallthru
      _
    // Predicated region
    $region18: #{tpu_custom_call.1} parent=1 // pred_check
      _
    $region19: #{tpu_custom_call.1} parent=1 // pred_check_branch
      %43 = sbr.rel (0) target = $region21
    $region20: #{tpu_custom_call.1} parent=1 // pred_region
      %45 = dma.done [#allocation4], 10240
    $region21: #{tpu_custom_call.1} parent=1 // pred_fallthru
      _
    // Predicated region
    $region22: #{tpu_custom_call.1} parent=1 // pred_check
      _
    $region23: #{tpu_custom_call.1} parent=1 // pred_check_branch
      %47 = sbr.rel (0) target = $region25
    $region24: #{tpu_custom_call.1} parent=1 // pred_region
      %49 = dma.done [#allocation7], 1024
    $region25: #{tpu_custom_call.1} parent=1 // pred_fallthru
      _
    %p50 = scmp.eq.s32.totalorder 0, 0
    // Predicated region
    $region26: #{tpu_custom_call.1} parent=1 // pred_check
      %p51 = pneg %p50
    $region27: #{tpu_custom_call.1} parent=1 // pred_check_branch
      %53 = sbr.rel (%p51) target = $region29
    $region28: #{tpu_custom_call.1} parent=1 // pred_region
      %54 = vst [vmem:[#allocation2] sm:$0xff] 0.0
      %55 = vst [vmem:[#allocation2 + $0x8] sm:$0xff] 0.0
      %56 = vst [vmem:[#allocation2 + $0x10] sm:$0xff] 0.0
      %57 = vst [vmem:[#allocation2 + $0x18] sm:$0xff] 0.0
      %58 = vst [vmem:[#allocation2 + $0x20] sm:$0xff] 0.0
      %59 = vst [vmem:[#allocation2 + $0x28] sm:$0xff] 0.0
      %60 = vst [vmem:[#allocation2 + $0x30] sm:$0xff] 0.0
      %61 = vst [vmem:[#allocation2 + $0x38] sm:$0xff] 0.0
      %62 = vst [vmem:[#allocation2 + $0x40] sm:$0xff] 0.0
      %63 = vst [vmem:[#allocation2 + $0x48] sm:$0xff] 0.0
      %64 = vst [vmem:[#allocation2 + $0x50] sm:$0xff] 0.0
      %65 = vst [vmem:[#allocation2 + $0x58] sm:$0xff] 0.0
      %66 = vst [vmem:[#allocation2 + $0x60] sm:$0xff] 0.0
      %67 = vst [vmem:[#allocation2 + $0x68] sm:$0xff] 0.0
      %68 = vst [vmem:[#allocation2 + $0x70] sm:$0xff] 0.0
      %69 = vst [vmem:[#allocation2 + $0x78] sm:$0xff] 0.0
      %70 = vst [vmem:[#allocation2 + $0x80] sm:$0xff] 0.0
      %71 = vst [vmem:[#allocation2 + $0x88] sm:$0xff] 0.0
      %72 = vst [vmem:[#allocation2 + $0x90] sm:$0xff] 0.0
      %73 = vst [vmem:[#allocation2 + $0x98] sm:$0xff] 0.0
      %74 = vst [vmem:[#allocation2 + $0xa0] sm:$0xff] 0.0
      %75 = vst [vmem:[#allocation2 + $0xa8] sm:$0xff] 0.0
      %76 = vst [vmem:[#allocation2 + $0xb0] sm:$0xff] 0.0
      %77 = vst [vmem:[#allocation2 + $0xb8] sm:$0xff] 0.0
      %78 = vst [vmem:[#allocation2 + $0xc0] sm:$0xff] 0.0
      %79 = vst [vmem:[#allocation2 + $0xc8] sm:$0xff] 0.0
      %80 = vst [vmem:[#allocation2 + $0xd0] sm:$0xff] 0.0
      %81 = vst [vmem:[#allocation2 + $0xd8] sm:$0xff] 0.0
      %82 = vst [vmem:[#allocation2 + $0xe0] sm:$0xff] 0.0
      %83 = vst [vmem:[#allocation2 + $0xe8] sm:$0xff] 0.0
      %84 = vst [vmem:[#allocation2 + $0xf0] sm:$0xff] 0.0
      %85 = vst [vmem:[#allocation2 + $0xf8] sm:$0xff] 0.0
      %86 = vst [vmem:[#allocation2 + $0x100] sm:$0xff] 0.0
      %87 = vst [vmem:[#allocation2 + $0x108] sm:$0xff] 0.0
      %88 = vst [vmem:[#allocation2 + $0x110] sm:$0xff] 0.0
      %89 = vst [vmem:[#allocation2 + $0x118] sm:$0xff] 0.0
      %90 = vst [vmem:[#allocation2 + $0x120] sm:$0xff] 0.0
      %91 = vst [vmem:[#allocation2 + $0x128] sm:$0xff] 0.0
      %92 = vst [vmem:[#allocation2 + $0x130] sm:$0xff] 0.0
      %93 = vst [vmem:[#allocation2 + $0x138] sm:$0xff] 0.0
      %94 = vst [vmem:[#allocation2 + $0x140] sm:$0xff] 0.0
      %95 = vst [vmem:[#allocation2 + $0x148] sm:$0xff] 0.0
      %96 = vst [vmem:[#allocation2 + $0x150] sm:$0xff] 0.0
      %97 = vst [vmem:[#allocation2 + $0x158] sm:$0xff] 0.0
      %98 = vst [vmem:[#allocation2 + $0x160] sm:$0xff] 0.0
      %99 = vst [vmem:[#allocation2 + $0x168] sm:$0xff] 0.0
      %100 = vst [vmem:[#allocation2 + $0x170] sm:$0xff] 0.0
      %101 = vst [vmem:[#allocation2 + $0x178] sm:$0xff] 0.0
      %102 = vst [vmem:[#allocation2 + $0x180] sm:$0xff] 0.0
      %103 = vst [vmem:[#allocation2 + $0x188] sm:$0xff] 0.0
      %104 = vst [vmem:[#allocation2 + $0x190] sm:$0xff] 0.0
      %105 = vst [vmem:[#allocation2 + $0x198] sm:$0xff] 0.0
      %106 = vst [vmem:[#allocation2 + $0x1a0] sm:$0xff] 0.0
      %107 = vst [vmem:[#allocation2 + $0x1a8] sm:$0xff] 0.0
      %108 = vst [vmem:[#allocation2 + $0x1b0] sm:$0xff] 0.0
      %109 = vst [vmem:[#allocation2 + $0x1b8] sm:$0xff] 0.0
      %110 = vst [vmem:[#allocation2 + $0x1c0] sm:$0xff] 0.0
      %111 = vst [vmem:[#allocation2 + $0x1c8] sm:$0xff] 0.0
      %112 = vst [vmem:[#allocation2 + $0x1d0] sm:$0xff] 0.0
      %113 = vst [vmem:[#allocation2 + $0x1d8] sm:$0xff] 0.0
      %114 = vst [vmem:[#allocation2 + $0x1e0] sm:$0xff] 0.0
      %115 = vst [vmem:[#allocation2 + $0x1e8] sm:$0xff] 0.0
      %116 = vst [vmem:[#allocation2 + $0x1f0] sm:$0xff] 0.0
      %117 = vst [vmem:[#allocation2 + $0x1f8] sm:$0xff] 0.0
      %118 = vst [vmem:[#allocation2 + $0x200] sm:$0xff] 0.0
      %119 = vst [vmem:[#allocation2 + $0x208] sm:$0xff] 0.0
      %120 = vst [vmem:[#allocation2 + $0x210] sm:$0xff] 0.0
      %121 = vst [vmem:[#allocation2 + $0x218] sm:$0xff] 0.0
      %122 = vst [vmem:[#allocation2 + $0x220] sm:$0xff] 0.0
      %123 = vst [vmem:[#allocation2 + $0x228] sm:$0xff] 0.0
      %124 = vst [vmem:[#allocation2 + $0x230] sm:$0xff] 0.0
      %125 = vst [vmem:[#allocation2 + $0x238] sm:$0xff] 0.0
      %126 = vst [vmem:[#allocation2 + $0x240] sm:$0xff] 0.0
      %127 = vst [vmem:[#allocation2 + $0x248] sm:$0xff] 0.0
      %128 = vst [vmem:[#allocation2 + $0x250] sm:$0xff] 0.0
      %129 = vst [vmem:[#allocation2 + $0x258] sm:$0xff] 0.0
      %130 = vst [vmem:[#allocation2 + $0x260] sm:$0xff] 0.0
      %131 = vst [vmem:[#allocation2 + $0x268] sm:$0xff] 0.0
      %132 = vst [vmem:[#allocation2 + $0x270] sm:$0xff] 0.0
      %133 = vst [vmem:[#allocation2 + $0x278] sm:$0xff] 0.0
      %134 = vst [vmem:[#allocation2 + $0x280] sm:$0xff] 0.0
      %135 = vst [vmem:[#allocation2 + $0x288] sm:$0xff] 0.0
      %136 = vst [vmem:[#allocation2 + $0x290] sm:$0xff] 0.0
      %137 = vst [vmem:[#allocation2 + $0x298] sm:$0xff] 0.0
      %138 = vst [vmem:[#allocation2 + $0x2a0] sm:$0xff] 0.0
      %139 = vst [vmem:[#allocation2 + $0x2a8] sm:$0xff] 0.0
      %140 = vst [vmem:[#allocation2 + $0x2b0] sm:$0xff] 0.0
      %141 = vst [vmem:[#allocation2 + $0x2b8] sm:$0xff] 0.0
      %142 = vst [vmem:[#allocation2 + $0x2c0] sm:$0xff] 0.0
      %143 = vst [vmem:[#allocation2 + $0x2c8] sm:$0xff] 0.0
      %144 = vst [vmem:[#allocation2 + $0x2d0] sm:$0xff] 0.0
      %145 = vst [vmem:[#allocation2 + $0x2d8] sm:$0xff] 0.0
      %146 = vst [vmem:[#allocation2 + $0x2e0] sm:$0xff] 0.0
      %147 = vst [vmem:[#allocation2 + $0x2e8] sm:$0xff] 0.0
      %148 = vst [vmem:[#allocation2 + $0x2f0] sm:$0xff] 0.0
      %149 = vst [vmem:[#allocation2 + $0x2f8] sm:$0xff] 0.0
      %150 = vst [vmem:[#allocation2 + $0x300] sm:$0xff] 0.0
      %151 = vst [vmem:[#allocation2 + $0x308] sm:$0xff] 0.0
      %152 = vst [vmem:[#allocation2 + $0x310] sm:$0xff] 0.0
      %153 = vst [vmem:[#allocation2 + $0x318] sm:$0xff] 0.0
      %154 = vst [vmem:[#allocation2 + $0x320] sm:$0xff] 0.0
      %155 = vst [vmem:[#allocation2 + $0x328] sm:$0xff] 0.0
      %156 = vst [vmem:[#allocation2 + $0x330] sm:$0xff] 0.0
      %157 = vst [vmem:[#allocation2 + $0x338] sm:$0xff] 0.0
      %158 = vst [vmem:[#allocation2 + $0x340] sm:$0xff] 0.0
      %159 = vst [vmem:[#allocation2 + $0x348] sm:$0xff] 0.0
      %160 = vst [vmem:[#allocation2 + $0x350] sm:$0xff] 0.0
      %161 = vst [vmem:[#allocation2 + $0x358] sm:$0xff] 0.0
      %162 = vst [vmem:[#allocation2 + $0x360] sm:$0xff] 0.0
      %163 = vst [vmem:[#allocation2 + $0x368] sm:$0xff] 0.0
      %164 = vst [vmem:[#allocation2 + $0x370] sm:$0xff] 0.0
      %165 = vst [vmem:[#allocation2 + $0x378] sm:$0xff] 0.0
      %166 = vst [vmem:[#allocation2 + $0x380] sm:$0xff] 0.0
      %167 = vst [vmem:[#allocation2 + $0x388] sm:$0xff] 0.0
      %168 = vst [vmem:[#allocation2 + $0x390] sm:$0xff] 0.0
      %169 = vst [vmem:[#allocation2 + $0x398] sm:$0xff] 0.0
      %170 = vst [vmem:[#allocation2 + $0x3a0] sm:$0xff] 0.0
      %171 = vst [vmem:[#allocation2 + $0x3a8] sm:$0xff] 0.0
      %172 = vst [vmem:[#allocation2 + $0x3b0] sm:$0xff] 0.0
      %173 = vst [vmem:[#allocation2 + $0x3b8] sm:$0xff] 0.0
      %174 = vst [vmem:[#allocation2 + $0x3c0] sm:$0xff] 0.0
      %175 = vst [vmem:[#allocation2 + $0x3c8] sm:$0xff] 0.0
      %176 = vst [vmem:[#allocation2 + $0x3d0] sm:$0xff] 0.0
      %177 = vst [vmem:[#allocation2 + $0x3d8] sm:$0xff] 0.0
      %178 = vst [vmem:[#allocation2 + $0x3e0] sm:$0xff] 0.0
      %179 = vst [vmem:[#allocation2 + $0x3e8] sm:$0xff] 0.0
      %180 = vst [vmem:[#allocation2 + $0x3f0] sm:$0xff] 0.0
      %181 = vst [vmem:[#allocation2 + $0x3f8] sm:$0xff] 0.0
      %182 = vst [vmem:[#allocation2 + $0x400] sm:$0xff] 0.0
      %183 = vst [vmem:[#allocation2 + $0x408] sm:$0xff] 0.0
      %184 = vst [vmem:[#allocation2 + $0x410] sm:$0xff] 0.0
      %185 = vst [vmem:[#allocation2 + $0x418] sm:$0xff] 0.0
      %186 = vst [vmem:[#allocation2 + $0x420] sm:$0xff] 0.0
      %187 = vst [vmem:[#allocation2 + $0x428] sm:$0xff] 0.0
      %188 = vst [vmem:[#allocation2 + $0x430] sm:$0xff] 0.0
      %189 = vst [vmem:[#allocation2 + $0x438] sm:$0xff] 0.0
      %190 = vst [vmem:[#allocation2 + $0x440] sm:$0xff] 0.0
      %191 = vst [vmem:[#allocation2 + $0x448] sm:$0xff] 0.0
      %192 = vst [vmem:[#allocation2 + $0x450] sm:$0xff] 0.0
      %193 = vst [vmem:[#allocation2 + $0x458] sm:$0xff] 0.0
      %194 = vst [vmem:[#allocation2 + $0x460] sm:$0xff] 0.0
      %195 = vst [vmem:[#allocation2 + $0x468] sm:$0xff] 0.0
      %196 = vst [vmem:[#allocation2 + $0x470] sm:$0xff] 0.0
      %197 = vst [vmem:[#allocation2 + $0x478] sm:$0xff] 0.0
      %198 = vst [vmem:[#allocation2 + $0x480] sm:$0xff] 0.0
      %199 = vst [vmem:[#allocation2 + $0x488] sm:$0xff] 0.0
      %200 = vst [vmem:[#allocation2 + $0x490] sm:$0xff] 0.0
      %201 = vst [vmem:[#allocation2 + $0x498] sm:$0xff] 0.0
      %202 = vst [vmem:[#allocation2 + $0x4a0] sm:$0xff] 0.0
      %203 = vst [vmem:[#allocation2 + $0x4a8] sm:$0xff] 0.0
      %204 = vst [vmem:[#allocation2 + $0x4b0] sm:$0xff] 0.0
      %205 = vst [vmem:[#allocation2 + $0x4b8] sm:$0xff] 0.0
      %206 = vst [vmem:[#allocation2 + $0x4c0] sm:$0xff] 0.0
      %207 = vst [vmem:[#allocation2 + $0x4c8] sm:$0xff] 0.0
      %208 = vst [vmem:[#allocation2 + $0x4d0] sm:$0xff] 0.0
      %209 = vst [vmem:[#allocation2 + $0x4d8] sm:$0xff] 0.0
      %210 = vst [vmem:[#allocation2 + $0x4e0] sm:$0xff] 0.0
      %211 = vst [vmem:[#allocation2 + $0x4e8] sm:$0xff] 0.0
      %212 = vst [vmem:[#allocation2 + $0x4f0] sm:$0xff] 0.0
      %213 = vst [vmem:[#allocation2 + $0x4f8] sm:$0xff] 0.0
    $region29: #{tpu_custom_call.1} parent=1 // pred_fallthru
      _
    %v214 = vld [vmem:[#allocation2] sm:$0xff]
    %v215 = vld [vmem:[#allocation2 + $0x8] sm:$0xff]
    %v216 = vld [vmem:[#allocation2 + $0x10] sm:$0xff]
    %v217 = vld [vmem:[#allocation2 + $0x18] sm:$0xff]
    %v218 = vld [vmem:[#allocation2 + $0x20] sm:$0xff]
    %v219 = vld [vmem:[#allocation2 + $0x28] sm:$0xff]
    %v220 = vld [vmem:[#allocation2 + $0x30] sm:$0xff]
    %v221 = vld [vmem:[#allocation2 + $0x38] sm:$0xff]
    %v222 = vld [vmem:[#allocation2 + $0x40] sm:$0xff]
    %v223 = vld [vmem:[#allocation2 + $0x48] sm:$0xff]
    %v224 = vld [vmem:[#allocation2 + $0x50] sm:$0xff]
    %v225 = vld [vmem:[#allocation2 + $0x58] sm:$0xff]
    %v226 = vld [vmem:[#allocation2 + $0x60] sm:$0xff]
    %v227 = vld [vmem:[#allocation2 + $0x68] sm:$0xff]
    %v228 = vld [vmem:[#allocation2 + $0x70] sm:$0xff]
    %v229 = vld [vmem:[#allocation2 + $0x78] sm:$0xff]
    %v230 = vld [vmem:[#allocation2 + $0x80] sm:$0xff]
    %v231 = vld [vmem:[#allocation2 + $0x88] sm:$0xff]
    %v232 = vld [vmem:[#allocation2 + $0x90] sm:$0xff]
    %v233 = vld [vmem:[#allocation2 + $0x98] sm:$0xff]
    %v234 = vld [vmem:[#allocation2 + $0xa0] sm:$0xff]
    %v235 = vld [vmem:[#allocation2 + $0xa8] sm:$0xff]
    %v236 = vld [vmem:[#allocation2 + $0xb0] sm:$0xff]
    %v237 = vld [vmem:[#allocation2 + $0xb8] sm:$0xff]
    %v238 = vld [vmem:[#allocation2 + $0xc0] sm:$0xff]
    %v239 = vld [vmem:[#allocation2 + $0xc8] sm:$0xff]
    %v240 = vld [vmem:[#allocation2 + $0xd0] sm:$0xff]
    %v241 = vld [vmem:[#allocation2 + $0xd8] sm:$0xff]
    %v242 = vld [vmem:[#allocation2 + $0xe0] sm:$0xff]
    %v243 = vld [vmem:[#allocation2 + $0xe8] sm:$0xff]
    %v244 = vld [vmem:[#allocation2 + $0xf0] sm:$0xff]
    %v245 = vld [vmem:[#allocation2 + $0xf8] sm:$0xff]
    %v246 = vld [vmem:[#allocation2 + $0x100] sm:$0xff]
    %v247 = vld [vmem:[#allocation2 + $0x108] sm:$0xff]
    %v248 = vld [vmem:[#allocation2 + $0x110] sm:$0xff]
    %v249 = vld [vmem:[#allocation2 + $0x118] sm:$0xff]
    %v250 = vld [vmem:[#allocation2 + $0x120] sm:$0xff]
    %v251 = vld [vmem:[#allocation2 + $0x128] sm:$0xff]
    %v252 = vld [vmem:[#allocation2 + $0x130] sm:$0xff]
    %v253 = vld [vmem:[#allocation2 + $0x138] sm:$0xff]
    %v254 = vld [vmem:[#allocation2 + $0x140] sm:$0xff]
    %v255 = vld [vmem:[#allocation2 + $0x148] sm:$0xff]
    %v256 = vld [vmem:[#allocation2 + $0x150] sm:$0xff]
    %v257 = vld [vmem:[#allocation2 + $0x158] sm:$0xff]
    %v258 = vld [vmem:[#allocation2 + $0x160] sm:$0xff]
    %v259 = vld [vmem:[#allocation2 + $0x168] sm:$0xff]
    %v260 = vld [vmem:[#allocation2 + $0x170] sm:$0xff]
    %v261 = vld [vmem:[#allocation2 + $0x178] sm:$0xff]
    %v262 = vld [vmem:[#allocation2 + $0x180] sm:$0xff]
    %v263 = vld [vmem:[#allocation2 + $0x188] sm:$0xff]
    %v264 = vld [vmem:[#allocation2 + $0x190] sm:$0xff]
    %v265 = vld [vmem:[#allocation2 + $0x198] sm:$0xff]
    %v266 = vld [vmem:[#allocation2 + $0x1a0] sm:$0xff]
    %v267 = vld [vmem:[#allocation2 + $0x1a8] sm:$0xff]
    %v268 = vld [vmem:[#allocation2 + $0x1b0] sm:$0xff]
    %v269 = vld [vmem:[#allocation2 + $0x1b8] sm:$0xff]
    %v270 = vld [vmem:[#allocation2 + $0x1c0] sm:$0xff]
    %v271 = vld [vmem:[#allocation2 + $0x1c8] sm:$0xff]
    %v272 = vld [vmem:[#allocation2 + $0x1d0] sm:$0xff]
    %v273 = vld [vmem:[#allocation2 + $0x1d8] sm:$0xff]
    %v274 = vld [vmem:[#allocation2 + $0x1e0] sm:$0xff]
    %v275 = vld [vmem:[#allocation2 + $0x1e8] sm:$0xff]
    %v276 = vld [vmem:[#allocation2 + $0x1f0] sm:$0xff]
    %v277 = vld [vmem:[#allocation2 + $0x1f8] sm:$0xff]
    %v278 = vld [vmem:[#allocation2 + $0x200] sm:$0xff]
    %v279 = vld [vmem:[#allocation2 + $0x208] sm:$0xff]
    %v280 = vld [vmem:[#allocation2 + $0x210] sm:$0xff]
    %v281 = vld [vmem:[#allocation2 + $0x218] sm:$0xff]
    %v282 = vld [vmem:[#allocation2 + $0x220] sm:$0xff]
    %v283 = vld [vmem:[#allocation2 + $0x228] sm:$0xff]
    %v284 = vld [vmem:[#allocation2 + $0x230] sm:$0xff]
    %v285 = vld [vmem:[#allocation2 + $0x238] sm:$0xff]
    %v286 = vld [vmem:[#allocation2 + $0x240] sm:$0xff]
    %v287 = vld [vmem:[#allocation2 + $0x248] sm:$0xff]
    %v288 = vld [vmem:[#allocation2 + $0x250] sm:$0xff]
    %v289 = vld [vmem:[#allocation2 + $0x258] sm:$0xff]
    %v290 = vld [vmem:[#allocation2 + $0x260] sm:$0xff]
    %v291 = vld [vmem:[#allocation2 + $0x268] sm:$0xff]
    %v292 = vld [vmem:[#allocation2 + $0x270] sm:$0xff]
    %v293 = vld [vmem:[#allocation2 + $0x278] sm:$0xff]
    %v294 = vld [vmem:[#allocation2 + $0x280] sm:$0xff]
    %v295 = vld [vmem:[#allocation2 + $0x288] sm:$0xff]
    %v296 = vld [vmem:[#allocation2 + $0x290] sm:$0xff]
    %v297 = vld [vmem:[#allocation2 + $0x298] sm:$0xff]
    %v298 = vld [vmem:[#allocation2 + $0x2a0] sm:$0xff]
    %v299 = vld [vmem:[#allocation2 + $0x2a8] sm:$0xff]
    %v300 = vld [vmem:[#allocation2 + $0x2b0] sm:$0xff]
    %v301 = vld [vmem:[#allocation2 + $0x2b8] sm:$0xff]
    %v302 = vld [vmem:[#allocation2 + $0x2c0] sm:$0xff]
    %v303 = vld [vmem:[#allocation2 + $0x2c8] sm:$0xff]
    %v304 = vld [vmem:[#allocation2 + $0x2d0] sm:$0xff]
    %v305 = vld [vmem:[#allocation2 + $0x2d8] sm:$0xff]
    %v306 = vld [vmem:[#allocation2 + $0x2e0] sm:$0xff]
    %v307 = vld [vmem:[#allocation2 + $0x2e8] sm:$0xff]
    %v308 = vld [vmem:[#allocation2 + $0x2f0] sm:$0xff]
    %v309 = vld [vmem:[#allocation2 + $0x2f8] sm:$0xff]
    %v310 = vld [vmem:[#allocation2 + $0x300] sm:$0xff]
    %v311 = vld [vmem:[#allocation2 + $0x308] sm:$0xff]
    %v312 = vld [vmem:[#allocation2 + $0x310] sm:$0xff]
    %v313 = vld [vmem:[#allocation2 + $0x318] sm:$0xff]
    %v314 = vld [vmem:[#allocation2 + $0x320] sm:$0xff]
    %v315 = vld [vmem:[#allocation2 + $0x328] sm:$0xff]
    %v316 = vld [vmem:[#allocation2 + $0x330] sm:$0xff]
    %v317 = vld [vmem:[#allocation2 + $0x338] sm:$0xff]
    %v318 = vld [vmem:[#allocation2 + $0x340] sm:$0xff]
    %v319 = vld [vmem:[#allocation2 + $0x348] sm:$0xff]
    %v320 = vld [vmem:[#allocation2 + $0x350] sm:$0xff]
    %v321 = vld [vmem:[#allocation2 + $0x358] sm:$0xff]
    %v322 = vld [vmem:[#allocation2 + $0x360] sm:$0xff]
    %v323 = vld [vmem:[#allocation2 + $0x368] sm:$0xff]
    %v324 = vld [vmem:[#allocation2 + $0x370] sm:$0xff]
    %v325 = vld [vmem:[#allocation2 + $0x378] sm:$0xff]
    %v326 = vld [vmem:[#allocation2 + $0x380] sm:$0xff]
    %v327 = vld [vmem:[#allocation2 + $0x388] sm:$0xff]
    %v328 = vld [vmem:[#allocation2 + $0x390] sm:$0xff]
    %v329 = vld [vmem:[#allocation2 + $0x398] sm:$0xff]
    %v330 = vld [vmem:[#allocation2 + $0x3a0] sm:$0xff]
    %v331 = vld [vmem:[#allocation2 + $0x3a8] sm:$0xff]
    %v332 = vld [vmem:[#allocation2 + $0x3b0] sm:$0xff]
    %v333 = vld [vmem:[#allocation2 + $0x3b8] sm:$0xff]
    %v334 = vld [vmem:[#allocation2 + $0x3c0] sm:$0xff]
    %v335 = vld [vmem:[#allocation2 + $0x3c8] sm:$0xff]
    %v336 = vld [vmem:[#allocation2 + $0x3d0] sm:$0xff]
    %v337 = vld [vmem:[#allocation2 + $0x3d8] sm:$0xff]
    %v338 = vld [vmem:[#allocation2 + $0x3e0] sm:$0xff]
    %v339 = vld [vmem:[#allocation2 + $0x3e8] sm:$0xff]
    %v340 = vld [vmem:[#allocation2 + $0x3f0] sm:$0xff]
    %v341 = vld [vmem:[#allocation2 + $0x3f8] sm:$0xff]
    %v342 = vld [vmem:[#allocation2 + $0x400] sm:$0xff]
    %v343 = vld [vmem:[#allocation2 + $0x408] sm:$0xff]
    %v344 = vld [vmem:[#allocation2 + $0x410] sm:$0xff]
    %v345 = vld [vmem:[#allocation2 + $0x418] sm:$0xff]
    %v346 = vld [vmem:[#allocation2 + $0x420] sm:$0xff]
    %v347 = vld [vmem:[#allocation2 + $0x428] sm:$0xff]
    %v348 = vld [vmem:[#allocation2 + $0x430] sm:$0xff]
    %v349 = vld [vmem:[#allocation2 + $0x438] sm:$0xff]
    %v350 = vld [vmem:[#allocation2 + $0x440] sm:$0xff]
    %v351 = vld [vmem:[#allocation2 + $0x448] sm:$0xff]
    %v352 = vld [vmem:[#allocation2 + $0x450] sm:$0xff]
    %v353 = vld [vmem:[#allocation2 + $0x458] sm:$0xff]
    %v354 = vld [vmem:[#allocation2 + $0x460] sm:$0xff]
    %v355 = vld [vmem:[#allocation2 + $0x468] sm:$0xff]
    %v356 = vld [vmem:[#allocation2 + $0x470] sm:$0xff]
    %v357 = vld [vmem:[#allocation2 + $0x478] sm:$0xff]
    %v358 = vld [vmem:[#allocation2 + $0x480] sm:$0xff]
    %v359 = vld [vmem:[#allocation2 + $0x488] sm:$0xff]
    %v360 = vld [vmem:[#allocation2 + $0x490] sm:$0xff]
    %v361 = vld [vmem:[#allocation2 + $0x498] sm:$0xff]
    %v362 = vld [vmem:[#allocation2 + $0x4a0] sm:$0xff]
    %v363 = vld [vmem:[#allocation2 + $0x4a8] sm:$0xff]
    %v364 = vld [vmem:[#allocation2 + $0x4b0] sm:$0xff]
    %v365 = vld [vmem:[#allocation2 + $0x4b8] sm:$0xff]
    %v366 = vld [vmem:[#allocation2 + $0x4c0] sm:$0xff]
    %v367 = vld [vmem:[#allocation2 + $0x4c8] sm:$0xff]
    %v368 = vld [vmem:[#allocation2 + $0x4d0] sm:$0xff]
    %v369 = vld [vmem:[#allocation2 + $0x4d8] sm:$0xff]
    %v370 = vld [vmem:[#allocation2 + $0x4e0] sm:$0xff]
    %v371 = vld [vmem:[#allocation2 + $0x4e8] sm:$0xff]
    %v372 = vld [vmem:[#allocation2 + $0x4f0] sm:$0xff]
    %v373 = vld [vmem:[#allocation2 + $0x4f8] sm:$0xff]
    %v374 = vld [vmem:[#allocation3] sm:$0xf]
    %v375 = vld [vmem:[#allocation3 + $0x4] sm:$0xf]
    %v376 = vld [vmem:[#allocation3 + $0x8] sm:$0xf]
    %v377 = vld [vmem:[#allocation3 + $0xc] sm:$0xf]
    %v378 = vld [vmem:[#allocation3 + $0x10] sm:$0xf]
    %v379 = vld [vmem:[#allocation3 + $0x14] sm:$0xf]
    %v380 = vld [vmem:[#allocation3 + $0x18] sm:$0xf]
    %v381 = vld [vmem:[#allocation3 + $0x1c] sm:$0xf]
    %v382 = vld [vmem:[#allocation3 + $0x20] sm:$0xf]
    %v383 = vld [vmem:[#allocation3 + $0x24] sm:$0xf]
    %v384 = vld [vmem:[#allocation3 + $0x28] sm:$0xf]
    %v385 = vld [vmem:[#allocation3 + $0x2c] sm:$0xf]
    %v386 = vld [vmem:[#allocation3 + $0x30] sm:$0xf]
    %v387 = vld [vmem:[#allocation3 + $0x34] sm:$0xf]
    %v388 = vld [vmem:[#allocation3 + $0x38] sm:$0xf]
    %v389 = vld [vmem:[#allocation3 + $0x3c] sm:$0xf]
    %v390 = vld [vmem:[#allocation3 + $0x40] sm:$0xf]
    %v391 = vld [vmem:[#allocation3 + $0x44] sm:$0xf]
    %v392 = vld [vmem:[#allocation3 + $0x48] sm:$0xf]
    %v393 = vld [vmem:[#allocation3 + $0x4c] sm:$0xf]
    %v394 = vld [vmem:[#allocation3 + $0x50] sm:$0xf]
    %v395 = vld [vmem:[#allocation3 + $0x54] sm:$0xf]
    %v396 = vld [vmem:[#allocation3 + $0x58] sm:$0xf]
    %v397 = vld [vmem:[#allocation3 + $0x5c] sm:$0xf]
    %v398 = vld [vmem:[#allocation3 + $0x60] sm:$0xf]
    %v399 = vld [vmem:[#allocation3 + $0x64] sm:$0xf]
    %v400 = vld [vmem:[#allocation3 + $0x68] sm:$0xf]
    %v401 = vld [vmem:[#allocation3 + $0x6c] sm:$0xf]
    %v402 = vld [vmem:[#allocation3 + $0x70] sm:$0xf]
    %v403 = vld [vmem:[#allocation3 + $0x74] sm:$0xf]
    %v404 = vld [vmem:[#allocation3 + $0x78] sm:$0xf]
    %v405 = vld [vmem:[#allocation3 + $0x7c] sm:$0xf]
    %v406 = vld [vmem:[#allocation3 + $0x80] sm:$0xf]
    %v407 = vld [vmem:[#allocation3 + $0x84] sm:$0xf]
    %v408 = vld [vmem:[#allocation3 + $0x88] sm:$0xf]
    %v409 = vld [vmem:[#allocation3 + $0x8c] sm:$0xf]
    %v410 = vld [vmem:[#allocation3 + $0x90] sm:$0xf]
    %v411 = vld [vmem:[#allocation3 + $0x94] sm:$0xf]
    %v412 = vld [vmem:[#allocation3 + $0x98] sm:$0xf]
    %v413 = vld [vmem:[#allocation3 + $0x9c] sm:$0xf]
    %v414 = vld [vmem:[#allocation3 + $0xa0] sm:$0xf]
    %v415 = vld [vmem:[#allocation3 + $0xa4] sm:$0xf]
    %v416 = vld [vmem:[#allocation3 + $0xa8] sm:$0xf]
    %v417 = vld [vmem:[#allocation3 + $0xac] sm:$0xf]
    %v418 = vld [vmem:[#allocation3 + $0xb0] sm:$0xf]
    %v419 = vld [vmem:[#allocation3 + $0xb4] sm:$0xf]
    %v420 = vld [vmem:[#allocation3 + $0xb8] sm:$0xf]
    %v421 = vld [vmem:[#allocation3 + $0xbc] sm:$0xf]
    %v422 = vld [vmem:[#allocation3 + $0xc0] sm:$0xf]
    %v423 = vld [vmem:[#allocation3 + $0xc4] sm:$0xf]
    %v424 = vld [vmem:[#allocation3 + $0xc8] sm:$0xf]
    %v425 = vld [vmem:[#allocation3 + $0xcc] sm:$0xf]
    %v426 = vld [vmem:[#allocation3 + $0xd0] sm:$0xf]
    %v427 = vld [vmem:[#allocation3 + $0xd4] sm:$0xf]
    %v428 = vld [vmem:[#allocation3 + $0xd8] sm:$0xf]
    %v429 = vld [vmem:[#allocation3 + $0xdc] sm:$0xf]
    %v430 = vld [vmem:[#allocation3 + $0xe0] sm:$0xf]
    %v431 = vld [vmem:[#allocation3 + $0xe4] sm:$0xf]
    %v432 = vld [vmem:[#allocation3 + $0xe8] sm:$0xf]
    %v433 = vld [vmem:[#allocation3 + $0xec] sm:$0xf]
    %v434 = vld [vmem:[#allocation3 + $0xf0] sm:$0xf]
    %v435 = vld [vmem:[#allocation3 + $0xf4] sm:$0xf]
    %v436 = vld [vmem:[#allocation3 + $0xf8] sm:$0xf]
    %v437 = vld [vmem:[#allocation3 + $0xfc] sm:$0xf]
    %v438 = vld [vmem:[#allocation3 + $0x100] sm:$0xf]
    %v439 = vld [vmem:[#allocation3 + $0x104] sm:$0xf]
    %v440 = vld [vmem:[#allocation3 + $0x108] sm:$0xf]
    %v441 = vld [vmem:[#allocation3 + $0x10c] sm:$0xf]
    %v442 = vld [vmem:[#allocation3 + $0x110] sm:$0xf]
    %v443 = vld [vmem:[#allocation3 + $0x114] sm:$0xf]
    %v444 = vld [vmem:[#allocation3 + $0x118] sm:$0xf]
    %v445 = vld [vmem:[#allocation3 + $0x11c] sm:$0xf]
    %v446 = vld [vmem:[#allocation3 + $0x120] sm:$0xf]
    %v447 = vld [vmem:[#allocation3 + $0x124] sm:$0xf]
    %v448 = vld [vmem:[#allocation3 + $0x128] sm:$0xf]
    %v449 = vld [vmem:[#allocation3 + $0x12c] sm:$0xf]
    %v450 = vld [vmem:[#allocation3 + $0x130] sm:$0xf]
    %v451 = vld [vmem:[#allocation3 + $0x134] sm:$0xf]
    %v452 = vld [vmem:[#allocation3 + $0x138] sm:$0xf]
    %v453 = vld [vmem:[#allocation3 + $0x13c] sm:$0xf]
    %v454 = vld [vmem:[#allocation3 + $0x140] sm:$0xf]
    %v455 = vld [vmem:[#allocation3 + $0x144] sm:$0xf]
    %v456 = vld [vmem:[#allocation3 + $0x148] sm:$0xf]
    %v457 = vld [vmem:[#allocation3 + $0x14c] sm:$0xf]
    %v458 = vld [vmem:[#allocation3 + $0x150] sm:$0xf]
    %v459 = vld [vmem:[#allocation3 + $0x154] sm:$0xf]
    %v460 = vld [vmem:[#allocation3 + $0x158] sm:$0xf]
    %v461 = vld [vmem:[#allocation3 + $0x15c] sm:$0xf]
    %v462 = vld [vmem:[#allocation3 + $0x160] sm:$0xf]
    %v463 = vld [vmem:[#allocation3 + $0x164] sm:$0xf]
    %v464 = vld [vmem:[#allocation3 + $0x168] sm:$0xf]
    %v465 = vld [vmem:[#allocation3 + $0x16c] sm:$0xf]
    %v466 = vld [vmem:[#allocation3 + $0x170] sm:$0xf]
    %v467 = vld [vmem:[#allocation3 + $0x174] sm:$0xf]
    %v468 = vld [vmem:[#allocation3 + $0x178] sm:$0xf]
    %v469 = vld [vmem:[#allocation3 + $0x17c] sm:$0xf]
    %v470 = vld [vmem:[#allocation3 + $0x180] sm:$0xf]
    %v471 = vld [vmem:[#allocation3 + $0x184] sm:$0xf]
    %v472 = vld [vmem:[#allocation3 + $0x188] sm:$0xf]
    %v473 = vld [vmem:[#allocation3 + $0x18c] sm:$0xf]
    %v474 = vld [vmem:[#allocation3 + $0x190] sm:$0xf]
    %v475 = vld [vmem:[#allocation3 + $0x194] sm:$0xf]
    %v476 = vld [vmem:[#allocation3 + $0x198] sm:$0xf]
    %v477 = vld [vmem:[#allocation3 + $0x19c] sm:$0xf]
    %v478 = vld [vmem:[#allocation3 + $0x1a0] sm:$0xf]
    %v479 = vld [vmem:[#allocation3 + $0x1a4] sm:$0xf]
    %v480 = vld [vmem:[#allocation3 + $0x1a8] sm:$0xf]
    %v481 = vld [vmem:[#allocation3 + $0x1ac] sm:$0xf]
    %v482 = vld [vmem:[#allocation3 + $0x1b0] sm:$0xf]
    %v483 = vld [vmem:[#allocation3 + $0x1b4] sm:$0xf]
    %v484 = vld [vmem:[#allocation3 + $0x1b8] sm:$0xf]
    %v485 = vld [vmem:[#allocation3 + $0x1bc] sm:$0xf]
    %v486 = vld [vmem:[#allocation3 + $0x1c0] sm:$0xf]
    %v487 = vld [vmem:[#allocation3 + $0x1c4] sm:$0xf]
    %v488 = vld [vmem:[#allocation3 + $0x1c8] sm:$0xf]
    %v489 = vld [vmem:[#allocation3 + $0x1cc] sm:$0xf]
    %v490 = vld [vmem:[#allocation3 + $0x1d0] sm:$0xf]
    %v491 = vld [vmem:[#allocation3 + $0x1d4] sm:$0xf]
    %v492 = vld [vmem:[#allocation3 + $0x1d8] sm:$0xf]
    %v493 = vld [vmem:[#allocation3 + $0x1dc] sm:$0xf]
    %v494 = vld [vmem:[#allocation3 + $0x1e0] sm:$0xf]
    %v495 = vld [vmem:[#allocation3 + $0x1e4] sm:$0xf]
    %v496 = vld [vmem:[#allocation3 + $0x1e8] sm:$0xf]
    %v497 = vld [vmem:[#allocation3 + $0x1ec] sm:$0xf]
    %v498 = vld [vmem:[#allocation3 + $0x1f0] sm:$0xf]
    %v499 = vld [vmem:[#allocation3 + $0x1f4] sm:$0xf]
    %v500 = vld [vmem:[#allocation3 + $0x1f8] sm:$0xf]
    %v501 = vld [vmem:[#allocation3 + $0x1fc] sm:$0xf]
    %v502 = vld [vmem:[#allocation3 + $0x200] sm:$0xf]
    %v503 = vld [vmem:[#allocation3 + $0x204] sm:$0xf]
    %v504 = vld [vmem:[#allocation3 + $0x208] sm:$0xf]
    %v505 = vld [vmem:[#allocation3 + $0x20c] sm:$0xf]
    %v506 = vld [vmem:[#allocation3 + $0x210] sm:$0xf]
    %v507 = vld [vmem:[#allocation3 + $0x214] sm:$0xf]
    %v508 = vld [vmem:[#allocation3 + $0x218] sm:$0xf]
    %v509 = vld [vmem:[#allocation3 + $0x21c] sm:$0xf]
    %v510 = vld [vmem:[#allocation3 + $0x220] sm:$0xf]
    %v511 = vld [vmem:[#allocation3 + $0x224] sm:$0xf]
    %v512 = vld [vmem:[#allocation3 + $0x228] sm:$0xf]
    %v513 = vld [vmem:[#allocation3 + $0x22c] sm:$0xf]
    %v514 = vld [vmem:[#allocation3 + $0x230] sm:$0xf]
    %v515 = vld [vmem:[#allocation3 + $0x234] sm:$0xf]
    %v516 = vld [vmem:[#allocation3 + $0x238] sm:$0xf]
    %v517 = vld [vmem:[#allocation3 + $0x23c] sm:$0xf]
    %v518 = vld [vmem:[#allocation3 + $0x240] sm:$0xf]
    %v519 = vld [vmem:[#allocation3 + $0x244] sm:$0xf]
    %v520 = vld [vmem:[#allocation3 + $0x248] sm:$0xf]
    %v521 = vld [vmem:[#allocation3 + $0x24c] sm:$0xf]
    %v522 = vld [vmem:[#allocation3 + $0x250] sm:$0xf]
    %v523 = vld [vmem:[#allocation3 + $0x254] sm:$0xf]
    %v524 = vld [vmem:[#allocation3 + $0x258] sm:$0xf]
    %v525 = vld [vmem:[#allocation3 + $0x25c] sm:$0xf]
    %v526 = vld [vmem:[#allocation3 + $0x260] sm:$0xf]
    %v527 = vld [vmem:[#allocation3 + $0x264] sm:$0xf]
    %v528 = vld [vmem:[#allocation3 + $0x268] sm:$0xf]
    %v529 = vld [vmem:[#allocation3 + $0x26c] sm:$0xf]
    %v530 = vld [vmem:[#allocation3 + $0x270] sm:$0xf]
    %v531 = vld [vmem:[#allocation3 + $0x274] sm:$0xf]
    %v532 = vld [vmem:[#allocation3 + $0x278] sm:$0xf]
    %v533 = vld [vmem:[#allocation3 + $0x27c] sm:$0xf]
    %v534 = vld [vmem:[#allocation6] sm:$0xf]
    %v535 = vld [vmem:[#allocation6 + $0x4] sm:$0xf]
    %v536 = vld [vmem:[#allocation6 + $0x8] sm:$0xf]
    %v537 = vld [vmem:[#allocation6 + $0xc] sm:$0xf]
    %v538 = vld [vmem:[#allocation6 + $0x10] sm:$0xf]
    %v539 = vld [vmem:[#allocation6 + $0x14] sm:$0xf]
    %v540 = vld [vmem:[#allocation6 + $0x18] sm:$0xf]
    %v541 = vld [vmem:[#allocation6 + $0x1c] sm:$0xf]
    %v542 = vld [vmem:[#allocation6 + $0x20] sm:$0xf]
    %v543 = vld [vmem:[#allocation6 + $0x24] sm:$0xf]
    %v544 = vld [vmem:[#allocation6 + $0x28] sm:$0xf]
    %v545 = vld [vmem:[#allocation6 + $0x2c] sm:$0xf]
    %v546 = vld [vmem:[#allocation6 + $0x30] sm:$0xf]
    %v547 = vld [vmem:[#allocation6 + $0x34] sm:$0xf]
    %v548 = vld [vmem:[#allocation6 + $0x38] sm:$0xf]
    %v549 = vld [vmem:[#allocation6 + $0x3c] sm:$0xf]
    %v710 = vunpack.c.l.b16 %v374
    %v711 = vunpack.c.l.b16 %v375
    %v712 = vunpack.c.l.b16 %v376
    %v713 = vunpack.c.l.b16 %v377
    %v714 = vunpack.c.l.b16 %v378
    %v715 = vunpack.c.l.b16 %v379
    %v716 = vunpack.c.l.b16 %v380
    %v717 = vunpack.c.l.b16 %v381
    %v718 = vunpack.c.l.b16 %v382
    %v719 = vunpack.c.l.b16 %v383
    %v720 = vunpack.c.l.b16 %v384
    %v721 = vunpack.c.l.b16 %v385
    %v722 = vunpack.c.l.b16 %v386
    %v723 = vunpack.c.l.b16 %v387
    %v724 = vunpack.c.l.b16 %v388
    %v725 = vunpack.c.l.b16 %v389
    %v726 = vunpack.c.l.b16 %v390
    %v727 = vunpack.c.l.b16 %v391
    %v728 = vunpack.c.l.b16 %v392
    %v729 = vunpack.c.l.b16 %v393
    %v730 = vunpack.c.l.b16 %v394
    %v731 = vunpack.c.l.b16 %v395
    %v732 = vunpack.c.l.b16 %v396
    %v733 = vunpack.c.l.b16 %v397
    %v734 = vunpack.c.l.b16 %v398
    %v735 = vunpack.c.l.b16 %v399
    %v736 = vunpack.c.l.b16 %v400
    %v737 = vunpack.c.l.b16 %v401
    %v738 = vunpack.c.l.b16 %v402
    %v739 = vunpack.c.l.b16 %v403
    %v740 = vunpack.c.l.b16 %v404
    %v741 = vunpack.c.l.b16 %v405
    %v742 = vunpack.c.l.b16 %v406
    %v743 = vunpack.c.l.b16 %v407
    %v744 = vunpack.c.l.b16 %v408
    %v745 = vunpack.c.l.b16 %v409
    %v746 = vunpack.c.l.b16 %v410
    %v747 = vunpack.c.l.b16 %v411
    %v748 = vunpack.c.l.b16 %v412
    %v749 = vunpack.c.l.b16 %v413
    %v750 = vunpack.c.l.b16 %v414
    %v751 = vunpack.c.l.b16 %v415
    %v752 = vunpack.c.l.b16 %v416
    %v753 = vunpack.c.l.b16 %v417
    %v754 = vunpack.c.l.b16 %v418
    %v755 = vunpack.c.l.b16 %v419
    %v756 = vunpack.c.l.b16 %v420
    %v757 = vunpack.c.l.b16 %v421
    %v758 = vunpack.c.l.b16 %v422
    %v759 = vunpack.c.l.b16 %v423
    %v760 = vunpack.c.l.b16 %v424
    %v761 = vunpack.c.l.b16 %v425
    %v762 = vunpack.c.l.b16 %v426
    %v763 = vunpack.c.l.b16 %v427
    %v764 = vunpack.c.l.b16 %v428
    %v765 = vunpack.c.l.b16 %v429
    %v766 = vunpack.c.l.b16 %v430
    %v767 = vunpack.c.l.b16 %v431
    %v768 = vunpack.c.l.b16 %v432
    %v769 = vunpack.c.l.b16 %v433
    %v770 = vunpack.c.l.b16 %v434
    %v771 = vunpack.c.l.b16 %v435
    %v772 = vunpack.c.l.b16 %v436
    %v773 = vunpack.c.l.b16 %v437
    %v774 = vunpack.c.l.b16 %v438
    %v775 = vunpack.c.l.b16 %v439
    %v776 = vunpack.c.l.b16 %v440
    %v777 = vunpack.c.l.b16 %v441
    %v778 = vunpack.c.l.b16 %v442
    %v779 = vunpack.c.l.b16 %v443
    %v780 = vunpack.c.l.b16 %v444
    %v781 = vunpack.c.l.b16 %v445
    %v782 = vunpack.c.l.b16 %v446
    %v783 = vunpack.c.l.b16 %v447
    %v784 = vunpack.c.l.b16 %v448
    %v785 = vunpack.c.l.b16 %v449
    %v786 = vunpack.c.l.b16 %v450
    %v787 = vunpack.c.l.b16 %v451
    %v788 = vunpack.c.l.b16 %v452
    %v789 = vunpack.c.l.b16 %v453
    %v790 = vunpack.c.l.b16 %v454
    %v791 = vunpack.c.l.b16 %v455
    %v792 = vunpack.c.l.b16 %v456
    %v793 = vunpack.c.l.b16 %v457
    %v794 = vunpack.c.l.b16 %v458
    %v795 = vunpack.c.l.b16 %v459
    %v796 = vunpack.c.l.b16 %v460
    %v797 = vunpack.c.l.b16 %v461
    %v798 = vunpack.c.l.b16 %v462
    %v799 = vunpack.c.l.b16 %v463
    %v800 = vunpack.c.l.b16 %v464
    %v801 = vunpack.c.l.b16 %v465
    %v802 = vunpack.c.l.b16 %v466
    %v803 = vunpack.c.l.b16 %v467
    %v804 = vunpack.c.l.b16 %v468
    %v805 = vunpack.c.l.b16 %v469
    %v806 = vunpack.c.l.b16 %v470
    %v807 = vunpack.c.l.b16 %v471
    %v808 = vunpack.c.l.b16 %v472
    %v809 = vunpack.c.l.b16 %v473
    %v810 = vunpack.c.l.b16 %v474
    %v811 = vunpack.c.l.b16 %v475
    %v812 = vunpack.c.l.b16 %v476
    %v813 = vunpack.c.l.b16 %v477
    %v814 = vunpack.c.l.b16 %v478
    %v815 = vunpack.c.l.b16 %v479
    %v816 = vunpack.c.l.b16 %v480
    %v817 = vunpack.c.l.b16 %v481
    %v818 = vunpack.c.l.b16 %v482
    %v819 = vunpack.c.l.b16 %v483
    %v820 = vunpack.c.l.b16 %v484
    %v821 = vunpack.c.l.b16 %v485
    %v822 = vunpack.c.l.b16 %v486
    %v823 = vunpack.c.l.b16 %v487
    %v824 = vunpack.c.l.b16 %v488
    %v825 = vunpack.c.l.b16 %v489
    %v826 = vunpack.c.l.b16 %v490
    %v827 = vunpack.c.l.b16 %v491
    %v828 = vunpack.c.l.b16 %v492
    %v829 = vunpack.c.l.b16 %v493
    %v830 = vunpack.c.l.b16 %v494
    %v831 = vunpack.c.l.b16 %v495
    %v832 = vunpack.c.l.b16 %v496
    %v833 = vunpack.c.l.b16 %v497
    %v834 = vunpack.c.l.b16 %v498
    %v835 = vunpack.c.l.b16 %v499
    %v836 = vunpack.c.l.b16 %v500
    %v837 = vunpack.c.l.b16 %v501
    %v838 = vunpack.c.l.b16 %v502
    %v839 = vunpack.c.l.b16 %v503
    %v840 = vunpack.c.l.b16 %v504
    %v841 = vunpack.c.l.b16 %v505
    %v842 = vunpack.c.l.b16 %v506
    %v843 = vunpack.c.l.b16 %v507
    %v844 = vunpack.c.l.b16 %v508
    %v845 = vunpack.c.l.b16 %v509
    %v846 = vunpack.c.l.b16 %v510
    %v847 = vunpack.c.l.b16 %v511
    %v848 = vunpack.c.l.b16 %v512
    %v849 = vunpack.c.l.b16 %v513
    %v850 = vunpack.c.l.b16 %v514
    %v851 = vunpack.c.l.b16 %v515
    %v852 = vunpack.c.l.b16 %v516
    %v853 = vunpack.c.l.b16 %v517
    %v854 = vunpack.c.l.b16 %v518
    %v855 = vunpack.c.l.b16 %v519
    %v856 = vunpack.c.l.b16 %v520
    %v857 = vunpack.c.l.b16 %v521
    %v858 = vunpack.c.l.b16 %v522
    %v859 = vunpack.c.l.b16 %v523
    %v860 = vunpack.c.l.b16 %v524
    %v861 = vunpack.c.l.b16 %v525
    %v862 = vunpack.c.l.b16 %v526
    %v863 = vunpack.c.l.b16 %v527
    %v864 = vunpack.c.l.b16 %v528
    %v865 = vunpack.c.l.b16 %v529
    %v866 = vunpack.c.l.b16 %v530
    %v867 = vunpack.c.l.b16 %v531
    %v868 = vunpack.c.l.b16 %v532
    %v869 = vunpack.c.l.b16 %v533
    %v870 = vpack.c.b16 %v711, %v710
    %v871 = vpack.c.b16 %v713, %v712
    %v872 = vpack.c.b16 %v715, %v714
    %v873 = vpack.c.b16 %v717, %v716
    %v874 = vpack.c.b16 %v719, %v718
    %v875 = vpack.c.b16 %v721, %v720
    %v876 = vpack.c.b16 %v723, %v722
    %v877 = vpack.c.b16 %v725, %v724
    %v878 = vpack.c.b16 %v727, %v726
    %v879 = vpack.c.b16 %v729, %v728
    %v880 = vpack.c.b16 %v731, %v730
    %v881 = vpack.c.b16 %v733, %v732
    %v882 = vpack.c.b16 %v735, %v734
    %v883 = vpack.c.b16 %v737, %v736
    %v884 = vpack.c.b16 %v739, %v738
    %v885 = vpack.c.b16 %v741, %v740
    %v886 = vpack.c.b16 %v743, %v742
    %v887 = vpack.c.b16 %v745, %v744
    %v888 = vpack.c.b16 %v747, %v746
    %v889 = vpack.c.b16 %v749, %v748
    %v890 = vpack.c.b16 %v751, %v750
    %v891 = vpack.c.b16 %v753, %v752
    %v892 = vpack.c.b16 %v755, %v754
    %v893 = vpack.c.b16 %v757, %v756
    %v894 = vpack.c.b16 %v759, %v758
    %v895 = vpack.c.b16 %v761, %v760
    %v896 = vpack.c.b16 %v763, %v762
    %v897 = vpack.c.b16 %v765, %v764
    %v898 = vpack.c.b16 %v767, %v766
    %v899 = vpack.c.b16 %v769, %v768
    %v900 = vpack.c.b16 %v771, %v770
    %v901 = vpack.c.b16 %v773, %v772
    %v902 = vpack.c.b16 %v775, %v774
    %v903 = vpack.c.b16 %v777, %v776
    %v904 = vpack.c.b16 %v779, %v778
    %v905 = vpack.c.b16 %v781, %v780
    %v906 = vpack.c.b16 %v783, %v782
    %v907 = vpack.c.b16 %v785, %v784
    %v908 = vpack.c.b16 %v787, %v786
    %v909 = vpack.c.b16 %v789, %v788
    %v910 = vpack.c.b16 %v791, %v790
    %v911 = vpack.c.b16 %v793, %v792
    %v912 = vpack.c.b16 %v795, %v794
    %v913 = vpack.c.b16 %v797, %v796
    %v914 = vpack.c.b16 %v799, %v798
    %v915 = vpack.c.b16 %v801, %v800
    %v916 = vpack.c.b16 %v803, %v802
    %v917 = vpack.c.b16 %v805, %v804
    %v918 = vpack.c.b16 %v807, %v806
    %v919 = vpack.c.b16 %v809, %v808
    %v920 = vpack.c.b16 %v811, %v810
    %v921 = vpack.c.b16 %v813, %v812
    %v922 = vpack.c.b16 %v815, %v814
    %v923 = vpack.c.b16 %v817, %v816
    %v924 = vpack.c.b16 %v819, %v818
    %v925 = vpack.c.b16 %v821, %v820
    %v926 = vpack.c.b16 %v823, %v822
    %v927 = vpack.c.b16 %v825, %v824
    %v928 = vpack.c.b16 %v827, %v826
    %v929 = vpack.c.b16 %v829, %v828
    %v930 = vpack.c.b16 %v831, %v830
    %v931 = vpack.c.b16 %v833, %v832
    %v932 = vpack.c.b16 %v835, %v834
    %v933 = vpack.c.b16 %v837, %v836
    %v934 = vpack.c.b16 %v839, %v838
    %v935 = vpack.c.b16 %v841, %v840
    %v936 = vpack.c.b16 %v843, %v842
    %v937 = vpack.c.b16 %v845, %v844
    %v938 = vpack.c.b16 %v847, %v846
    %v939 = vpack.c.b16 %v849, %v848
    %v940 = vpack.c.b16 %v851, %v850
    %v941 = vpack.c.b16 %v853, %v852
    %v942 = vpack.c.b16 %v855, %v854
    %v943 = vpack.c.b16 %v857, %v856
    %v944 = vpack.c.b16 %v859, %v858
    %v945 = vpack.c.b16 %v861, %v860
    %v946 = vpack.c.b16 %v863, %v862
    %v947 = vpack.c.b16 %v865, %v864
    %v948 = vpack.c.b16 %v867, %v866
    %v949 = vpack.c.b16 %v869, %v868
    %v1046 = vunpack.c.l.b16 %v534
    %v1047 = vunpack.c.l.b16 %v535
    %v1048 = vunpack.c.l.b16 %v536
    %v1049 = vunpack.c.l.b16 %v537
    %v1050 = vunpack.c.l.b16 %v538
    %v1051 = vunpack.c.l.b16 %v539
    %v1052 = vunpack.c.l.b16 %v540
    %v1053 = vunpack.c.l.b16 %v541
    %v1054 = vunpack.c.l.b16 %v542
    %v1055 = vunpack.c.l.b16 %v543
    %v1056 = vunpack.c.l.b16 %v544
    %v1057 = vunpack.c.l.b16 %v545
    %v1058 = vunpack.c.l.b16 %v546
    %v1059 = vunpack.c.l.b16 %v547
    %v1060 = vunpack.c.l.b16 %v548
    %v1061 = vunpack.c.l.b16 %v549
    %v1062 = vpack.c.b16 %v1047, %v1046
    %v1063 = vpack.c.b16 %v1049, %v1048
    %v1064 = vpack.c.b16 %v1051, %v1050
    %v1065 = vpack.c.b16 %v1053, %v1052
    %v1066 = vpack.c.b16 %v1055, %v1054
    %v1067 = vpack.c.b16 %v1057, %v1056
    %v1068 = vpack.c.b16 %v1059, %v1058
    %v1069 = vpack.c.b16 %v1061, %v1060
    %1078 = vmatpush.bf16.msra.mxu0 %v1069
    %1079 = vmatpush.bf16.msra.mxu0 %v1068
    %1080 = vmatpush.bf16.msra.mxu0 %v1067
    %1081 = vmatpush.bf16.msra.mxu0 %v1066
    %1082 = vmatpush.bf16.msra.mxu0 %v1065
    %1083 = vmatpush.bf16.msra.mxu0 %v1064
    %1084 = vmatpush.bf16.msra.mxu0 %v1063
    %1085 = vmatpush.bf16.msra.mxu0 %v1062
    %1086 = vmatmul.bf16.gmra.mxu0 %v870
    %v1087 = vpop.f32.mrf.mxu0
    %v1088 = vadd.f32 0.0, %v1087
    %v1089 = vpop.f32.mrf.mxu0
    %v1090 = vadd.f32 0.0, %v1089
    %1091 = vmatmul.bf16.gmra.mxu0 %v871
    %v1092 = vpop.f32.mrf.mxu0
    %v1093 = vadd.f32 0.0, %v1092
    %v1094 = vpop.f32.mrf.mxu0
    %v1095 = vadd.f32 0.0, %v1094
    %1096 = vmatmul.bf16.gmra.mxu0 %v872
    %v1097 = vpop.f32.mrf.mxu0
    %v1098 = vadd.f32 0.0, %v1097
    %v1099 = vpop.f32.mrf.mxu0
    %v1100 = vadd.f32 0.0, %v1099
    %1101 = vmatmul.bf16.gmra.mxu0 %v873
    %v1102 = vpop.f32.mrf.mxu0
    %v1103 = vadd.f32 0.0, %v1102
    %v1104 = vpop.f32.mrf.mxu0
    %v1105 = vadd.f32 0.0, %v1104
    %1106 = vmatmul.bf16.gmra.mxu0 %v874
    %v1107 = vpop.f32.mrf.mxu0
    %v1108 = vadd.f32 0.0, %v1107
    %v1109 = vpop.f32.mrf.mxu0
    %v1110 = vadd.f32 0.0, %v1109
    %1111 = vmatmul.bf16.gmra.mxu0 %v875
    %v1112 = vpop.f32.mrf.mxu0
    %v1113 = vadd.f32 0.0, %v1112
    %v1114 = vpop.f32.mrf.mxu0
    %v1115 = vadd.f32 0.0, %v1114
    %1116 = vmatmul.bf16.gmra.mxu0 %v876
    %v1117 = vpop.f32.mrf.mxu0
    %v1118 = vadd.f32 0.0, %v1117
    %v1119 = vpop.f32.mrf.mxu0
    %v1120 = vadd.f32 0.0, %v1119
    %1121 = vmatmul.bf16.gmra.mxu0 %v877
    %v1122 = vpop.f32.mrf.mxu0
    %v1123 = vadd.f32 0.0, %v1122
    %v1124 = vpop.f32.mrf.mxu0
    %v1125 = vadd.f32 0.0, %v1124
    %1126 = vmatmul.bf16.gmra.mxu0 %v878
    %v1127 = vpop.f32.mrf.mxu0
    %v1128 = vadd.f32 0.0, %v1127
    %v1129 = vpop.f32.mrf.mxu0
    %v1130 = vadd.f32 0.0, %v1129
    %1131 = vmatmul.bf16.gmra.mxu0 %v879
    %v1132 = vpop.f32.mrf.mxu0
    %v1133 = vadd.f32 0.0, %v1132
    %v1134 = vpop.f32.mrf.mxu0
    %v1135 = vadd.f32 0.0, %v1134
    %1136 = vmatmul.bf16.gmra.mxu0 %v880
    %v1137 = vpop.f32.mrf.mxu0
    %v1138 = vadd.f32 0.0, %v1137
    %v1139 = vpop.f32.mrf.mxu0
    %v1140 = vadd.f32 0.0, %v1139
    %1141 = vmatmul.bf16.gmra.mxu0 %v881
    %v1142 = vpop.f32.mrf.mxu0
    %v1143 = vadd.f32 0.0, %v1142
    %v1144 = vpop.f32.mrf.mxu0
    %v1145 = vadd.f32 0.0, %v1144
    %1146 = vmatmul.bf16.gmra.mxu0 %v882
    %v1147 = vpop.f32.mrf.mxu0
    %v1148 = vadd.f32 0.0, %v1147
    %v1149 = vpop.f32.mrf.mxu0
    %v1150 = vadd.f32 0.0, %v1149
    %1151 = vmatmul.bf16.gmra.mxu0 %v883
    %v1152 = vpop.f32.mrf.mxu0
    %v1153 = vadd.f32 0.0, %v1152
    %v1154 = vpop.f32.mrf.mxu0
    %v1155 = vadd.f32 0.0, %v1154
    %1156 = vmatmul.bf16.gmra.mxu0 %v884
    %v1157 = vpop.f32.mrf.mxu0
    %v1158 = vadd.f32 0.0, %v1157
    %v1159 = vpop.f32.mrf.mxu0
    %v1160 = vadd.f32 0.0, %v1159
    %1161 = vmatmul.bf16.gmra.mxu0 %v885
    %v1162 = vpop.f32.mrf.mxu0
    %v1163 = vadd.f32 0.0, %v1162
    %v1164 = vpop.f32.mrf.mxu0
    %v1165 = vadd.f32 0.0, %v1164
    %1166 = vmatmul.bf16.gmra.mxu0 %v886
    %v1167 = vpop.f32.mrf.mxu0
    %v1168 = vadd.f32 0.0, %v1167
    %v1169 = vpop.f32.mrf.mxu0
    %v1170 = vadd.f32 0.0, %v1169
    %1171 = vmatmul.bf16.gmra.mxu0 %v887
    %v1172 = vpop.f32.mrf.mxu0
    %v1173 = vadd.f32 0.0, %v1172
    %v1174 = vpop.f32.mrf.mxu0
    %v1175 = vadd.f32 0.0, %v1174
    %1176 = vmatmul.bf16.gmra.mxu0 %v888
    %v1177 = vpop.f32.mrf.mxu0
    %v1178 = vadd.f32 0.0, %v1177
    %v1179 = vpop.f32.mrf.mxu0
    %v1180 = vadd.f32 0.0, %v1179
    %1181 = vmatmul.bf16.gmra.mxu0 %v889
    %v1182 = vpop.f32.mrf.mxu0
    %v1183 = vadd.f32 0.0, %v1182
    %v1184 = vpop.f32.mrf.mxu0
    %v1185 = vadd.f32 0.0, %v1184
    %1186 = vmatmul.bf16.gmra.mxu0 %v890
    %v1187 = vpop.f32.mrf.mxu0
    %v1188 = vadd.f32 0.0, %v1187
    %v1189 = vpop.f32.mrf.mxu0
    %v1190 = vadd.f32 0.0, %v1189
    %1191 = vmatmul.bf16.gmra.mxu0 %v891
    %v1192 = vpop.f32.mrf.mxu0
    %v1193 = vadd.f32 0.0, %v1192
    %v1194 = vpop.f32.mrf.mxu0
    %v1195 = vadd.f32 0.0, %v1194
    %1196 = vmatmul.bf16.gmra.mxu0 %v892
    %v1197 = vpop.f32.mrf.mxu0
    %v1198 = vadd.f32 0.0, %v1197
    %v1199 = vpop.f32.mrf.mxu0
    %v1200 = vadd.f32 0.0, %v1199
    %1201 = vmatmul.bf16.gmra.mxu0 %v893
    %v1202 = vpop.f32.mrf.mxu0
    %v1203 = vadd.f32 0.0, %v1202
    %v1204 = vpop.f32.mrf.mxu0
    %v1205 = vadd.f32 0.0, %v1204
    %1206 = vmatmul.bf16.gmra.mxu0 %v894
    %v1207 = vpop.f32.mrf.mxu0
    %v1208 = vadd.f32 0.0, %v1207
    %v1209 = vpop.f32.mrf.mxu0
    %v1210 = vadd.f32 0.0, %v1209
    %1211 = vmatmul.bf16.gmra.mxu0 %v895
    %v1212 = vpop.f32.mrf.mxu0
    %v1213 = vadd.f32 0.0, %v1212
    %v1214 = vpop.f32.mrf.mxu0
    %v1215 = vadd.f32 0.0, %v1214
    %1216 = vmatmul.bf16.gmra.mxu0 %v896
    %v1217 = vpop.f32.mrf.mxu0
    %v1218 = vadd.f32 0.0, %v1217
    %v1219 = vpop.f32.mrf.mxu0
    %v1220 = vadd.f32 0.0, %v1219
    %1221 = vmatmul.bf16.gmra.mxu0 %v897
    %v1222 = vpop.f32.mrf.mxu0
    %v1223 = vadd.f32 0.0, %v1222
    %v1224 = vpop.f32.mrf.mxu0
    %v1225 = vadd.f32 0.0, %v1224
    %1226 = vmatmul.bf16.gmra.mxu0 %v898
    %v1227 = vpop.f32.mrf.mxu0
    %v1228 = vadd.f32 0.0, %v1227
    %v1229 = vpop.f32.mrf.mxu0
    %v1230 = vadd.f32 0.0, %v1229
    %1231 = vmatmul.bf16.gmra.mxu0 %v899
    %v1232 = vpop.f32.mrf.mxu0
    %v1233 = vadd.f32 0.0, %v1232
    %v1234 = vpop.f32.mrf.mxu0
    %v1235 = vadd.f32 0.0, %v1234
    %1236 = vmatmul.bf16.gmra.mxu0 %v900
    %v1237 = vpop.f32.mrf.mxu0
    %v1238 = vadd.f32 0.0, %v1237
    %v1239 = vpop.f32.mrf.mxu0
    %v1240 = vadd.f32 0.0, %v1239
    %1241 = vmatmul.bf16.gmra.mxu0 %v901
    %v1242 = vpop.f32.mrf.mxu0
    %v1243 = vadd.f32 0.0, %v1242
    %v1244 = vpop.f32.mrf.mxu0
    %v1245 = vadd.f32 0.0, %v1244
    %1246 = vmatmul.bf16.gmra.mxu0 %v902
    %v1247 = vpop.f32.mrf.mxu0
    %v1248 = vadd.f32 0.0, %v1247
    %v1249 = vpop.f32.mrf.mxu0
    %v1250 = vadd.f32 0.0, %v1249
    %1251 = vmatmul.bf16.gmra.mxu0 %v903
    %v1252 = vpop.f32.mrf.mxu0
    %v1253 = vadd.f32 0.0, %v1252
    %v1254 = vpop.f32.mrf.mxu0
    %v1255 = vadd.f32 0.0, %v1254
    %1256 = vmatmul.bf16.gmra.mxu0 %v904
    %v1257 = vpop.f32.mrf.mxu0
    %v1258 = vadd.f32 0.0, %v1257
    %v1259 = vpop.f32.mrf.mxu0
    %v1260 = vadd.f32 0.0, %v1259
    %1261 = vmatmul.bf16.gmra.mxu0 %v905
    %v1262 = vpop.f32.mrf.mxu0
    %v1263 = vadd.f32 0.0, %v1262
    %v1264 = vpop.f32.mrf.mxu0
    %v1265 = vadd.f32 0.0, %v1264
    %1266 = vmatmul.bf16.gmra.mxu0 %v906
    %v1267 = vpop.f32.mrf.mxu0
    %v1268 = vadd.f32 0.0, %v1267
    %v1269 = vpop.f32.mrf.mxu0
    %v1270 = vadd.f32 0.0, %v1269
    %1271 = vmatmul.bf16.gmra.mxu0 %v907
    %v1272 = vpop.f32.mrf.mxu0
    %v1273 = vadd.f32 0.0, %v1272
    %v1274 = vpop.f32.mrf.mxu0
    %v1275 = vadd.f32 0.0, %v1274
    %1276 = vmatmul.bf16.gmra.mxu0 %v908
    %v1277 = vpop.f32.mrf.mxu0
    %v1278 = vadd.f32 0.0, %v1277
    %v1279 = vpop.f32.mrf.mxu0
    %v1280 = vadd.f32 0.0, %v1279
    %1281 = vmatmul.bf16.gmra.mxu0 %v909
    %v1282 = vpop.f32.mrf.mxu0
    %v1283 = vadd.f32 0.0, %v1282
    %v1284 = vpop.f32.mrf.mxu0
    %v1285 = vadd.f32 0.0, %v1284
    %1286 = vmatmul.bf16.gmra.mxu0 %v910
    %v1287 = vpop.f32.mrf.mxu0
    %v1288 = vadd.f32 0.0, %v1287
    %v1289 = vpop.f32.mrf.mxu0
    %v1290 = vadd.f32 0.0, %v1289
    %1291 = vmatmul.bf16.gmra.mxu0 %v911
    %v1292 = vpop.f32.mrf.mxu0
    %v1293 = vadd.f32 0.0, %v1292
    %v1294 = vpop.f32.mrf.mxu0
    %v1295 = vadd.f32 0.0, %v1294
    %1296 = vmatmul.bf16.gmra.mxu0 %v912
    %v1297 = vpop.f32.mrf.mxu0
    %v1298 = vadd.f32 0.0, %v1297
    %v1299 = vpop.f32.mrf.mxu0
    %v1300 = vadd.f32 0.0, %v1299
    %1301 = vmatmul.bf16.gmra.mxu0 %v913
    %v1302 = vpop.f32.mrf.mxu0
    %v1303 = vadd.f32 0.0, %v1302
    %v1304 = vpop.f32.mrf.mxu0
    %v1305 = vadd.f32 0.0, %v1304
    %1306 = vmatmul.bf16.gmra.mxu0 %v914
    %v1307 = vpop.f32.mrf.mxu0
    %v1308 = vadd.f32 0.0, %v1307
    %v1309 = vpop.f32.mrf.mxu0
    %v1310 = vadd.f32 0.0, %v1309
    %1311 = vmatmul.bf16.gmra.mxu0 %v915
    %v1312 = vpop.f32.mrf.mxu0
    %v1313 = vadd.f32 0.0, %v1312
    %v1314 = vpop.f32.mrf.mxu0
    %v1315 = vadd.f32 0.0, %v1314
    %1316 = vmatmul.bf16.gmra.mxu0 %v916
    %v1317 = vpop.f32.mrf.mxu0
    %v1318 = vadd.f32 0.0, %v1317
    %v1319 = vpop.f32.mrf.mxu0
    %v1320 = vadd.f32 0.0, %v1319
    %1321 = vmatmul.bf16.gmra.mxu0 %v917
    %v1322 = vpop.f32.mrf.mxu0
    %v1323 = vadd.f32 0.0, %v1322
    %v1324 = vpop.f32.mrf.mxu0
    %v1325 = vadd.f32 0.0, %v1324
    %1326 = vmatmul.bf16.gmra.mxu0 %v918
    %v1327 = vpop.f32.mrf.mxu0
    %v1328 = vadd.f32 0.0, %v1327
    %v1329 = vpop.f32.mrf.mxu0
    %v1330 = vadd.f32 0.0, %v1329
    %1331 = vmatmul.bf16.gmra.mxu0 %v919
    %v1332 = vpop.f32.mrf.mxu0
    %v1333 = vadd.f32 0.0, %v1332
    %v1334 = vpop.f32.mrf.mxu0
    %v1335 = vadd.f32 0.0, %v1334
    %1336 = vmatmul.bf16.gmra.mxu0 %v920
    %v1337 = vpop.f32.mrf.mxu0
    %v1338 = vadd.f32 0.0, %v1337
    %v1339 = vpop.f32.mrf.mxu0
    %v1340 = vadd.f32 0.0, %v1339
    %1341 = vmatmul.bf16.gmra.mxu0 %v921
    %v1342 = vpop.f32.mrf.mxu0
    %v1343 = vadd.f32 0.0, %v1342
    %v1344 = vpop.f32.mrf.mxu0
    %v1345 = vadd.f32 0.0, %v1344
    %1346 = vmatmul.bf16.gmra.mxu0 %v922
    %v1347 = vpop.f32.mrf.mxu0
    %v1348 = vadd.f32 0.0, %v1347
    %v1349 = vpop.f32.mrf.mxu0
    %v1350 = vadd.f32 0.0, %v1349
    %1351 = vmatmul.bf16.gmra.mxu0 %v923
    %v1352 = vpop.f32.mrf.mxu0
    %v1353 = vadd.f32 0.0, %v1352
    %v1354 = vpop.f32.mrf.mxu0
    %v1355 = vadd.f32 0.0, %v1354
    %1356 = vmatmul.bf16.gmra.mxu0 %v924
    %v1357 = vpop.f32.mrf.mxu0
    %v1358 = vadd.f32 0.0, %v1357
    %v1359 = vpop.f32.mrf.mxu0
    %v1360 = vadd.f32 0.0, %v1359
    %1361 = vmatmul.bf16.gmra.mxu0 %v925
    %v1362 = vpop.f32.mrf.mxu0
    %v1363 = vadd.f32 0.0, %v1362
    %v1364 = vpop.f32.mrf.mxu0
    %v1365 = vadd.f32 0.0, %v1364
    %1366 = vmatmul.bf16.gmra.mxu0 %v926
    %v1367 = vpop.f32.mrf.mxu0
    %v1368 = vadd.f32 0.0, %v1367
    %v1369 = vpop.f32.mrf.mxu0
    %v1370 = vadd.f32 0.0, %v1369
    %1371 = vmatmul.bf16.gmra.mxu0 %v927
    %v1372 = vpop.f32.mrf.mxu0
    %v1373 = vadd.f32 0.0, %v1372
    %v1374 = vpop.f32.mrf.mxu0
    %v1375 = vadd.f32 0.0, %v1374
    %1376 = vmatmul.bf16.gmra.mxu0 %v928
    %v1377 = vpop.f32.mrf.mxu0
    %v1378 = vadd.f32 0.0, %v1377
    %v1379 = vpop.f32.mrf.mxu0
    %v1380 = vadd.f32 0.0, %v1379
    %1381 = vmatmul.bf16.gmra.mxu0 %v929
    %v1382 = vpop.f32.mrf.mxu0
    %v1383 = vadd.f32 0.0, %v1382
    %v1384 = vpop.f32.mrf.mxu0
    %v1385 = vadd.f32 0.0, %v1384
    %1386 = vmatmul.bf16.gmra.mxu0 %v930
    %v1387 = vpop.f32.mrf.mxu0
    %v1388 = vadd.f32 0.0, %v1387
    %v1389 = vpop.f32.mrf.mxu0
    %v1390 = vadd.f32 0.0, %v1389
    %1391 = vmatmul.bf16.gmra.mxu0 %v931
    %v1392 = vpop.f32.mrf.mxu0
    %v1393 = vadd.f32 0.0, %v1392
    %v1394 = vpop.f32.mrf.mxu0
    %v1395 = vadd.f32 0.0, %v1394
    %1396 = vmatmul.bf16.gmra.mxu0 %v932
    %v1397 = vpop.f32.mrf.mxu0
    %v1398 = vadd.f32 0.0, %v1397
    %v1399 = vpop.f32.mrf.mxu0
    %v1400 = vadd.f32 0.0, %v1399
    %1401 = vmatmul.bf16.gmra.mxu0 %v933
    %v1402 = vpop.f32.mrf.mxu0
    %v1403 = vadd.f32 0.0, %v1402
    %v1404 = vpop.f32.mrf.mxu0
    %v1405 = vadd.f32 0.0, %v1404
    %1406 = vmatmul.bf16.gmra.mxu0 %v934
    %v1407 = vpop.f32.mrf.mxu0
    %v1408 = vadd.f32 0.0, %v1407
    %v1409 = vpop.f32.mrf.mxu0
    %v1410 = vadd.f32 0.0, %v1409
    %1411 = vmatmul.bf16.gmra.mxu0 %v935
    %v1412 = vpop.f32.mrf.mxu0
    %v1413 = vadd.f32 0.0, %v1412
    %v1414 = vpop.f32.mrf.mxu0
    %v1415 = vadd.f32 0.0, %v1414
    %1416 = vmatmul.bf16.gmra.mxu0 %v936
    %v1417 = vpop.f32.mrf.mxu0
    %v1418 = vadd.f32 0.0, %v1417
    %v1419 = vpop.f32.mrf.mxu0
    %v1420 = vadd.f32 0.0, %v1419
    %1421 = vmatmul.bf16.gmra.mxu0 %v937
    %v1422 = vpop.f32.mrf.mxu0
    %v1423 = vadd.f32 0.0, %v1422
    %v1424 = vpop.f32.mrf.mxu0
    %v1425 = vadd.f32 0.0, %v1424
    %1426 = vmatmul.bf16.gmra.mxu0 %v938
    %v1427 = vpop.f32.mrf.mxu0
    %v1428 = vadd.f32 0.0, %v1427
    %v1429 = vpop.f32.mrf.mxu0
    %v1430 = vadd.f32 0.0, %v1429
    %1431 = vmatmul.bf16.gmra.mxu0 %v939
    %v1432 = vpop.f32.mrf.mxu0
    %v1433 = vadd.f32 0.0, %v1432
    %v1434 = vpop.f32.mrf.mxu0
    %v1435 = vadd.f32 0.0, %v1434
    %1436 = vmatmul.bf16.gmra.mxu0 %v940
    %v1437 = vpop.f32.mrf.mxu0
    %v1438 = vadd.f32 0.0, %v1437
    %v1439 = vpop.f32.mrf.mxu0
    %v1440 = vadd.f32 0.0, %v1439
    %1441 = vmatmul.bf16.gmra.mxu0 %v941
    %v1442 = vpop.f32.mrf.mxu0
    %v1443 = vadd.f32 0.0, %v1442
    %v1444 = vpop.f32.mrf.mxu0
    %v1445 = vadd.f32 0.0, %v1444
    %1446 = vmatmul.bf16.gmra.mxu0 %v942
    %v1447 = vpop.f32.mrf.mxu0
    %v1448 = vadd.f32 0.0, %v1447
    %v1449 = vpop.f32.mrf.mxu0
    %v1450 = vadd.f32 0.0, %v1449
    %1451 = vmatmul.bf16.gmra.mxu0 %v943
    %v1452 = vpop.f32.mrf.mxu0
    %v1453 = vadd.f32 0.0, %v1452
    %v1454 = vpop.f32.mrf.mxu0
    %v1455 = vadd.f32 0.0, %v1454
    %1456 = vmatmul.bf16.gmra.mxu0 %v944
    %v1457 = vpop.f32.mrf.mxu0
    %v1458 = vadd.f32 0.0, %v1457
    %v1459 = vpop.f32.mrf.mxu0
    %v1460 = vadd.f32 0.0, %v1459
    %1461 = vmatmul.bf16.gmra.mxu0 %v945
    %v1462 = vpop.f32.mrf.mxu0
    %v1463 = vadd.f32 0.0, %v1462
    %v1464 = vpop.f32.mrf.mxu0
    %v1465 = vadd.f32 0.0, %v1464
    %1466 = vmatmul.bf16.gmra.mxu0 %v946
    %v1467 = vpop.f32.mrf.mxu0
    %v1468 = vadd.f32 0.0, %v1467
    %v1469 = vpop.f32.mrf.mxu0
    %v1470 = vadd.f32 0.0, %v1469
    %1471 = vmatmul.bf16.gmra.mxu0 %v947
    %v1472 = vpop.f32.mrf.mxu0
    %v1473 = vadd.f32 0.0, %v1472
    %v1474 = vpop.f32.mrf.mxu0
    %v1475 = vadd.f32 0.0, %v1474
    %1476 = vmatmul.bf16.gmra.mxu0 %v948
    %v1477 = vpop.f32.mrf.mxu0
    %v1478 = vadd.f32 0.0, %v1477
    %v1479 = vpop.f32.mrf.mxu0
    %v1480 = vadd.f32 0.0, %v1479
    %1481 = vmatmul.bf16.gmra.mxu0 %v949
    %v1482 = vpop.f32.mrf.mxu0
    %v1483 = vadd.f32 0.0, %v1482
    %v1484 = vpop.f32.mrf.mxu0
    %v1485 = vadd.f32 0.0, %v1484
    %1486 = vdwg.mxu0
    %v1487 = vadd.f32 %v214, %v1088
    %v1488 = vadd.f32 %v215, %v1090
    %v1489 = vadd.f32 %v216, %v1093
    %v1490 = vadd.f32 %v217, %v1095
    %v1491 = vadd.f32 %v218, %v1098
    %v1492 = vadd.f32 %v219, %v1100
    %v1493 = vadd.f32 %v220, %v1103
    %v1494 = vadd.f32 %v221, %v1105
    %v1495 = vadd.f32 %v222, %v1108
    %v1496 = vadd.f32 %v223, %v1110
    %v1497 = vadd.f32 %v224, %v1113
    %v1498 = vadd.f32 %v225, %v1115
    %v1499 = vadd.f32 %v226, %v1118
    %v1500 = vadd.f32 %v227, %v1120
    %v1501 = vadd.f32 %v228, %v1123
    %v1502 = vadd.f32 %v229, %v1125
    %v1503 = vadd.f32 %v230, %v1128
    %v1504 = vadd.f32 %v231, %v1130
    %v1505 = vadd.f32 %v232, %v1133
    %v1506 = vadd.f32 %v233, %v1135
    %v1507 = vadd.f32 %v234, %v1138
    %v1508 = vadd.f32 %v235, %v1140
    %v1509 = vadd.f32 %v236, %v1143
    %v1510 = vadd.f32 %v237, %v1145
    %v1511 = vadd.f32 %v238, %v1148
    %v1512 = vadd.f32 %v239, %v1150
    %v1513 = vadd.f32 %v240, %v1153
    %v1514 = vadd.f32 %v241, %v1155
    %v1515 = vadd.f32 %v242, %v1158
    %v1516 = vadd.f32 %v243, %v1160
    %v1517 = vadd.f32 %v244, %v1163
    %v1518 = vadd.f32 %v245, %v1165
    %v1519 = vadd.f32 %v246, %v1168
    %v1520 = vadd.f32 %v247, %v1170
    %v1521 = vadd.f32 %v248, %v1173
    %v1522 = vadd.f32 %v249, %v1175
    %v1523 = vadd.f32 %v250, %v1178
    %v1524 = vadd.f32 %v251, %v1180
    %v1525 = vadd.f32 %v252, %v1183
    %v1526 = vadd.f32 %v253, %v1185
    %v1527 = vadd.f32 %v254, %v1188
    %v1528 = vadd.f32 %v255, %v1190
    %v1529 = vadd.f32 %v256, %v1193
    %v1530 = vadd.f32 %v257, %v1195
    %v1531 = vadd.f32 %v258, %v1198
    %v1532 = vadd.f32 %v259, %v1200
    %v1533 = vadd.f32 %v260, %v1203
    %v1534 = vadd.f32 %v261, %v1205
    %v1535 = vadd.f32 %v262, %v1208
    %v1536 = vadd.f32 %v263, %v1210
    %v1537 = vadd.f32 %v264, %v1213
    %v1538 = vadd.f32 %v265, %v1215
    %v1539 = vadd.f32 %v266, %v1218
    %v1540 = vadd.f32 %v267, %v1220
    %v1541 = vadd.f32 %v268, %v1223
    %v1542 = vadd.f32 %v269, %v1225
    %v1543 = vadd.f32 %v270, %v1228
    %v1544 = vadd.f32 %v271, %v1230
    %v1545 = vadd.f32 %v272, %v1233
    %v1546 = vadd.f32 %v273, %v1235
    %v1547 = vadd.f32 %v274, %v1238
    %v1548 = vadd.f32 %v275, %v1240
    %v1549 = vadd.f32 %v276, %v1243
    %v1550 = vadd.f32 %v277, %v1245
    %v1551 = vadd.f32 %v278, %v1248
    %v1552 = vadd.f32 %v279, %v1250
    %v1553 = vadd.f32 %v280, %v1253
    %v1554 = vadd.f32 %v281, %v1255
    %v1555 = vadd.f32 %v282, %v1258
    %v1556 = vadd.f32 %v283, %v1260
    %v1557 = vadd.f32 %v284, %v1263
    %v1558 = vadd.f32 %v285, %v1265
    %v1559 = vadd.f32 %v286, %v1268
    %v1560 = vadd.f32 %v287, %v1270
    %v1561 = vadd.f32 %v288, %v1273
    %v1562 = vadd.f32 %v289, %v1275
    %v1563 = vadd.f32 %v290, %v1278
    %v1564 = vadd.f32 %v291, %v1280
    %v1565 = vadd.f32 %v292, %v1283
    %v1566 = vadd.f32 %v293, %v1285
    %v1567 = vadd.f32 %v294, %v1288
    %v1568 = vadd.f32 %v295, %v1290
    %v1569 = vadd.f32 %v296, %v1293
    %v1570 = vadd.f32 %v297, %v1295
    %v1571 = vadd.f32 %v298, %v1298
    %v1572 = vadd.f32 %v299, %v1300
    %v1573 = vadd.f32 %v300, %v1303
    %v1574 = vadd.f32 %v301, %v1305
    %v1575 = vadd.f32 %v302, %v1308
    %v1576 = vadd.f32 %v303, %v1310
    %v1577 = vadd.f32 %v304, %v1313
    %v1578 = vadd.f32 %v305, %v1315
    %v1579 = vadd.f32 %v306, %v1318
    %v1580 = vadd.f32 %v307, %v1320
    %v1581 = vadd.f32 %v308, %v1323
    %v1582 = vadd.f32 %v309, %v1325
    %v1583 = vadd.f32 %v310, %v1328
    %v1584 = vadd.f32 %v311, %v1330
    %v1585 = vadd.f32 %v312, %v1333
    %v1586 = vadd.f32 %v313, %v1335
    %v1587 = vadd.f32 %v314, %v1338
    %v1588 = vadd.f32 %v315, %v1340
    %v1589 = vadd.f32 %v316, %v1343
    %v1590 = vadd.f32 %v317, %v1345
    %v1591 = vadd.f32 %v318, %v1348
    %v1592 = vadd.f32 %v319, %v1350
    %v1593 = vadd.f32 %v320, %v1353
    %v1594 = vadd.f32 %v321, %v1355
    %v1595 = vadd.f32 %v322, %v1358
    %v1596 = vadd.f32 %v323, %v1360
    %v1597 = vadd.f32 %v324, %v1363
    %v1598 = vadd.f32 %v325, %v1365
    %v1599 = vadd.f32 %v326, %v1368
    %v1600 = vadd.f32 %v327, %v1370
    %v1601 = vadd.f32 %v328, %v1373
    %v1602 = vadd.f32 %v329, %v1375
    %v1603 = vadd.f32 %v330, %v1378
    %v1604 = vadd.f32 %v331, %v1380
    %v1605 = vadd.f32 %v332, %v1383
    %v1606 = vadd.f32 %v333, %v1385
    %v1607 = vadd.f32 %v334, %v1388
    %v1608 = vadd.f32 %v335, %v1390
    %v1609 = vadd.f32 %v336, %v1393
    %v1610 = vadd.f32 %v337, %v1395
    %v1611 = vadd.f32 %v338, %v1398
    %v1612 = vadd.f32 %v339, %v1400
    %v1613 = vadd.f32 %v340, %v1403
    %v1614 = vadd.f32 %v341, %v1405
    %v1615 = vadd.f32 %v342, %v1408
    %v1616 = vadd.f32 %v343, %v1410
    %v1617 = vadd.f32 %v344, %v1413
    %v1618 = vadd.f32 %v345, %v1415
    %v1619 = vadd.f32 %v346, %v1418
    %v1620 = vadd.f32 %v347, %v1420
    %v1621 = vadd.f32 %v348, %v1423
    %v1622 = vadd.f32 %v349, %v1425
    %v1623 = vadd.f32 %v350, %v1428
    %v1624 = vadd.f32 %v351, %v1430
    %v1625 = vadd.f32 %v352, %v1433
    %v1626 = vadd.f32 %v353, %v1435
    %v1627 = vadd.f32 %v354, %v1438
    %v1628 = vadd.f32 %v355, %v1440
    %v1629 = vadd.f32 %v356, %v1443
    %v1630 = vadd.f32 %v357, %v1445
    %v1631 = vadd.f32 %v358, %v1448
    %v1632 = vadd.f32 %v359, %v1450
    %v1633 = vadd.f32 %v360, %v1453
    %v1634 = vadd.f32 %v361, %v1455
    %v1635 = vadd.f32 %v362, %v1458
    %v1636 = vadd.f32 %v363, %v1460
    %v1637 = vadd.f32 %v364, %v1463
    %v1638 = vadd.f32 %v365, %v1465
    %v1639 = vadd.f32 %v366, %v1468
    %v1640 = vadd.f32 %v367, %v1470
    %v1641 = vadd.f32 %v368, %v1473
    %v1642 = vadd.f32 %v369, %v1475
    %v1643 = vadd.f32 %v370, %v1478
    %v1644 = vadd.f32 %v371, %v1480
    %v1645 = vadd.f32 %v372, %v1483
    %v1646 = vadd.f32 %v373, %v1485
    %1647 = vst [vmem:[#allocation2] sm:$0xff] %v1487
    %1648 = vst [vmem:[#allocation2 + $0x8] sm:$0xff] %v1488
    %1649 = vst [vmem:[#allocation2 + $0x10] sm:$0xff] %v1489
    %1650 = vst [vmem:[#allocation2 + $0x18] sm:$0xff] %v1490
    %1651 = vst [vmem:[#allocation2 + $0x20] sm:$0xff] %v1491
    %1652 = vst [vmem:[#allocation2 + $0x28] sm:$0xff] %v1492
    %1653 = vst [vmem:[#allocation2 + $0x30] sm:$0xff] %v1493
    %1654 = vst [vmem:[#allocation2 + $0x38] sm:$0xff] %v1494
    %1655 = vst [vmem:[#allocation2 + $0x40] sm:$0xff] %v1495
    %1656 = vst [vmem:[#allocation2 + $0x48] sm:$0xff] %v1496
    %1657 = vst [vmem:[#allocation2 + $0x50] sm:$0xff] %v1497
    %1658 = vst [vmem:[#allocation2 + $0x58] sm:$0xff] %v1498
    %1659 = vst [vmem:[#allocation2 + $0x60] sm:$0xff] %v1499
    %1660 = vst [vmem:[#allocation2 + $0x68] sm:$0xff] %v1500
    %1661 = vst [vmem:[#allocation2 + $0x70] sm:$0xff] %v1501
    %1662 = vst [vmem:[#allocation2 + $0x78] sm:$0xff] %v1502
    %1663 = vst [vmem:[#allocation2 + $0x80] sm:$0xff] %v1503
    %1664 = vst [vmem:[#allocation2 + $0x88] sm:$0xff] %v1504
    %1665 = vst [vmem:[#allocation2 + $0x90] sm:$0xff] %v1505
    %1666 = vst [vmem:[#allocation2 + $0x98] sm:$0xff] %v1506
    %1667 = vst [vmem:[#allocation2 + $0xa0] sm:$0xff] %v1507
    %1668 = vst [vmem:[#allocation2 + $0xa8] sm:$0xff] %v1508
    %1669 = vst [vmem:[#allocation2 + $0xb0] sm:$0xff] %v1509
    %1670 = vst [vmem:[#allocation2 + $0xb8] sm:$0xff] %v1510
    %1671 = vst [vmem:[#allocation2 + $0xc0] sm:$0xff] %v1511
    %1672 = vst [vmem:[#allocation2 + $0xc8] sm:$0xff] %v1512
    %1673 = vst [vmem:[#allocation2 + $0xd0] sm:$0xff] %v1513
    %1674 = vst [vmem:[#allocation2 + $0xd8] sm:$0xff] %v1514
    %1675 = vst [vmem:[#allocation2 + $0xe0] sm:$0xff] %v1515
    %1676 = vst [vmem:[#allocation2 + $0xe8] sm:$0xff] %v1516
    %1677 = vst [vmem:[#allocation2 + $0xf0] sm:$0xff] %v1517
    %1678 = vst [vmem:[#allocation2 + $0xf8] sm:$0xff] %v1518
    %1679 = vst [vmem:[#allocation2 + $0x100] sm:$0xff] %v1519
    %1680 = vst [vmem:[#allocation2 + $0x108] sm:$0xff] %v1520
    %1681 = vst [vmem:[#allocation2 + $0x110] sm:$0xff] %v1521
    %1682 = vst [vmem:[#allocation2 + $0x118] sm:$0xff] %v1522
    %1683 = vst [vmem:[#allocation2 + $0x120] sm:$0xff] %v1523
    %1684 = vst [vmem:[#allocation2 + $0x128] sm:$0xff] %v1524
    %1685 = vst [vmem:[#allocation2 + $0x130] sm:$0xff] %v1525
    %1686 = vst [vmem:[#allocation2 + $0x138] sm:$0xff] %v1526
    %1687 = vst [vmem:[#allocation2 + $0x140] sm:$0xff] %v1527
    %1688 = vst [vmem:[#allocation2 + $0x148] sm:$0xff] %v1528
    %1689 = vst [vmem:[#allocation2 + $0x150] sm:$0xff] %v1529
    %1690 = vst [vmem:[#allocation2 + $0x158] sm:$0xff] %v1530
    %1691 = vst [vmem:[#allocation2 + $0x160] sm:$0xff] %v1531
    %1692 = vst [vmem:[#allocation2 + $0x168] sm:$0xff] %v1532
    %1693 = vst [vmem:[#allocation2 + $0x170] sm:$0xff] %v1533
    %1694 = vst [vmem:[#allocation2 + $0x178] sm:$0xff] %v1534
    %1695 = vst [vmem:[#allocation2 + $0x180] sm:$0xff] %v1535
    %1696 = vst [vmem:[#allocation2 + $0x188] sm:$0xff] %v1536
    %1697 = vst [vmem:[#allocation2 + $0x190] sm:$0xff] %v1537
    %1698 = vst [vmem:[#allocation2 + $0x198] sm:$0xff] %v1538
    %1699 = vst [vmem:[#allocation2 + $0x1a0] sm:$0xff] %v1539
    %1700 = vst [vmem:[#allocation2 + $0x1a8] sm:$0xff] %v1540
    %1701 = vst [vmem:[#allocation2 + $0x1b0] sm:$0xff] %v1541
    %1702 = vst [vmem:[#allocation2 + $0x1b8] sm:$0xff] %v1542
    %1703 = vst [vmem:[#allocation2 + $0x1c0] sm:$0xff] %v1543
    %1704 = vst [vmem:[#allocation2 + $0x1c8] sm:$0xff] %v1544
    %1705 = vst [vmem:[#allocation2 + $0x1d0] sm:$0xff] %v1545
    %1706 = vst [vmem:[#allocation2 + $0x1d8] sm:$0xff] %v1546
    %1707 = vst [vmem:[#allocation2 + $0x1e0] sm:$0xff] %v1547
    %1708 = vst [vmem:[#allocation2 + $0x1e8] sm:$0xff] %v1548
    %1709 = vst [vmem:[#allocation2 + $0x1f0] sm:$0xff] %v1549
    %1710 = vst [vmem:[#allocation2 + $0x1f8] sm:$0xff] %v1550
    %1711 = vst [vmem:[#allocation2 + $0x200] sm:$0xff] %v1551
    %1712 = vst [vmem:[#allocation2 + $0x208] sm:$0xff] %v1552
    %1713 = vst [vmem:[#allocation2 + $0x210] sm:$0xff] %v1553
    %1714 = vst [vmem:[#allocation2 + $0x218] sm:$0xff] %v1554
    %1715 = vst [vmem:[#allocation2 + $0x220] sm:$0xff] %v1555
    %1716 = vst [vmem:[#allocation2 + $0x228] sm:$0xff] %v1556
    %1717 = vst [vmem:[#allocation2 + $0x230] sm:$0xff] %v1557
    %1718 = vst [vmem:[#allocation2 + $0x238] sm:$0xff] %v1558
    %1719 = vst [vmem:[#allocation2 + $0x240] sm:$0xff] %v1559
    %1720 = vst [vmem:[#allocation2 + $0x248] sm:$0xff] %v1560
    %1721 = vst [vmem:[#allocation2 + $0x250] sm:$0xff] %v1561
    %1722 = vst [vmem:[#allocation2 + $0x258] sm:$0xff] %v1562
    %1723 = vst [vmem:[#allocation2 + $0x260] sm:$0xff] %v1563
    %1724 = vst [vmem:[#allocation2 + $0x268] sm:$0xff] %v1564
    %1725 = vst [vmem:[#allocation2 + $0x270] sm:$0xff] %v1565
    %1726 = vst [vmem:[#allocation2 + $0x278] sm:$0xff] %v1566
    %1727 = vst [vmem:[#allocation2 + $0x280] sm:$0xff] %v1567
    %1728 = vst [vmem:[#allocation2 + $0x288] sm:$0xff] %v1568
    %1729 = vst [vmem:[#allocation2 + $0x290] sm:$0xff] %v1569
    %1730 = vst [vmem:[#allocation2 + $0x298] sm:$0xff] %v1570
    %1731 = vst [vmem:[#allocation2 + $0x2a0] sm:$0xff] %v1571
    %1732 = vst [vmem:[#allocation2 + $0x2a8] sm:$0xff] %v1572
    %1733 = vst [vmem:[#allocation2 + $0x2b0] sm:$0xff] %v1573
    %1734 = vst [vmem:[#allocation2 + $0x2b8] sm:$0xff] %v1574
    %1735 = vst [vmem:[#allocation2 + $0x2c0] sm:$0xff] %v1575
    %1736 = vst [vmem:[#allocation2 + $0x2c8] sm:$0xff] %v1576
    %1737 = vst [vmem:[#allocation2 + $0x2d0] sm:$0xff] %v1577
    %1738 = vst [vmem:[#allocation2 + $0x2d8] sm:$0xff] %v1578
    %1739 = vst [vmem:[#allocation2 + $0x2e0] sm:$0xff] %v1579
    %1740 = vst [vmem:[#allocation2 + $0x2e8] sm:$0xff] %v1580
    %1741 = vst [vmem:[#allocation2 + $0x2f0] sm:$0xff] %v1581
    %1742 = vst [vmem:[#allocation2 + $0x2f8] sm:$0xff] %v1582
    %1743 = vst [vmem:[#allocation2 + $0x300] sm:$0xff] %v1583
    %1744 = vst [vmem:[#allocation2 + $0x308] sm:$0xff] %v1584
    %1745 = vst [vmem:[#allocation2 + $0x310] sm:$0xff] %v1585
    %1746 = vst [vmem:[#allocation2 + $0x318] sm:$0xff] %v1586
    %1747 = vst [vmem:[#allocation2 + $0x320] sm:$0xff] %v1587
    %1748 = vst [vmem:[#allocation2 + $0x328] sm:$0xff] %v1588
    %1749 = vst [vmem:[#allocation2 + $0x330] sm:$0xff] %v1589
    %1750 = vst [vmem:[#allocation2 + $0x338] sm:$0xff] %v1590
    %1751 = vst [vmem:[#allocation2 + $0x340] sm:$0xff] %v1591
    %1752 = vst [vmem:[#allocation2 + $0x348] sm:$0xff] %v1592
    %1753 = vst [vmem:[#allocation2 + $0x350] sm:$0xff] %v1593
    %1754 = vst [vmem:[#allocation2 + $0x358] sm:$0xff] %v1594
    %1755 = vst [vmem:[#allocation2 + $0x360] sm:$0xff] %v1595
    %1756 = vst [vmem:[#allocation2 + $0x368] sm:$0xff] %v1596
    %1757 = vst [vmem:[#allocation2 + $0x370] sm:$0xff] %v1597
    %1758 = vst [vmem:[#allocation2 + $0x378] sm:$0xff] %v1598
    %1759 = vst [vmem:[#allocation2 + $0x380] sm:$0xff] %v1599
    %1760 = vst [vmem:[#allocation2 + $0x388] sm:$0xff] %v1600
    %1761 = vst [vmem:[#allocation2 + $0x390] sm:$0xff] %v1601
    %1762 = vst [vmem:[#allocation2 + $0x398] sm:$0xff] %v1602
    %1763 = vst [vmem:[#allocation2 + $0x3a0] sm:$0xff] %v1603
    %1764 = vst [vmem:[#allocation2 + $0x3a8] sm:$0xff] %v1604
    %1765 = vst [vmem:[#allocation2 + $0x3b0] sm:$0xff] %v1605
    %1766 = vst [vmem:[#allocation2 + $0x3b8] sm:$0xff] %v1606
    %1767 = vst [vmem:[#allocation2 + $0x3c0] sm:$0xff] %v1607
    %1768 = vst [vmem:[#allocation2 + $0x3c8] sm:$0xff] %v1608
    %1769 = vst [vmem:[#allocation2 + $0x3d0] sm:$0xff] %v1609
    %1770 = vst [vmem:[#allocation2 + $0x3d8] sm:$0xff] %v1610
    %1771 = vst [vmem:[#allocation2 + $0x3e0] sm:$0xff] %v1611
    %1772 = vst [vmem:[#allocation2 + $0x3e8] sm:$0xff] %v1612
    %1773 = vst [vmem:[#allocation2 + $0x3f0] sm:$0xff] %v1613
    %1774 = vst [vmem:[#allocation2 + $0x3f8] sm:$0xff] %v1614
    %1775 = vst [vmem:[#allocation2 + $0x400] sm:$0xff] %v1615
    %1776 = vst [vmem:[#allocation2 + $0x408] sm:$0xff] %v1616
    %1777 = vst [vmem:[#allocation2 + $0x410] sm:$0xff] %v1617
    %1778 = vst [vmem:[#allocation2 + $0x418] sm:$0xff] %v1618
    %1779 = vst [vmem:[#allocation2 + $0x420] sm:$0xff] %v1619
    %1780 = vst [vmem:[#allocation2 + $0x428] sm:$0xff] %v1620
    %1781 = vst [vmem:[#allocation2 + $0x430] sm:$0xff] %v1621
    %1782 = vst [vmem:[#allocation2 + $0x438] sm:$0xff] %v1622
    %1783 = vst [vmem:[#allocation2 + $0x440] sm:$0xff] %v1623
    %1784 = vst [vmem:[#allocation2 + $0x448] sm:$0xff] %v1624
    %1785 = vst [vmem:[#allocation2 + $0x450] sm:$0xff] %v1625
    %1786 = vst [vmem:[#allocation2 + $0x458] sm:$0xff] %v1626
    %1787 = vst [vmem:[#allocation2 + $0x460] sm:$0xff] %v1627
    %1788 = vst [vmem:[#allocation2 + $0x468] sm:$0xff] %v1628
    %1789 = vst [vmem:[#allocation2 + $0x470] sm:$0xff] %v1629
    %1790 = vst [vmem:[#allocation2 + $0x478] sm:$0xff] %v1630
    %1791 = vst [vmem:[#allocation2 + $0x480] sm:$0xff] %v1631
    %1792 = vst [vmem:[#allocation2 + $0x488] sm:$0xff] %v1632
    %1793 = vst [vmem:[#allocation2 + $0x490] sm:$0xff] %v1633
    %1794 = vst [vmem:[#allocation2 + $0x498] sm:$0xff] %v1634
    %1795 = vst [vmem:[#allocation2 + $0x4a0] sm:$0xff] %v1635
    %1796 = vst [vmem:[#allocation2 + $0x4a8] sm:$0xff] %v1636
    %1797 = vst [vmem:[#allocation2 + $0x4b0] sm:$0xff] %v1637
    %1798 = vst [vmem:[#allocation2 + $0x4b8] sm:$0xff] %v1638
    %1799 = vst [vmem:[#allocation2 + $0x4c0] sm:$0xff] %v1639
    %1800 = vst [vmem:[#allocation2 + $0x4c8] sm:$0xff] %v1640
    %1801 = vst [vmem:[#allocation2 + $0x4d0] sm:$0xff] %v1641
    %1802 = vst [vmem:[#allocation2 + $0x4d8] sm:$0xff] %v1642
    %1803 = vst [vmem:[#allocation2 + $0x4e0] sm:$0xff] %v1643
    %1804 = vst [vmem:[#allocation2 + $0x4e8] sm:$0xff] %v1644
    %1805 = vst [vmem:[#allocation2 + $0x4f0] sm:$0xff] %v1645
    %1806 = vst [vmem:[#allocation2 + $0x4f8] sm:$0xff] %v1646
    // Predicated region
    $region30: #{tpu_custom_call.1} parent=1 // pred_check
      %p1807 = pneg %p50
    $region31: #{tpu_custom_call.1} parent=1 // pred_check_branch
      %1809 = sbr.rel (%p1807) target = $region33
    $region32: #{tpu_custom_call.1} parent=1 // pred_region
      %v1810 = vld [vmem:[#allocation2] sm:$0xff]
      %v1811 = vld [vmem:[#allocation2 + $0x8] sm:$0xff]
      %v1812 = vld [vmem:[#allocation2 + $0x10] sm:$0xff]
      %v1813 = vld [vmem:[#allocation2 + $0x18] sm:$0xff]
      %v1814 = vld [vmem:[#allocation2 + $0x20] sm:$0xff]
      %v1815 = vld [vmem:[#allocation2 + $0x28] sm:$0xff]
      %v1816 = vld [vmem:[#allocation2 + $0x30] sm:$0xff]
      %v1817 = vld [vmem:[#allocation2 + $0x38] sm:$0xff]
      %v1818 = vld [vmem:[#allocation2 + $0x40] sm:$0xff]
      %v1819 = vld [vmem:[#allocation2 + $0x48] sm:$0xff]
      %v1820 = vld [vmem:[#allocation2 + $0x50] sm:$0xff]
      %v1821 = vld [vmem:[#allocation2 + $0x58] sm:$0xff]
      %v1822 = vld [vmem:[#allocation2 + $0x60] sm:$0xff]
      %v1823 = vld [vmem:[#allocation2 + $0x68] sm:$0xff]
      %v1824 = vld [vmem:[#allocation2 + $0x70] sm:$0xff]
      %v1825 = vld [vmem:[#allocation2 + $0x78] sm:$0xff]
      %v1826 = vld [vmem:[#allocation2 + $0x80] sm:$0xff]
      %v1827 = vld [vmem:[#allocation2 + $0x88] sm:$0xff]
      %v1828 = vld [vmem:[#allocation2 + $0x90] sm:$0xff]
      %v1829 = vld [vmem:[#allocation2 + $0x98] sm:$0xff]
      %v1830 = vld [vmem:[#allocation2 + $0xa0] sm:$0xff]
      %v1831 = vld [vmem:[#allocation2 + $0xa8] sm:$0xff]
      %v1832 = vld [vmem:[#allocation2 + $0xb0] sm:$0xff]
      %v1833 = vld [vmem:[#allocation2 + $0xb8] sm:$0xff]
      %v1834 = vld [vmem:[#allocation2 + $0xc0] sm:$0xff]
      %v1835 = vld [vmem:[#allocation2 + $0xc8] sm:$0xff]
      %v1836 = vld [vmem:[#allocation2 + $0xd0] sm:$0xff]
      %v1837 = vld [vmem:[#allocation2 + $0xd8] sm:$0xff]
      %v1838 = vld [vmem:[#allocation2 + $0xe0] sm:$0xff]
      %v1839 = vld [vmem:[#allocation2 + $0xe8] sm:$0xff]
      %v1840 = vld [vmem:[#allocation2 + $0xf0] sm:$0xff]
      %v1841 = vld [vmem:[#allocation2 + $0xf8] sm:$0xff]
      %v1842 = vld [vmem:[#allocation2 + $0x100] sm:$0xff]
      %v1843 = vld [vmem:[#allocation2 + $0x108] sm:$0xff]
      %v1844 = vld [vmem:[#allocation2 + $0x110] sm:$0xff]
      %v1845 = vld [vmem:[#allocation2 + $0x118] sm:$0xff]
      %v1846 = vld [vmem:[#allocation2 + $0x120] sm:$0xff]
      %v1847 = vld [vmem:[#allocation2 + $0x128] sm:$0xff]
      %v1848 = vld [vmem:[#allocation2 + $0x130] sm:$0xff]
      %v1849 = vld [vmem:[#allocation2 + $0x138] sm:$0xff]
      %v1850 = vld [vmem:[#allocation2 + $0x140] sm:$0xff]
      %v1851 = vld [vmem:[#allocation2 + $0x148] sm:$0xff]
      %v1852 = vld [vmem:[#allocation2 + $0x150] sm:$0xff]
      %v1853 = vld [vmem:[#allocation2 + $0x158] sm:$0xff]
      %v1854 = vld [vmem:[#allocation2 + $0x160] sm:$0xff]
      %v1855 = vld [vmem:[#allocation2 + $0x168] sm:$0xff]
      %v1856 = vld [vmem:[#allocation2 + $0x170] sm:$0xff]
      %v1857 = vld [vmem:[#allocation2 + $0x178] sm:$0xff]
      %v1858 = vld [vmem:[#allocation2 + $0x180] sm:$0xff]
      %v1859 = vld [vmem:[#allocation2 + $0x188] sm:$0xff]
      %v1860 = vld [vmem:[#allocation2 + $0x190] sm:$0xff]
      %v1861 = vld [vmem:[#allocation2 + $0x198] sm:$0xff]
      %v1862 = vld [vmem:[#allocation2 + $0x1a0] sm:$0xff]
      %v1863 = vld [vmem:[#allocation2 + $0x1a8] sm:$0xff]
      %v1864 = vld [vmem:[#allocation2 + $0x1b0] sm:$0xff]
      %v1865 = vld [vmem:[#allocation2 + $0x1b8] sm:$0xff]
      %v1866 = vld [vmem:[#allocation2 + $0x1c0] sm:$0xff]
      %v1867 = vld [vmem:[#allocation2 + $0x1c8] sm:$0xff]
      %v1868 = vld [vmem:[#allocation2 + $0x1d0] sm:$0xff]
      %v1869 = vld [vmem:[#allocation2 + $0x1d8] sm:$0xff]
      %v1870 = vld [vmem:[#allocation2 + $0x1e0] sm:$0xff]
      %v1871 = vld [vmem:[#allocation2 + $0x1e8] sm:$0xff]
      %v1872 = vld [vmem:[#allocation2 + $0x1f0] sm:$0xff]
      %v1873 = vld [vmem:[#allocation2 + $0x1f8] sm:$0xff]
      %v1874 = vld [vmem:[#allocation2 + $0x200] sm:$0xff]
      %v1875 = vld [vmem:[#allocation2 + $0x208] sm:$0xff]
      %v1876 = vld [vmem:[#allocation2 + $0x210] sm:$0xff]
      %v1877 = vld [vmem:[#allocation2 + $0x218] sm:$0xff]
      %v1878 = vld [vmem:[#allocation2 + $0x220] sm:$0xff]
      %v1879 = vld [vmem:[#allocation2 + $0x228] sm:$0xff]
      %v1880 = vld [vmem:[#allocation2 + $0x230] sm:$0xff]
      %v1881 = vld [vmem:[#allocation2 + $0x238] sm:$0xff]
      %v1882 = vld [vmem:[#allocation2 + $0x240] sm:$0xff]
      %v1883 = vld [vmem:[#allocation2 + $0x248] sm:$0xff]
      %v1884 = vld [vmem:[#allocation2 + $0x250] sm:$0xff]
      %v1885 = vld [vmem:[#allocation2 + $0x258] sm:$0xff]
      %v1886 = vld [vmem:[#allocation2 + $0x260] sm:$0xff]
      %v1887 = vld [vmem:[#allocation2 + $0x268] sm:$0xff]
      %v1888 = vld [vmem:[#allocation2 + $0x270] sm:$0xff]
      %v1889 = vld [vmem:[#allocation2 + $0x278] sm:$0xff]
      %v1890 = vld [vmem:[#allocation2 + $0x280] sm:$0xff]
      %v1891 = vld [vmem:[#allocation2 + $0x288] sm:$0xff]
      %v1892 = vld [vmem:[#allocation2 + $0x290] sm:$0xff]
      %v1893 = vld [vmem:[#allocation2 + $0x298] sm:$0xff]
      %v1894 = vld [vmem:[#allocation2 + $0x2a0] sm:$0xff]
      %v1895 = vld [vmem:[#allocation2 + $0x2a8] sm:$0xff]
      %v1896 = vld [vmem:[#allocation2 + $0x2b0] sm:$0xff]
      %v1897 = vld [vmem:[#allocation2 + $0x2b8] sm:$0xff]
      %v1898 = vld [vmem:[#allocation2 + $0x2c0] sm:$0xff]
      %v1899 = vld [vmem:[#allocation2 + $0x2c8] sm:$0xff]
      %v1900 = vld [vmem:[#allocation2 + $0x2d0] sm:$0xff]
      %v1901 = vld [vmem:[#allocation2 + $0x2d8] sm:$0xff]
      %v1902 = vld [vmem:[#allocation2 + $0x2e0] sm:$0xff]
      %v1903 = vld [vmem:[#allocation2 + $0x2e8] sm:$0xff]
      %v1904 = vld [vmem:[#allocation2 + $0x2f0] sm:$0xff]
      %v1905 = vld [vmem:[#allocation2 + $0x2f8] sm:$0xff]
      %v1906 = vld [vmem:[#allocation2 + $0x300] sm:$0xff]
      %v1907 = vld [vmem:[#allocation2 + $0x308] sm:$0xff]
      %v1908 = vld [vmem:[#allocation2 + $0x310] sm:$0xff]
      %v1909 = vld [vmem:[#allocation2 + $0x318] sm:$0xff]
      %v1910 = vld [vmem:[#allocation2 + $0x320] sm:$0xff]
      %v1911 = vld [vmem:[#allocation2 + $0x328] sm:$0xff]
      %v1912 = vld [vmem:[#allocation2 + $0x330] sm:$0xff]
      %v1913 = vld [vmem:[#allocation2 + $0x338] sm:$0xff]
      %v1914 = vld [vmem:[#allocation2 + $0x340] sm:$0xff]
      %v1915 = vld [vmem:[#allocation2 + $0x348] sm:$0xff]
      %v1916 = vld [vmem:[#allocation2 + $0x350] sm:$0xff]
      %v1917 = vld [vmem:[#allocation2 + $0x358] sm:$0xff]
      %v1918 = vld [vmem:[#allocation2 + $0x360] sm:$0xff]
      %v1919 = vld [vmem:[#allocation2 + $0x368] sm:$0xff]
      %v1920 = vld [vmem:[#allocation2 + $0x370] sm:$0xff]
      %v1921 = vld [vmem:[#allocation2 + $0x378] sm:$0xff]
      %v1922 = vld [vmem:[#allocation2 + $0x380] sm:$0xff]
      %v1923 = vld [vmem:[#allocation2 + $0x388] sm:$0xff]
      %v1924 = vld [vmem:[#allocation2 + $0x390] sm:$0xff]
      %v1925 = vld [vmem:[#allocation2 + $0x398] sm:$0xff]
      %v1926 = vld [vmem:[#allocation2 + $0x3a0] sm:$0xff]
      %v1927 = vld [vmem:[#allocation2 + $0x3a8] sm:$0xff]
      %v1928 = vld [vmem:[#allocation2 + $0x3b0] sm:$0xff]
      %v1929 = vld [vmem:[#allocation2 + $0x3b8] sm:$0xff]
      %v1930 = vld [vmem:[#allocation2 + $0x3c0] sm:$0xff]
      %v1931 = vld [vmem:[#allocation2 + $0x3c8] sm:$0xff]
      %v1932 = vld [vmem:[#allocation2 + $0x3d0] sm:$0xff]
      %v1933 = vld [vmem:[#allocation2 + $0x3d8] sm:$0xff]
      %v1934 = vld [vmem:[#allocation2 + $0x3e0] sm:$0xff]
      %v1935 = vld [vmem:[#allocation2 + $0x3e8] sm:$0xff]
      %v1936 = vld [vmem:[#allocation2 + $0x3f0] sm:$0xff]
      %v1937 = vld [vmem:[#allocation2 + $0x3f8] sm:$0xff]
      %v1938 = vld [vmem:[#allocation2 + $0x400] sm:$0xff]
      %v1939 = vld [vmem:[#allocation2 + $0x408] sm:$0xff]
      %v1940 = vld [vmem:[#allocation2 + $0x410] sm:$0xff]
      %v1941 = vld [vmem:[#allocation2 + $0x418] sm:$0xff]
      %v1942 = vld [vmem:[#allocation2 + $0x420] sm:$0xff]
      %v1943 = vld [vmem:[#allocation2 + $0x428] sm:$0xff]
      %v1944 = vld [vmem:[#allocation2 + $0x430] sm:$0xff]
      %v1945 = vld [vmem:[#allocation2 + $0x438] sm:$0xff]
      %v1946 = vld [vmem:[#allocation2 + $0x440] sm:$0xff]
      %v1947 = vld [vmem:[#allocation2 + $0x448] sm:$0xff]
      %v1948 = vld [vmem:[#allocation2 + $0x450] sm:$0xff]
      %v1949 = vld [vmem:[#allocation2 + $0x458] sm:$0xff]
      %v1950 = vld [vmem:[#allocation2 + $0x460] sm:$0xff]
      %v1951 = vld [vmem:[#allocation2 + $0x468] sm:$0xff]
      %v1952 = vld [vmem:[#allocation2 + $0x470] sm:$0xff]
      %v1953 = vld [vmem:[#allocation2 + $0x478] sm:$0xff]
      %v1954 = vld [vmem:[#allocation2 + $0x480] sm:$0xff]
      %v1955 = vld [vmem:[#allocation2 + $0x488] sm:$0xff]
      %v1956 = vld [vmem:[#allocation2 + $0x490] sm:$0xff]
      %v1957 = vld [vmem:[#allocation2 + $0x498] sm:$0xff]
      %v1958 = vld [vmem:[#allocation2 + $0x4a0] sm:$0xff]
      %v1959 = vld [vmem:[#allocation2 + $0x4a8] sm:$0xff]
      %v1960 = vld [vmem:[#allocation2 + $0x4b0] sm:$0xff]
      %v1961 = vld [vmem:[#allocation2 + $0x4b8] sm:$0xff]
      %v1962 = vld [vmem:[#allocation2 + $0x4c0] sm:$0xff]
      %v1963 = vld [vmem:[#allocation2 + $0x4c8] sm:$0xff]
      %v1964 = vld [vmem:[#allocation2 + $0x4d0] sm:$0xff]
      %v1965 = vld [vmem:[#allocation2 + $0x4d8] sm:$0xff]
      %v1966 = vld [vmem:[#allocation2 + $0x4e0] sm:$0xff]
      %v1967 = vld [vmem:[#allocation2 + $0x4e8] sm:$0xff]
      %v1968 = vld [vmem:[#allocation2 + $0x4f0] sm:$0xff]
      %v1969 = vld [vmem:[#allocation2 + $0x4f8] sm:$0xff]
      %v1970 = vld [vmem:[%s2] sm:$0x1]
      %v1972 = vperm.slane %v1970, 0
      %v1974 = vmul.f32 %v1810, %v1972
      %v1975 = vmul.f32 %v1811, %v1972
      %v1976 = vmul.f32 %v1812, %v1972
      %v1977 = vmul.f32 %v1813, %v1972
      %v1978 = vmul.f32 %v1814, %v1972
      %v1979 = vmul.f32 %v1815, %v1972
      %v1980 = vmul.f32 %v1816, %v1972
      %v1981 = vmul.f32 %v1817, %v1972
      %v1982 = vmul.f32 %v1818, %v1972
      %v1983 = vmul.f32 %v1819, %v1972
      %v1984 = vmul.f32 %v1820, %v1972
      %v1985 = vmul.f32 %v1821, %v1972
      %v1986 = vmul.f32 %v1822, %v1972
      %v1987 = vmul.f32 %v1823, %v1972
      %v1988 = vmul.f32 %v1824, %v1972
      %v1989 = vmul.f32 %v1825, %v1972
      %v1990 = vmul.f32 %v1826, %v1972
      %v1991 = vmul.f32 %v1827, %v1972
      %v1992 = vmul.f32 %v1828, %v1972
      %v1993 = vmul.f32 %v1829, %v1972
      %v1994 = vmul.f32 %v1830, %v1972
      %v1995 = vmul.f32 %v1831, %v1972
      %v1996 = vmul.f32 %v1832, %v1972
      %v1997 = vmul.f32 %v1833, %v1972
      %v1998 = vmul.f32 %v1834, %v1972
      %v1999 = vmul.f32 %v1835, %v1972
      %v2000 = vmul.f32 %v1836, %v1972
      %v2001 = vmul.f32 %v1837, %v1972
      %v2002 = vmul.f32 %v1838, %v1972
      %v2003 = vmul.f32 %v1839, %v1972
      %v2004 = vmul.f32 %v1840, %v1972
      %v2005 = vmul.f32 %v1841, %v1972
      %v2006 = vmul.f32 %v1842, %v1972
      %v2007 = vmul.f32 %v1843, %v1972
      %v2008 = vmul.f32 %v1844, %v1972
      %v2009 = vmul.f32 %v1845, %v1972
      %v2010 = vmul.f32 %v1846, %v1972
      %v2011 = vmul.f32 %v1847, %v1972
      %v2012 = vmul.f32 %v1848, %v1972
      %v2013 = vmul.f32 %v1849, %v1972
      %v2014 = vmul.f32 %v1850, %v1972
      %v2015 = vmul.f32 %v1851, %v1972
      %v2016 = vmul.f32 %v1852, %v1972
      %v2017 = vmul.f32 %v1853, %v1972
      %v2018 = vmul.f32 %v1854, %v1972
      %v2019 = vmul.f32 %v1855, %v1972
      %v2020 = vmul.f32 %v1856, %v1972
      %v2021 = vmul.f32 %v1857, %v1972
      %v2022 = vmul.f32 %v1858, %v1972
      %v2023 = vmul.f32 %v1859, %v1972
      %v2024 = vmul.f32 %v1860, %v1972
      %v2025 = vmul.f32 %v1861, %v1972
      %v2026 = vmul.f32 %v1862, %v1972
      %v2027 = vmul.f32 %v1863, %v1972
      %v2028 = vmul.f32 %v1864, %v1972
      %v2029 = vmul.f32 %v1865, %v1972
      %v2030 = vmul.f32 %v1866, %v1972
      %v2031 = vmul.f32 %v1867, %v1972
      %v2032 = vmul.f32 %v1868, %v1972
      %v2033 = vmul.f32 %v1869, %v1972
      %v2034 = vmul.f32 %v1870, %v1972
      %v2035 = vmul.f32 %v1871, %v1972
      %v2036 = vmul.f32 %v1872, %v1972
      %v2037 = vmul.f32 %v1873, %v1972
      %v2038 = vmul.f32 %v1874, %v1972
      %v2039 = vmul.f32 %v1875, %v1972
      %v2040 = vmul.f32 %v1876, %v1972
      %v2041 = vmul.f32 %v1877, %v1972
      %v2042 = vmul.f32 %v1878, %v1972
      %v2043 = vmul.f32 %v1879, %v1972
      %v2044 = vmul.f32 %v1880, %v1972
      %v2045 = vmul.f32 %v1881, %v1972
      %v2046 = vmul.f32 %v1882, %v1972
      %v2047 = vmul.f32 %v1883, %v1972
      %v2048 = vmul.f32 %v1884, %v1972
      %v2049 = vmul.f32 %v1885, %v1972
      %v2050 = vmul.f32 %v1886, %v1972
      %v2051 = vmul.f32 %v1887, %v1972
      %v2052 = vmul.f32 %v1888, %v1972
      %v2053 = vmul.f32 %v1889, %v1972
      %v2054 = vmul.f32 %v1890, %v1972
      %v2055 = vmul.f32 %v1891, %v1972
      %v2056 = vmul.f32 %v1892, %v1972
      %v2057 = vmul.f32 %v1893, %v1972
      %v2058 = vmul.f32 %v1894, %v1972
      %v2059 = vmul.f32 %v1895, %v1972
      %v2060 = vmul.f32 %v1896, %v1972
      %v2061 = vmul.f32 %v1897, %v1972
      %v2062 = vmul.f32 %v1898, %v1972
      %v2063 = vmul.f32 %v1899, %v1972
      %v2064 = vmul.f32 %v1900, %v1972
      %v2065 = vmul.f32 %v1901, %v1972
      %v2066 = vmul.f32 %v1902, %v1972
      %v2067 = vmul.f32 %v1903, %v1972
      %v2068 = vmul.f32 %v1904, %v1972
      %v2069 = vmul.f32 %v1905, %v1972
      %v2070 = vmul.f32 %v1906, %v1972
      %v2071 = vmul.f32 %v1907, %v1972
      %v2072 = vmul.f32 %v1908, %v1972
      %v2073 = vmul.f32 %v1909, %v1972
      %v2074 = vmul.f32 %v1910, %v1972
      %v2075 = vmul.f32 %v1911, %v1972
      %v2076 = vmul.f32 %v1912, %v1972
      %v2077 = vmul.f32 %v1913, %v1972
      %v2078 = vmul.f32 %v1914, %v1972
      %v2079 = vmul.f32 %v1915, %v1972
      %v2080 = vmul.f32 %v1916, %v1972
      %v2081 = vmul.f32 %v1917, %v1972
      %v2082 = vmul.f32 %v1918, %v1972
      %v2083 = vmul.f32 %v1919, %v1972
      %v2084 = vmul.f32 %v1920, %v1972
      %v2085 = vmul.f32 %v1921, %v1972
      %v2086 = vmul.f32 %v1922, %v1972
      %v2087 = vmul.f32 %v1923, %v1972
      %v2088 = vmul.f32 %v1924, %v1972
      %v2089 = vmul.f32 %v1925, %v1972
      %v2090 = vmul.f32 %v1926, %v1972
      %v2091 = vmul.f32 %v1927, %v1972
      %v2092 = vmul.f32 %v1928, %v1972
      %v2093 = vmul.f32 %v1929, %v1972
      %v2094 = vmul.f32 %v1930, %v1972
      %v2095 = vmul.f32 %v1931, %v1972
      %v2096 = vmul.f32 %v1932, %v1972
      %v2097 = vmul.f32 %v1933, %v1972
      %v2098 = vmul.f32 %v1934, %v1972
      %v2099 = vmul.f32 %v1935, %v1972
      %v2100 = vmul.f32 %v1936, %v1972
      %v2101 = vmul.f32 %v1937, %v1972
      %v2102 = vmul.f32 %v1938, %v1972
      %v2103 = vmul.f32 %v1939, %v1972
      %v2104 = vmul.f32 %v1940, %v1972
      %v2105 = vmul.f32 %v1941, %v1972
      %v2106 = vmul.f32 %v1942, %v1972
      %v2107 = vmul.f32 %v1943, %v1972
      %v2108 = vmul.f32 %v1944, %v1972
      %v2109 = vmul.f32 %v1945, %v1972
      %v2110 = vmul.f32 %v1946, %v1972
      %v2111 = vmul.f32 %v1947, %v1972
      %v2112 = vmul.f32 %v1948, %v1972
      %v2113 = vmul.f32 %v1949, %v1972
      %v2114 = vmul.f32 %v1950, %v1972
      %v2115 = vmul.f32 %v1951, %v1972
      %v2116 = vmul.f32 %v1952, %v1972
      %v2117 = vmul.f32 %v1953, %v1972
      %v2118 = vmul.f32 %v1954, %v1972
      %v2119 = vmul.f32 %v1955, %v1972
      %v2120 = vmul.f32 %v1956, %v1972
      %v2121 = vmul.f32 %v1957, %v1972
      %v2122 = vmul.f32 %v1958, %v1972
      %v2123 = vmul.f32 %v1959, %v1972
      %v2124 = vmul.f32 %v1960, %v1972
      %v2125 = vmul.f32 %v1961, %v1972
      %v2126 = vmul.f32 %v1962, %v1972
      %v2127 = vmul.f32 %v1963, %v1972
      %v2128 = vmul.f32 %v1964, %v1972
      %v2129 = vmul.f32 %v1965, %v1972
      %v2130 = vmul.f32 %v1966, %v1972
      %v2131 = vmul.f32 %v1967, %v1972
      %v2132 = vmul.f32 %v1968, %v1972
      %v2133 = vmul.f32 %v1969, %v1972
      %v2134 = vld [vmem:[%s3] sm:$0x1]
      %v2136 = vperm.slane %v2134, 0
      %v2138 = vadd.f32 %v1974, %v2136
      %v2139 = vadd.f32 %v1975, %v2136
      %v2140 = vadd.f32 %v1976, %v2136
      %v2141 = vadd.f32 %v1977, %v2136
      %v2142 = vadd.f32 %v1978, %v2136
      %v2143 = vadd.f32 %v1979, %v2136
      %v2144 = vadd.f32 %v1980, %v2136
      %v2145 = vadd.f32 %v1981, %v2136
      %v2146 = vadd.f32 %v1982, %v2136
      %v2147 = vadd.f32 %v1983, %v2136
      %v2148 = vadd.f32 %v1984, %v2136
      %v2149 = vadd.f32 %v1985, %v2136
      %v2150 = vadd.f32 %v1986, %v2136
      %v2151 = vadd.f32 %v1987, %v2136
      %v2152 = vadd.f32 %v1988, %v2136
      %v2153 = vadd.f32 %v1989, %v2136
      %v2154 = vadd.f32 %v1990, %v2136
      %v2155 = vadd.f32 %v1991, %v2136
      %v2156 = vadd.f32 %v1992, %v2136
      %v2157 = vadd.f32 %v1993, %v2136
      %v2158 = vadd.f32 %v1994, %v2136
      %v2159 = vadd.f32 %v1995, %v2136
      %v2160 = vadd.f32 %v1996, %v2136
      %v2161 = vadd.f32 %v1997, %v2136
      %v2162 = vadd.f32 %v1998, %v2136
      %v2163 = vadd.f32 %v1999, %v2136
      %v2164 = vadd.f32 %v2000, %v2136
      %v2165 = vadd.f32 %v2001, %v2136
      %v2166 = vadd.f32 %v2002, %v2136
      %v2167 = vadd.f32 %v2003, %v2136
      %v2168 = vadd.f32 %v2004, %v2136
      %v2169 = vadd.f32 %v2005, %v2136
      %v2170 = vadd.f32 %v2006, %v2136
      %v2171 = vadd.f32 %v2007, %v2136
      %v2172 = vadd.f32 %v2008, %v2136
      %v2173 = vadd.f32 %v2009, %v2136
      %v2174 = vadd.f32 %v2010, %v2136
      %v2175 = vadd.f32 %v2011, %v2136
      %v2176 = vadd.f32 %v2012, %v2136
      %v2177 = vadd.f32 %v2013, %v2136
      %v2178 = vadd.f32 %v2014, %v2136
      %v2179 = vadd.f32 %v2015, %v2136
      %v2180 = vadd.f32 %v2016, %v2136
      %v2181 = vadd.f32 %v2017, %v2136
      %v2182 = vadd.f32 %v2018, %v2136
      %v2183 = vadd.f32 %v2019, %v2136
      %v2184 = vadd.f32 %v2020, %v2136
      %v2185 = vadd.f32 %v2021, %v2136
      %v2186 = vadd.f32 %v2022, %v2136
      %v2187 = vadd.f32 %v2023, %v2136
      %v2188 = vadd.f32 %v2024, %v2136
      %v2189 = vadd.f32 %v2025, %v2136
      %v2190 = vadd.f32 %v2026, %v2136
      %v2191 = vadd.f32 %v2027, %v2136
      %v2192 = vadd.f32 %v2028, %v2136
      %v2193 = vadd.f32 %v2029, %v2136
      %v2194 = vadd.f32 %v2030, %v2136
      %v2195 = vadd.f32 %v2031, %v2136
      %v2196 = vadd.f32 %v2032, %v2136
      %v2197 = vadd.f32 %v2033, %v2136
      %v2198 = vadd.f32 %v2034, %v2136
      %v2199 = vadd.f32 %v2035, %v2136
      %v2200 = vadd.f32 %v2036, %v2136
      %v2201 = vadd.f32 %v2037, %v2136
      %v2202 = vadd.f32 %v2038, %v2136
      %v2203 = vadd.f32 %v2039, %v2136
      %v2204 = vadd.f32 %v2040, %v2136
      %v2205 = vadd.f32 %v2041, %v2136
      %v2206 = vadd.f32 %v2042, %v2136
      %v2207 = vadd.f32 %v2043, %v2136
      %v2208 = vadd.f32 %v2044, %v2136
      %v2209 = vadd.f32 %v2045, %v2136
      %v2210 = vadd.f32 %v2046, %v2136
      %v2211 = vadd.f32 %v2047, %v2136
      %v2212 = vadd.f32 %v2048, %v2136
      %v2213 = vadd.f32 %v2049, %v2136
      %v2214 = vadd.f32 %v2050, %v2136
      %v2215 = vadd.f32 %v2051, %v2136
      %v2216 = vadd.f32 %v2052, %v2136
      %v2217 = vadd.f32 %v2053, %v2136
      %v2218 = vadd.f32 %v2054, %v2136
      %v2219 = vadd.f32 %v2055, %v2136
      %v2220 = vadd.f32 %v2056, %v2136
      %v2221 = vadd.f32 %v2057, %v2136
      %v2222 = vadd.f32 %v2058, %v2136
      %v2223 = vadd.f32 %v2059, %v2136
      %v2224 = vadd.f32 %v2060, %v2136
      %v2225 = vadd.f32 %v2061, %v2136
      %v2226 = vadd.f32 %v2062, %v2136
      %v2227 = vadd.f32 %v2063, %v2136
      %v2228 = vadd.f32 %v2064, %v2136
      %v2229 = vadd.f32 %v2065, %v2136
      %v2230 = vadd.f32 %v2066, %v2136
      %v2231 = vadd.f32 %v2067, %v2136
      %v2232 = vadd.f32 %v2068, %v2136
      %v2233 = vadd.f32 %v2069, %v2136
      %v2234 = vadd.f32 %v2070, %v2136
      %v2235 = vadd.f32 %v2071, %v2136
      %v2236 = vadd.f32 %v2072, %v2136
      %v2237 = vadd.f32 %v2073, %v2136
      %v2238 = vadd.f32 %v2074, %v2136
      %v2239 = vadd.f32 %v2075, %v2136
      %v2240 = vadd.f32 %v2076, %v2136
      %v2241 = vadd.f32 %v2077, %v2136
      %v2242 = vadd.f32 %v2078, %v2136
      %v2243 = vadd.f32 %v2079, %v2136
      %v2244 = vadd.f32 %v2080, %v2136
      %v2245 = vadd.f32 %v2081, %v2136
      %v2246 = vadd.f32 %v2082, %v2136
      %v2247 = vadd.f32 %v2083, %v2136
      %v2248 = vadd.f32 %v2084, %v2136
      %v2249 = vadd.f32 %v2085, %v2136
      %v2250 = vadd.f32 %v2086, %v2136
      %v2251 = vadd.f32 %v2087, %v2136
      %v2252 = vadd.f32 %v2088, %v2136
      %v2253 = vadd.f32 %v2089, %v2136
      %v2254 = vadd.f32 %v2090, %v2136
      %v2255 = vadd.f32 %v2091, %v2136
      %v2256 = vadd.f32 %v2092, %v2136
      %v2257 = vadd.f32 %v2093, %v2136
      %v2258 = vadd.f32 %v2094, %v2136
      %v2259 = vadd.f32 %v2095, %v2136
      %v2260 = vadd.f32 %v2096, %v2136
      %v2261 = vadd.f32 %v2097, %v2136
      %v2262 = vadd.f32 %v2098, %v2136
      %v2263 = vadd.f32 %v2099, %v2136
      %v2264 = vadd.f32 %v2100, %v2136
      %v2265 = vadd.f32 %v2101, %v2136
      %v2266 = vadd.f32 %v2102, %v2136
      %v2267 = vadd.f32 %v2103, %v2136
      %v2268 = vadd.f32 %v2104, %v2136
      %v2269 = vadd.f32 %v2105, %v2136
      %v2270 = vadd.f32 %v2106, %v2136
      %v2271 = vadd.f32 %v2107, %v2136
      %v2272 = vadd.f32 %v2108, %v2136
      %v2273 = vadd.f32 %v2109, %v2136
      %v2274 = vadd.f32 %v2110, %v2136
      %v2275 = vadd.f32 %v2111, %v2136
      %v2276 = vadd.f32 %v2112, %v2136
      %v2277 = vadd.f32 %v2113, %v2136
      %v2278 = vadd.f32 %v2114, %v2136
      %v2279 = vadd.f32 %v2115, %v2136
      %v2280 = vadd.f32 %v2116, %v2136
      %v2281 = vadd.f32 %v2117, %v2136
      %v2282 = vadd.f32 %v2118, %v2136
      %v2283 = vadd.f32 %v2119, %v2136
      %v2284 = vadd.f32 %v2120, %v2136
      %v2285 = vadd.f32 %v2121, %v2136
      %v2286 = vadd.f32 %v2122, %v2136
      %v2287 = vadd.f32 %v2123, %v2136
      %v2288 = vadd.f32 %v2124, %v2136
      %v2289 = vadd.f32 %v2125, %v2136
      %v2290 = vadd.f32 %v2126, %v2136
      %v2291 = vadd.f32 %v2127, %v2136
      %v2292 = vadd.f32 %v2128, %v2136
      %v2293 = vadd.f32 %v2129, %v2136
      %v2294 = vadd.f32 %v2130, %v2136
      %v2295 = vadd.f32 %v2131, %v2136
      %v2296 = vadd.f32 %v2132, %v2136
      %v2297 = vadd.f32 %v2133, %v2136
      %v2298 = vmax.f32 %v2138, 0.0
      %v2299 = vmax.f32 %v2139, 0.0
      %v2300 = vmax.f32 %v2140, 0.0
      %v2301 = vmax.f32 %v2141, 0.0
      %v2302 = vmax.f32 %v2142, 0.0
      %v2303 = vmax.f32 %v2143, 0.0
      %v2304 = vmax.f32 %v2144, 0.0
      %v2305 = vmax.f32 %v2145, 0.0
      %v2306 = vmax.f32 %v2146, 0.0
      %v2307 = vmax.f32 %v2147, 0.0
      %v2308 = vmax.f32 %v2148, 0.0
      %v2309 = vmax.f32 %v2149, 0.0
      %v2310 = vmax.f32 %v2150, 0.0
      %v2311 = vmax.f32 %v2151, 0.0
      %v2312 = vmax.f32 %v2152, 0.0
      %v2313 = vmax.f32 %v2153, 0.0
      %v2314 = vmax.f32 %v2154, 0.0
      %v2315 = vmax.f32 %v2155, 0.0
      %v2316 = vmax.f32 %v2156, 0.0
      %v2317 = vmax.f32 %v2157, 0.0
      %v2318 = vmax.f32 %v2158, 0.0
      %v2319 = vmax.f32 %v2159, 0.0
      %v2320 = vmax.f32 %v2160, 0.0
      %v2321 = vmax.f32 %v2161, 0.0
      %v2322 = vmax.f32 %v2162, 0.0
      %v2323 = vmax.f32 %v2163, 0.0
      %v2324 = vmax.f32 %v2164, 0.0
      %v2325 = vmax.f32 %v2165, 0.0
      %v2326 = vmax.f32 %v2166, 0.0
      %v2327 = vmax.f32 %v2167, 0.0
      %v2328 = vmax.f32 %v2168, 0.0
      %v2329 = vmax.f32 %v2169, 0.0
      %v2330 = vmax.f32 %v2170, 0.0
      %v2331 = vmax.f32 %v2171, 0.0
      %v2332 = vmax.f32 %v2172, 0.0
      %v2333 = vmax.f32 %v2173, 0.0
      %v2334 = vmax.f32 %v2174, 0.0
      %v2335 = vmax.f32 %v2175, 0.0
      %v2336 = vmax.f32 %v2176, 0.0
      %v2337 = vmax.f32 %v2177, 0.0
      %v2338 = vmax.f32 %v2178, 0.0
      %v2339 = vmax.f32 %v2179, 0.0
      %v2340 = vmax.f32 %v2180, 0.0
      %v2341 = vmax.f32 %v2181, 0.0
      %v2342 = vmax.f32 %v2182, 0.0
      %v2343 = vmax.f32 %v2183, 0.0
      %v2344 = vmax.f32 %v2184, 0.0
      %v2345 = vmax.f32 %v2185, 0.0
      %v2346 = vmax.f32 %v2186, 0.0
      %v2347 = vmax.f32 %v2187, 0.0
      %v2348 = vmax.f32 %v2188, 0.0
      %v2349 = vmax.f32 %v2189, 0.0
      %v2350 = vmax.f32 %v2190, 0.0
      %v2351 = vmax.f32 %v2191, 0.0
      %v2352 = vmax.f32 %v2192, 0.0
      %v2353 = vmax.f32 %v2193, 0.0
      %v2354 = vmax.f32 %v2194, 0.0
      %v2355 = vmax.f32 %v2195, 0.0
      %v2356 = vmax.f32 %v2196, 0.0
      %v2357 = vmax.f32 %v2197, 0.0
      %v2358 = vmax.f32 %v2198, 0.0
      %v2359 = vmax.f32 %v2199, 0.0
      %v2360 = vmax.f32 %v2200, 0.0
      %v2361 = vmax.f32 %v2201, 0.0
      %v2362 = vmax.f32 %v2202, 0.0
      %v2363 = vmax.f32 %v2203, 0.0
      %v2364 = vmax.f32 %v2204, 0.0
      %v2365 = vmax.f32 %v2205, 0.0
      %v2366 = vmax.f32 %v2206, 0.0
      %v2367 = vmax.f32 %v2207, 0.0
      %v2368 = vmax.f32 %v2208, 0.0
      %v2369 = vmax.f32 %v2209, 0.0
      %v2370 = vmax.f32 %v2210, 0.0
      %v2371 = vmax.f32 %v2211, 0.0
      %v2372 = vmax.f32 %v2212, 0.0
      %v2373 = vmax.f32 %v2213, 0.0
      %v2374 = vmax.f32 %v2214, 0.0
      %v2375 = vmax.f32 %v2215, 0.0
      %v2376 = vmax.f32 %v2216, 0.0
      %v2377 = vmax.f32 %v2217, 0.0
      %v2378 = vmax.f32 %v2218, 0.0
      %v2379 = vmax.f32 %v2219, 0.0
      %v2380 = vmax.f32 %v2220, 0.0
      %v2381 = vmax.f32 %v2221, 0.0
      %v2382 = vmax.f32 %v2222, 0.0
      %v2383 = vmax.f32 %v2223, 0.0
      %v2384 = vmax.f32 %v2224, 0.0
      %v2385 = vmax.f32 %v2225, 0.0
      %v2386 = vmax.f32 %v2226, 0.0
      %v2387 = vmax.f32 %v2227, 0.0
      %v2388 = vmax.f32 %v2228, 0.0
      %v2389 = vmax.f32 %v2229, 0.0
      %v2390 = vmax.f32 %v2230, 0.0
      %v2391 = vmax.f32 %v2231, 0.0
      %v2392 = vmax.f32 %v2232, 0.0
      %v2393 = vmax.f32 %v2233, 0.0
      %v2394 = vmax.f32 %v2234, 0.0
      %v2395 = vmax.f32 %v2235, 0.0
      %v2396 = vmax.f32 %v2236, 0.0
      %v2397 = vmax.f32 %v2237, 0.0
      %v2398 = vmax.f32 %v2238, 0.0
      %v2399 = vmax.f32 %v2239, 0.0
      %v2400 = vmax.f32 %v2240, 0.0
      %v2401 = vmax.f32 %v2241, 0.0
      %v2402 = vmax.f32 %v2242, 0.0
      %v2403 = vmax.f32 %v2243, 0.0
      %v2404 = vmax.f32 %v2244, 0.0
      %v2405 = vmax.f32 %v2245, 0.0
      %v2406 = vmax.f32 %v2246, 0.0
      %v2407 = vmax.f32 %v2247, 0.0
      %v2408 = vmax.f32 %v2248, 0.0
      %v2409 = vmax.f32 %v2249, 0.0
      %v2410 = vmax.f32 %v2250, 0.0
      %v2411 = vmax.f32 %v2251, 0.0
      %v2412 = vmax.f32 %v2252, 0.0
      %v2413 = vmax.f32 %v2253, 0.0
      %v2414 = vmax.f32 %v2254, 0.0
      %v2415 = vmax.f32 %v2255, 0.0
      %v2416 = vmax.f32 %v2256, 0.0
      %v2417 = vmax.f32 %v2257, 0.0
      %v2418 = vmax.f32 %v2258, 0.0
      %v2419 = vmax.f32 %v2259, 0.0
      %v2420 = vmax.f32 %v2260, 0.0
      %v2421 = vmax.f32 %v2261, 0.0
      %v2422 = vmax.f32 %v2262, 0.0
      %v2423 = vmax.f32 %v2263, 0.0
      %v2424 = vmax.f32 %v2264, 0.0
      %v2425 = vmax.f32 %v2265, 0.0
      %v2426 = vmax.f32 %v2266, 0.0
      %v2427 = vmax.f32 %v2267, 0.0
      %v2428 = vmax.f32 %v2268, 0.0
      %v2429 = vmax.f32 %v2269, 0.0
      %v2430 = vmax.f32 %v2270, 0.0
      %v2431 = vmax.f32 %v2271, 0.0
      %v2432 = vmax.f32 %v2272, 0.0
      %v2433 = vmax.f32 %v2273, 0.0
      %v2434 = vmax.f32 %v2274, 0.0
      %v2435 = vmax.f32 %v2275, 0.0
      %v2436 = vmax.f32 %v2276, 0.0
      %v2437 = vmax.f32 %v2277, 0.0
      %v2438 = vmax.f32 %v2278, 0.0
      %v2439 = vmax.f32 %v2279, 0.0
      %v2440 = vmax.f32 %v2280, 0.0
      %v2441 = vmax.f32 %v2281, 0.0
      %v2442 = vmax.f32 %v2282, 0.0
      %v2443 = vmax.f32 %v2283, 0.0
      %v2444 = vmax.f32 %v2284, 0.0
      %v2445 = vmax.f32 %v2285, 0.0
      %v2446 = vmax.f32 %v2286, 0.0
      %v2447 = vmax.f32 %v2287, 0.0
      %v2448 = vmax.f32 %v2288, 0.0
      %v2449 = vmax.f32 %v2289, 0.0
      %v2450 = vmax.f32 %v2290, 0.0
      %v2451 = vmax.f32 %v2291, 0.0
      %v2452 = vmax.f32 %v2292, 0.0
      %v2453 = vmax.f32 %v2293, 0.0
      %v2454 = vmax.f32 %v2294, 0.0
      %v2455 = vmax.f32 %v2295, 0.0
      %v2456 = vmax.f32 %v2296, 0.0
      %v2457 = vmax.f32 %v2297, 0.0
      %v2458 = vpack.c.bf16 %v2298, %v2298
      %v2459 = vpack.c.bf16 %v2299, %v2299
      %v2460 = vpack.c.bf16 %v2300, %v2300
      %v2461 = vpack.c.bf16 %v2301, %v2301
      %v2462 = vpack.c.bf16 %v2302, %v2302
      %v2463 = vpack.c.bf16 %v2303, %v2303
      %v2464 = vpack.c.bf16 %v2304, %v2304
      %v2465 = vpack.c.bf16 %v2305, %v2305
      %v2466 = vpack.c.bf16 %v2306, %v2306
      %v2467 = vpack.c.bf16 %v2307, %v2307
      %v2468 = vpack.c.bf16 %v2308, %v2308
      %v2469 = vpack.c.bf16 %v2309, %v2309
      %v2470 = vpack.c.bf16 %v2310, %v2310
      %v2471 = vpack.c.bf16 %v2311, %v2311
      %v2472 = vpack.c.bf16 %v2312, %v2312
      %v2473 = vpack.c.bf16 %v2313, %v2313
      %v2474 = vpack.c.bf16 %v2314, %v2314
      %v2475 = vpack.c.bf16 %v2315, %v2315
      %v2476 = vpack.c.bf16 %v2316, %v2316
      %v2477 = vpack.c.bf16 %v2317, %v2317
      %v2478 = vpack.c.bf16 %v2318, %v2318
      %v2479 = vpack.c.bf16 %v2319, %v2319
      %v2480 = vpack.c.bf16 %v2320, %v2320
      %v2481 = vpack.c.bf16 %v2321, %v2321
      %v2482 = vpack.c.bf16 %v2322, %v2322
      %v2483 = vpack.c.bf16 %v2323, %v2323
      %v2484 = vpack.c.bf16 %v2324, %v2324
      %v2485 = vpack.c.bf16 %v2325, %v2325
      %v2486 = vpack.c.bf16 %v2326, %v2326
      %v2487 = vpack.c.bf16 %v2327, %v2327
      %v2488 = vpack.c.bf16 %v2328, %v2328
      %v2489 = vpack.c.bf16 %v2329, %v2329
      %v2490 = vpack.c.bf16 %v2330, %v2330
      %v2491 = vpack.c.bf16 %v2331, %v2331
      %v2492 = vpack.c.bf16 %v2332, %v2332
      %v2493 = vpack.c.bf16 %v2333, %v2333
      %v2494 = vpack.c.bf16 %v2334, %v2334
      %v2495 = vpack.c.bf16 %v2335, %v2335
      %v2496 = vpack.c.bf16 %v2336, %v2336
      %v2497 = vpack.c.bf16 %v2337, %v2337
      %v2498 = vpack.c.bf16 %v2338, %v2338
      %v2499 = vpack.c.bf16 %v2339, %v2339
      %v2500 = vpack.c.bf16 %v2340, %v2340
      %v2501 = vpack.c.bf16 %v2341, %v2341
      %v2502 = vpack.c.bf16 %v2342, %v2342
      %v2503 = vpack.c.bf16 %v2343, %v2343
      %v2504 = vpack.c.bf16 %v2344, %v2344
      %v2505 = vpack.c.bf16 %v2345, %v2345
      %v2506 = vpack.c.bf16 %v2346, %v2346
      %v2507 = vpack.c.bf16 %v2347, %v2347
      %v2508 = vpack.c.bf16 %v2348, %v2348
      %v2509 = vpack.c.bf16 %v2349, %v2349
      %v2510 = vpack.c.bf16 %v2350, %v2350
      %v2511 = vpack.c.bf16 %v2351, %v2351
      %v2512 = vpack.c.bf16 %v2352, %v2352
      %v2513 = vpack.c.bf16 %v2353, %v2353
      %v2514 = vpack.c.bf16 %v2354, %v2354
      %v2515 = vpack.c.bf16 %v2355, %v2355
      %v2516 = vpack.c.bf16 %v2356, %v2356
      %v2517 = vpack.c.bf16 %v2357, %v2357
      %v2518 = vpack.c.bf16 %v2358, %v2358
      %v2519 = vpack.c.bf16 %v2359, %v2359
      %v2520 = vpack.c.bf16 %v2360, %v2360
      %v2521 = vpack.c.bf16 %v2361, %v2361
      %v2522 = vpack.c.bf16 %v2362, %v2362
      %v2523 = vpack.c.bf16 %v2363, %v2363
      %v2524 = vpack.c.bf16 %v2364, %v2364
      %v2525 = vpack.c.bf16 %v2365, %v2365
      %v2526 = vpack.c.bf16 %v2366, %v2366
      %v2527 = vpack.c.bf16 %v2367, %v2367
      %v2528 = vpack.c.bf16 %v2368, %v2368
      %v2529 = vpack.c.bf16 %v2369, %v2369
      %v2530 = vpack.c.bf16 %v2370, %v2370
      %v2531 = vpack.c.bf16 %v2371, %v2371
      %v2532 = vpack.c.bf16 %v2372, %v2372
      %v2533 = vpack.c.bf16 %v2373, %v2373
      %v2534 = vpack.c.bf16 %v2374, %v2374
      %v2535 = vpack.c.bf16 %v2375, %v2375
      %v2536 = vpack.c.bf16 %v2376, %v2376
      %v2537 = vpack.c.bf16 %v2377, %v2377
      %v2538 = vpack.c.bf16 %v2378, %v2378
      %v2539 = vpack.c.bf16 %v2379, %v2379
      %v2540 = vpack.c.bf16 %v2380, %v2380
      %v2541 = vpack.c.bf16 %v2381, %v2381
      %v2542 = vpack.c.bf16 %v2382, %v2382
      %v2543 = vpack.c.bf16 %v2383, %v2383
      %v2544 = vpack.c.bf16 %v2384, %v2384
      %v2545 = vpack.c.bf16 %v2385, %v2385
      %v2546 = vpack.c.bf16 %v2386, %v2386
      %v2547 = vpack.c.bf16 %v2387, %v2387
      %v2548 = vpack.c.bf16 %v2388, %v2388
      %v2549 = vpack.c.bf16 %v2389, %v2389
      %v2550 = vpack.c.bf16 %v2390, %v2390
      %v2551 = vpack.c.bf16 %v2391, %v2391
      %v2552 = vpack.c.bf16 %v2392, %v2392
      %v2553 = vpack.c.bf16 %v2393, %v2393
      %v2554 = vpack.c.bf16 %v2394, %v2394
      %v2555 = vpack.c.bf16 %v2395, %v2395
      %v2556 = vpack.c.bf16 %v2396, %v2396
      %v2557 = vpack.c.bf16 %v2397, %v2397
      %v2558 = vpack.c.bf16 %v2398, %v2398
      %v2559 = vpack.c.bf16 %v2399, %v2399
      %v2560 = vpack.c.bf16 %v2400, %v2400
      %v2561 = vpack.c.bf16 %v2401, %v2401
      %v2562 = vpack.c.bf16 %v2402, %v2402
      %v2563 = vpack.c.bf16 %v2403, %v2403
      %v2564 = vpack.c.bf16 %v2404, %v2404
      %v2565 = vpack.c.bf16 %v2405, %v2405
      %v2566 = vpack.c.bf16 %v2406, %v2406
      %v2567 = vpack.c.bf16 %v2407, %v2407
      %v2568 = vpack.c.bf16 %v2408, %v2408
      %v2569 = vpack.c.bf16 %v2409, %v2409
      %v2570 = vpack.c.bf16 %v2410, %v2410
      %v2571 = vpack.c.bf16 %v2411, %v2411
      %v2572 = vpack.c.bf16 %v2412, %v2412
      %v2573 = vpack.c.bf16 %v2413, %v2413
      %v2574 = vpack.c.bf16 %v2414, %v2414
      %v2575 = vpack.c.bf16 %v2415, %v2415
      %v2576 = vpack.c.bf16 %v2416, %v2416
      %v2577 = vpack.c.bf16 %v2417, %v2417
      %v2578 = vpack.c.bf16 %v2418, %v2418
      %v2579 = vpack.c.bf16 %v2419, %v2419
      %v2580 = vpack.c.bf16 %v2420, %v2420
      %v2581 = vpack.c.bf16 %v2421, %v2421
      %v2582 = vpack.c.bf16 %v2422, %v2422
      %v2583 = vpack.c.bf16 %v2423, %v2423
      %v2584 = vpack.c.bf16 %v2424, %v2424
      %v2585 = vpack.c.bf16 %v2425, %v2425
      %v2586 = vpack.c.bf16 %v2426, %v2426
      %v2587 = vpack.c.bf16 %v2427, %v2427
      %v2588 = vpack.c.bf16 %v2428, %v2428
      %v2589 = vpack.c.bf16 %v2429, %v2429
      %v2590 = vpack.c.bf16 %v2430, %v2430
      %v2591 = vpack.c.bf16 %v2431, %v2431
      %v2592 = vpack.c.bf16 %v2432, %v2432
      %v2593 = vpack.c.bf16 %v2433, %v2433
      %v2594 = vpack.c.bf16 %v2434, %v2434
      %v2595 = vpack.c.bf16 %v2435, %v2435
      %v2596 = vpack.c.bf16 %v2436, %v2436
      %v2597 = vpack.c.bf16 %v2437, %v2437
      %v2598 = vpack.c.bf16 %v2438, %v2438
      %v2599 = vpack.c.bf16 %v2439, %v2439
      %v2600 = vpack.c.bf16 %v2440, %v2440
      %v2601 = vpack.c.bf16 %v2441, %v2441
      %v2602 = vpack.c.bf16 %v2442, %v2442
      %v2603 = vpack.c.bf16 %v2443, %v2443
      %v2604 = vpack.c.bf16 %v2444, %v2444
      %v2605 = vpack.c.bf16 %v2445, %v2445
      %v2606 = vpack.c.bf16 %v2446, %v2446
      %v2607 = vpack.c.bf16 %v2447, %v2447
      %v2608 = vpack.c.bf16 %v2448, %v2448
      %v2609 = vpack.c.bf16 %v2449, %v2449
      %v2610 = vpack.c.bf16 %v2450, %v2450
      %v2611 = vpack.c.bf16 %v2451, %v2451
      %v2612 = vpack.c.bf16 %v2452, %v2452
      %v2613 = vpack.c.bf16 %v2453, %v2453
      %v2614 = vpack.c.bf16 %v2454, %v2454
      %v2615 = vpack.c.bf16 %v2455, %v2455
      %v2616 = vpack.c.bf16 %v2456, %v2456
      %v2617 = vpack.c.bf16 %v2457, %v2457
      %2618 = vst [vmem:[#allocation8] sm:$0xf] %v2458
      %2619 = vst [vmem:[#allocation8 + $0x4] sm:$0xf] %v2459
      %2620 = vst [vmem:[#allocation8 + $0x8] sm:$0xf] %v2460
      %2621 = vst [vmem:[#allocation8 + $0xc] sm:$0xf] %v2461
      %2622 = vst [vmem:[#allocation8 + $0x10] sm:$0xf] %v2462
      %2623 = vst [vmem:[#allocation8 + $0x14] sm:$0xf] %v2463
      %2624 = vst [vmem:[#allocation8 + $0x18] sm:$0xf] %v2464
      %2625 = vst [vmem:[#allocation8 + $0x1c] sm:$0xf] %v2465
      %2626 = vst [vmem:[#allocation8 + $0x20] sm:$0xf] %v2466
      %2627 = vst [vmem:[#allocation8 + $0x24] sm:$0xf] %v2467
      %2628 = vst [vmem:[#allocation8 + $0x28] sm:$0xf] %v2468
      %2629 = vst [vmem:[#allocation8 + $0x2c] sm:$0xf] %v2469
      %2630 = vst [vmem:[#allocation8 + $0x30] sm:$0xf] %v2470
      %2631 = vst [vmem:[#allocation8 + $0x34] sm:$0xf] %v2471
      %2632 = vst [vmem:[#allocation8 + $0x38] sm:$0xf] %v2472
      %2633 = vst [vmem:[#allocation8 + $0x3c] sm:$0xf] %v2473
      %2634 = vst [vmem:[#allocation8 + $0x40] sm:$0xf] %v2474
      %2635 = vst [vmem:[#allocation8 + $0x44] sm:$0xf] %v2475
      %2636 = vst [vmem:[#allocation8 + $0x48] sm:$0xf] %v2476
      %2637 = vst [vmem:[#allocation8 + $0x4c] sm:$0xf] %v2477
      %2638 = vst [vmem:[#allocation8 + $0x50] sm:$0xf] %v2478
      %2639 = vst [vmem:[#allocation8 + $0x54] sm:$0xf] %v2479
      %2640 = vst [vmem:[#allocation8 + $0x58] sm:$0xf] %v2480
      %2641 = vst [vmem:[#allocation8 + $0x5c] sm:$0xf] %v2481
      %2642 = vst [vmem:[#allocation8 + $0x60] sm:$0xf] %v2482
      %2643 = vst [vmem:[#allocation8 + $0x64] sm:$0xf] %v2483
      %2644 = vst [vmem:[#allocation8 + $0x68] sm:$0xf] %v2484
      %2645 = vst [vmem:[#allocation8 + $0x6c] sm:$0xf] %v2485
      %2646 = vst [vmem:[#allocation8 + $0x70] sm:$0xf] %v2486
      %2647 = vst [vmem:[#allocation8 + $0x74] sm:$0xf] %v2487
      %2648 = vst [vmem:[#allocation8 + $0x78] sm:$0xf] %v2488
      %2649 = vst [vmem:[#allocation8 + $0x7c] sm:$0xf] %v2489
      %2650 = vst [vmem:[#allocation8 + $0x80] sm:$0xf] %v2490
      %2651 = vst [vmem:[#allocation8 + $0x84] sm:$0xf] %v2491
      %2652 = vst [vmem:[#allocation8 + $0x88] sm:$0xf] %v2492
      %2653 = vst [vmem:[#allocation8 + $0x8c] sm:$0xf] %v2493
      %2654 = vst [vmem:[#allocation8 + $0x90] sm:$0xf] %v2494
      %2655 = vst [vmem:[#allocation8 + $0x94] sm:$0xf] %v2495
      %2656 = vst [vmem:[#allocation8 + $0x98] sm:$0xf] %v2496
      %2657 = vst [vmem:[#allocation8 + $0x9c] sm:$0xf] %v2497
      %2658 = vst [vmem:[#allocation8 + $0xa0] sm:$0xf] %v2498
      %2659 = vst [vmem:[#allocation8 + $0xa4] sm:$0xf] %v2499
      %2660 = vst [vmem:[#allocation8 + $0xa8] sm:$0xf] %v2500
      %2661 = vst [vmem:[#allocation8 + $0xac] sm:$0xf] %v2501
      %2662 = vst [vmem:[#allocation8 + $0xb0] sm:$0xf] %v2502
      %2663 = vst [vmem:[#allocation8 + $0xb4] sm:$0xf] %v2503
      %2664 = vst [vmem:[#allocation8 + $0xb8] sm:$0xf] %v2504
      %2665 = vst [vmem:[#allocation8 + $0xbc] sm:$0xf] %v2505
      %2666 = vst [vmem:[#allocation8 + $0xc0] sm:$0xf] %v2506
      %2667 = vst [vmem:[#allocation8 + $0xc4] sm:$0xf] %v2507
      %2668 = vst [vmem:[#allocation8 + $0xc8] sm:$0xf] %v2508
      %2669 = vst [vmem:[#allocation8 + $0xcc] sm:$0xf] %v2509
      %2670 = vst [vmem:[#allocation8 + $0xd0] sm:$0xf] %v2510
      %2671 = vst [vmem:[#allocation8 + $0xd4] sm:$0xf] %v2511
      %2672 = vst [vmem:[#allocation8 + $0xd8] sm:$0xf] %v2512
      %2673 = vst [vmem:[#allocation8 + $0xdc] sm:$0xf] %v2513
      %2674 = vst [vmem:[#allocation8 + $0xe0] sm:$0xf] %v2514
      %2675 = vst [vmem:[#allocation8 + $0xe4] sm:$0xf] %v2515
      %2676 = vst [vmem:[#allocation8 + $0xe8] sm:$0xf] %v2516
      %2677 = vst [vmem:[#allocation8 + $0xec] sm:$0xf] %v2517
      %2678 = vst [vmem:[#allocation8 + $0xf0] sm:$0xf] %v2518
      %2679 = vst [vmem:[#allocation8 + $0xf4] sm:$0xf] %v2519
      %2680 = vst [vmem:[#allocation8 + $0xf8] sm:$0xf] %v2520
      %2681 = vst [vmem:[#allocation8 + $0xfc] sm:$0xf] %v2521
      %2682 = vst [vmem:[#allocation8 + $0x100] sm:$0xf] %v2522
      %2683 = vst [vmem:[#allocation8 + $0x104] sm:$0xf] %v2523
      %2684 = vst [vmem:[#allocation8 + $0x108] sm:$0xf] %v2524
      %2685 = vst [vmem:[#allocation8 + $0x10c] sm:$0xf] %v2525
      %2686 = vst [vmem:[#allocation8 + $0x110] sm:$0xf] %v2526
      %2687 = vst [vmem:[#allocation8 + $0x114] sm:$0xf] %v2527
      %2688 = vst [vmem:[#allocation8 + $0x118] sm:$0xf] %v2528
      %2689 = vst [vmem:[#allocation8 + $0x11c] sm:$0xf] %v2529
      %2690 = vst [vmem:[#allocation8 + $0x120] sm:$0xf] %v2530
      %2691 = vst [vmem:[#allocation8 + $0x124] sm:$0xf] %v2531
      %2692 = vst [vmem:[#allocation8 + $0x128] sm:$0xf] %v2532
      %2693 = vst [vmem:[#allocation8 + $0x12c] sm:$0xf] %v2533
      %2694 = vst [vmem:[#allocation8 + $0x130] sm:$0xf] %v2534
      %2695 = vst [vmem:[#allocation8 + $0x134] sm:$0xf] %v2535
      %2696 = vst [vmem:[#allocation8 + $0x138] sm:$0xf] %v2536
      %2697 = vst [vmem:[#allocation8 + $0x13c] sm:$0xf] %v2537
      %2698 = vst [vmem:[#allocation8 + $0x140] sm:$0xf] %v2538
      %2699 = vst [vmem:[#allocation8 + $0x144] sm:$0xf] %v2539
      %2700 = vst [vmem:[#allocation8 + $0x148] sm:$0xf] %v2540
      %2701 = vst [vmem:[#allocation8 + $0x14c] sm:$0xf] %v2541
      %2702 = vst [vmem:[#allocation8 + $0x150] sm:$0xf] %v2542
      %2703 = vst [vmem:[#allocation8 + $0x154] sm:$0xf] %v2543
      %2704 = vst [vmem:[#allocation8 + $0x158] sm:$0xf] %v2544
      %2705 = vst [vmem:[#allocation8 + $0x15c] sm:$0xf] %v2545
      %2706 = vst [vmem:[#allocation8 + $0x160] sm:$0xf] %v2546
      %2707 = vst [vmem:[#allocation8 + $0x164] sm:$0xf] %v2547
      %2708 = vst [vmem:[#allocation8 + $0x168] sm:$0xf] %v2548
      %2709 = vst [vmem:[#allocation8 + $0x16c] sm:$0xf] %v2549
      %2710 = vst [vmem:[#allocation8 + $0x170] sm:$0xf] %v2550
      %2711 = vst [vmem:[#allocation8 + $0x174] sm:$0xf] %v2551
      %2712 = vst [vmem:[#allocation8 + $0x178] sm:$0xf] %v2552
      %2713 = vst [vmem:[#allocation8 + $0x17c] sm:$0xf] %v2553
      %2714 = vst [vmem:[#allocation8 + $0x180] sm:$0xf] %v2554
      %2715 = vst [vmem:[#allocation8 + $0x184] sm:$0xf] %v2555
      %2716 = vst [vmem:[#allocation8 + $0x188] sm:$0xf] %v2556
      %2717 = vst [vmem:[#allocation8 + $0x18c] sm:$0xf] %v2557
      %2718 = vst [vmem:[#allocation8 + $0x190] sm:$0xf] %v2558
      %2719 = vst [vmem:[#allocation8 + $0x194] sm:$0xf] %v2559
      %2720 = vst [vmem:[#allocation8 + $0x198] sm:$0xf] %v2560
      %2721 = vst [vmem:[#allocation8 + $0x19c] sm:$0xf] %v2561
      %2722 = vst [vmem:[#allocation8 + $0x1a0] sm:$0xf] %v2562
      %2723 = vst [vmem:[#allocation8 + $0x1a4] sm:$0xf] %v2563
      %2724 = vst [vmem:[#allocation8 + $0x1a8] sm:$0xf] %v2564
      %2725 = vst [vmem:[#allocation8 + $0x1ac] sm:$0xf] %v2565
      %2726 = vst [vmem:[#allocation8 + $0x1b0] sm:$0xf] %v2566
      %2727 = vst [vmem:[#allocation8 + $0x1b4] sm:$0xf] %v2567
      %2728 = vst [vmem:[#allocation8 + $0x1b8] sm:$0xf] %v2568
      %2729 = vst [vmem:[#allocation8 + $0x1bc] sm:$0xf] %v2569
      %2730 = vst [vmem:[#allocation8 + $0x1c0] sm:$0xf] %v2570
      %2731 = vst [vmem:[#allocation8 + $0x1c4] sm:$0xf] %v2571
      %2732 = vst [vmem:[#allocation8 + $0x1c8] sm:$0xf] %v2572
      %2733 = vst [vmem:[#allocation8 + $0x1cc] sm:$0xf] %v2573
      %2734 = vst [vmem:[#allocation8 + $0x1d0] sm:$0xf] %v2574
      %2735 = vst [vmem:[#allocation8 + $0x1d4] sm:$0xf] %v2575
      %2736 = vst [vmem:[#allocation8 + $0x1d8] sm:$0xf] %v2576
      %2737 = vst [vmem:[#allocation8 + $0x1dc] sm:$0xf] %v2577
      %2738 = vst [vmem:[#allocation8 + $0x1e0] sm:$0xf] %v2578
      %2739 = vst [vmem:[#allocation8 + $0x1e4] sm:$0xf] %v2579
      %2740 = vst [vmem:[#allocation8 + $0x1e8] sm:$0xf] %v2580
      %2741 = vst [vmem:[#allocation8 + $0x1ec] sm:$0xf] %v2581
      %2742 = vst [vmem:[#allocation8 + $0x1f0] sm:$0xf] %v2582
      %2743 = vst [vmem:[#allocation8 + $0x1f4] sm:$0xf] %v2583
      %2744 = vst [vmem:[#allocation8 + $0x1f8] sm:$0xf] %v2584
      %2745 = vst [vmem:[#allocation8 + $0x1fc] sm:$0xf] %v2585
      %2746 = vst [vmem:[#allocation8 + $0x200] sm:$0xf] %v2586
      %2747 = vst [vmem:[#allocation8 + $0x204] sm:$0xf] %v2587
      %2748 = vst [vmem:[#allocation8 + $0x208] sm:$0xf] %v2588
      %2749 = vst [vmem:[#allocation8 + $0x20c] sm:$0xf] %v2589
      %2750 = vst [vmem:[#allocation8 + $0x210] sm:$0xf] %v2590
      %2751 = vst [vmem:[#allocation8 + $0x214] sm:$0xf] %v2591
      %2752 = vst [vmem:[#allocation8 + $0x218] sm:$0xf] %v2592
      %2753 = vst [vmem:[#allocation8 + $0x21c] sm:$0xf] %v2593
      %2754 = vst [vmem:[#allocation8 + $0x220] sm:$0xf] %v2594
      %2755 = vst [vmem:[#allocation8 + $0x224] sm:$0xf] %v2595
      %2756 = vst [vmem:[#allocation8 + $0x228] sm:$0xf] %v2596
      %2757 = vst [vmem:[#allocation8 + $0x22c] sm:$0xf] %v2597
      %2758 = vst [vmem:[#allocation8 + $0x230] sm:$0xf] %v2598
      %2759 = vst [vmem:[#allocation8 + $0x234] sm:$0xf] %v2599
      %2760 = vst [vmem:[#allocation8 + $0x238] sm:$0xf] %v2600
      %2761 = vst [vmem:[#allocation8 + $0x23c] sm:$0xf] %v2601
      %2762 = vst [vmem:[#allocation8 + $0x240] sm:$0xf] %v2602
      %2763 = vst [vmem:[#allocation8 + $0x244] sm:$0xf] %v2603
      %2764 = vst [vmem:[#allocation8 + $0x248] sm:$0xf] %v2604
      %2765 = vst [vmem:[#allocation8 + $0x24c] sm:$0xf] %v2605
      %2766 = vst [vmem:[#allocation8 + $0x250] sm:$0xf] %v2606
      %2767 = vst [vmem:[#allocation8 + $0x254] sm:$0xf] %v2607
      %2768 = vst [vmem:[#allocation8 + $0x258] sm:$0xf] %v2608
      %2769 = vst [vmem:[#allocation8 + $0x25c] sm:$0xf] %v2609
      %2770 = vst [vmem:[#allocation8 + $0x260] sm:$0xf] %v2610
      %2771 = vst [vmem:[#allocation8 + $0x264] sm:$0xf] %v2611
      %2772 = vst [vmem:[#allocation8 + $0x268] sm:$0xf] %v2612
      %2773 = vst [vmem:[#allocation8 + $0x26c] sm:$0xf] %v2613
      %2774 = vst [vmem:[#allocation8 + $0x270] sm:$0xf] %v2614
      %2775 = vst [vmem:[#allocation8 + $0x274] sm:$0xf] %v2615
      %2776 = vst [vmem:[#allocation8 + $0x278] sm:$0xf] %v2616
      %2777 = vst [vmem:[#allocation8 + $0x27c] sm:$0xf] %v2617
    $region33: #{tpu_custom_call.1} parent=1 // pred_fallthru
      _
    // Predicated region
    $region34: #{tpu_custom_call.1} parent=1 // pred_check
      _
    $region35: #{tpu_custom_call.1} parent=1 // pred_check_branch
      %2779 = sbr.rel (0) target = $region37
    $region36: #{tpu_custom_call.1} parent=1 // pred_region
      %2781 = vsyncadd [#allocation5], 0
      %s2782 = sshll.u32 [#allocation8], 4
      %s2783 = int_to_ptr.vmem [resolvable:$true] %s2782
      %s2784 = sshll.u32 %s4, 4
      %s2785 = int_to_ptr.hbm [resolvable:$true] %s2784
      %2790 = dma.vmem_to_hbm [thread:$0]  %s2783, 10240, %s2785, [#allocation5], 64, 64, 4
    $region37: #{tpu_custom_call.1} parent=1 // pred_fallthru
      _
    // Predicated region
    $region38: #{tpu_custom_call.1} parent=1 // pred_check
      _
    $region39: #{tpu_custom_call.1} parent=1 // pred_check_branch
      %2792 = sbr.rel (0) target = $region41
    $region40: #{tpu_custom_call.1} parent=1 // pred_region
      %2794 = dma.done [#allocation5], 10240
    $region41: #{tpu_custom_call.1} parent=1 // pred_fallthru
      _
    %2795 = vsyncpa [#allocation4], 1
    %2796 = vsyncpa [#allocation7], 1
    %2797 = vsyncpa [#allocation5], 1

</llo_original>
